<compile_context>
chip_gen: v5e
topology: v5e:2x2
jax: 0.10.0
libtpu: 0.0.40
codegen_flags: <defaults>
</compile_context>

<pallas_src>
import functools

import jax
import jax.numpy as jnp
from jax.experimental import pallas as pl
from jax.experimental.pallas import tpu as pltpu


# ---------------------------------------------------------------------------
# Activations (same set as the PyTorch ACTIVATION dict).
# ---------------------------------------------------------------------------
ACTIVATIONS = {
    "Sigmoid": jax.nn.sigmoid,
    "Tanh": jnp.tanh,
    "ReLU": lambda x: jnp.maximum(x, 0.0),
    "LeakyReLU": lambda x: jnp.where(x >= 0, x, 0.1 * x),
    "ELU": lambda x: jnp.where(x > 0, x, jnp.expm1(x)),
    "GELU": lambda x: jax.nn.gelu(x, approximate=False),
}

_TM_CAP = 512  # row-tile cap for M-tiled kernels (fits comfortably in v7x 64 MiB VMEM)


def _row_tile(m):
    return m if m <= _TM_CAP else _TM_CAP


# ---------------------------------------------------------------------------
# In-kernel helpers (operate on loaded VMEM values / refs)
# ---------------------------------------------------------------------------
def _layernorm(x, g, b, eps=1e-5):
    mu = jnp.mean(x, axis=-1, keepdims=True)
    var = jnp.mean(jnp.square(x - mu), axis=-1, keepdims=True)
    return (x - mu) * jax.lax.rsqrt(var + eps) * g + b


def _mlp_chain(x, wi_ref, bi_ref, wh_ref, bh_ref, wo_ref, bo_ref, act_fn, n_layer):
    # MLP: act(inp) -> n_layer residual hidden layers -> out (no act on out)
    h = act_fn(jnp.dot(x, wi_ref[...], preferred_element_type=jnp.float32) + bi_ref[...])
    for l in range(n_layer):
        h = h + act_fn(
            jnp.dot(h, wh_ref[l], preferred_element_type=jnp.float32) + bh_ref[l]
        )
    return jnp.dot(h, wo_ref[...], preferred_element_type=jnp.float32) + bo_ref[...]


# ---------------------------------------------------------------------------
# Pallas kernels
# ---------------------------------------------------------------------------
def _trunk_mode_kernel(x_ref, wi, bi, wh, bh, wo, bo, wm, bm, o_ref, *, act_fn, n_layer):
    # trunk MLP followed by the mode linear head -> score logits (softmax is fused downstream)
    t = _mlp_chain(x_ref[...], wi, bi, wh, bh, wo, bo, act_fn, n_layer)
    o_ref[...] = jnp.dot(t, wm[...], preferred_element_type=jnp.float32) + bm[...]


def _branch_v_kernel(y_ref, wi, bi, wh, bh, wo, bo, g, b, wv, bv, o_ref, *, act_fn, n_layer):
    # branch MLP -> LayerNorm -> Wv, all fused
    yb = _mlp_chain(y_ref[...], wi, bi, wh, bh, wo, bo, act_fn, n_layer)
    n = _layernorm(yb, g[...], b[...])
    o_ref[...] = jnp.dot(n, wv[...], preferred_element_type=jnp.float32) + bv[...]


def _encode_kernel(s_ref, v_ref, we, be, o_ref):
    # softmax over the sequence axis (dim=1 of (B,N,n_mode)) + 'bij,bic->bjc' + enc linear
    s = jax.nn.softmax(s_ref[0], axis=0)                         # (N, n_mode)
    z = jax.lax.dot_general(                                     # contract over N, no transpose
        s, v_ref[0], (((0,), (0,)), ((), ())), preferred_element_type=jnp.float32
    )                                                            # (n_mode, D)
    o_ref[0] = jnp.dot(z, we[...], preferred_element_type=jnp.float32) + be[...]


def _attn_block_kernel(
    z_ref, ln1_g, ln1_b, wqkv, bqkv, wproj, bproj, ln2_g, ln2_b, wm1, bm1, wm2, bm2, o_ref,
    *, act_fn, n_head,
):
    # Whole AttentionBlock for one batch element, fully on the VMEM tile.
    z = z_ref[0]                                                 # (n_mode, D)
    D = z.shape[-1]
    Dh = D // n_head

    h = _layernorm(z, ln1_g[...], ln1_b[...])
    qkv = jnp.dot(h, wqkv[...], preferred_element_type=jnp.float32) + bqkv[...]  # (n_mode, 3D)
    q, k, v = qkv[:, :D], qkv[:, D : 2 * D], qkv[:, 2 * D :]

    # Attention_Linear_GNOT per head (static head loop; D is small so 2-D ops are robust)
    heads = []
    for hh in range(n_head):
        sl = slice(hh * Dh, (hh + 1) * Dh)
        qh = jax.nn.softmax(q[:, sl], axis=-1)                   # (n_mode, Dh)
        kh = jax.nn.softmax(k[:, sl], axis=-1)
        vh = v[:, sl]
        k_sum = jnp.sum(kh, axis=0, keepdims=True)               # (1, Dh)
        inv = 1.0 / jnp.sum(qh * k_sum, axis=-1, keepdims=True)  # (n_mode, 1)
        kv = jax.lax.dot_general(                                # k^T v without explicit .T
            kh, vh, (((0,), (0,)), ((), ())), preferred_element_type=jnp.float32
        )                                                        # (Dh, Dh)
        heads.append(qh + jnp.dot(qh, kv, preferred_element_type=jnp.float32) * inv)
    r = jnp.concatenate(heads, axis=-1)                          # (n_mode, D)

    z = z + jnp.dot(r, wproj[...], preferred_element_type=jnp.float32) + bproj[...]
    h2 = _layernorm(z, ln2_g[...], ln2_b[...])
    m = act_fn(jnp.dot(h2, wm1[...], preferred_element_type=jnp.float32) + bm1[...])
    m = jnp.dot(m, wm2[...], preferred_element_type=jnp.float32) + bm2[...]
    o_ref[0] = z + m


def _decode_out_kernel(s_ref, z_ref, wd, bd, wi, bi, wh, bh, wo, bo, o_ref, *, act_fn, n_layer):
    # dec linear + softmax(dim=-1) + 'bij,bjc->bic' + out MLP, fused per (batch, Mq-tile)
    zd = jnp.dot(z_ref[0], wd[...], preferred_element_type=jnp.float32) + bd[...]  # (n_mode, D)
    s = jax.nn.softmax(s_ref[0], axis=-1)                                          # (TMq, n_mode)
    r = jnp.dot(s, zd, preferred_element_type=jnp.float32)                         # (TMq, D)
    o_ref[0] = _mlp_chain(r, wi, bi, wh, bh, wo, bo, act_fn, n_layer)


# ---------------------------------------------------------------------------
# pallas_call wrappers
# ---------------------------------------------------------------------------
def _stack_hidden(mlp_p):
    wh = jnp.stack([hp["w"] for hp in mlp_p["hidden"]])                       # (L, D, D)
    bh = jnp.stack([hp["b"].reshape(1, -1) for hp in mlp_p["hidden"]])        # (L, 1, D)
    return wh, bh


def trunk_mode_pallas(x2d, mlp_p, mode_w, mode_b, *, act_fn, n_layer):
    M, Din = x2d.shape
    D = mlp_p["inp"]["w"].shape[1]
    Nout = mode_w.shape[1]
    wh, bh = _stack_hidden(mlp_p)
    tm = _row_tile(M)
    kernel = functools.partial(_trunk_mode_kernel, act_fn=act_fn, n_layer=n_layer)
    w2 = lambda s: pl.BlockSpec(s, lambda i: (0, 0))
    w3 = lambda s: pl.BlockSpec(s, lambda i: (0, 0, 0))
    return pl.pallas_call(
        kernel,
        grid=(pl.cdiv(M, tm),),
        out_shape=jax.ShapeDtypeStruct((M, Nout), jnp.float32),
        in_specs=[
            pl.BlockSpec((tm, Din), lambda i: (i, 0)),
            w2((Din, D)), w2((1, D)),
            w3((n_layer, D, D)), w3((n_layer, 1, D)),
            w2((D, D)), w2((1, D)),
            w2((D, Nout)), w2((1, Nout)),
        ],
        out_specs=pl.BlockSpec((tm, Nout), lambda i: (i, 0)),
        compiler_params=pltpu.CompilerParams(dimension_semantics=("parallel",)),
    )(
        x2d,
        mlp_p["inp"]["w"], mlp_p["inp"]["b"].reshape(1, D),
        wh, bh,
        mlp_p["out"]["w"], mlp_p["out"]["b"].reshape(1, D),
        mode_w, mode_b.reshape(1, Nout),
    )


def branch_v_pallas(y2d, mlp_p, ln_p, wv_p, *, act_fn, n_layer):
    M, Din = y2d.shape
    D = mlp_p["inp"]["w"].shape[1]
    wh, bh = _stack_hidden(mlp_p)
    tm = _row_tile(M)
    kernel = functools.partial(_branch_v_kernel, act_fn=act_fn, n_layer=n_layer)
    w2 = lambda s: pl.BlockSpec(s, lambda i: (0, 0))
    w3 = lambda s: pl.BlockSpec(s, lambda i: (0, 0, 0))
    return pl.pallas_call(
        kernel,
        grid=(pl.cdiv(M, tm),),
        out_shape=jax.ShapeDtypeStruct((M, D), jnp.float32),
        in_specs=[
            pl.BlockSpec((tm, Din), lambda i: (i, 0)),
            w2((Din, D)), w2((1, D)),
            w3((n_layer, D, D)), w3((n_layer, 1, D)),
            w2((D, D)), w2((1, D)),
            w2((1, D)), w2((1, D)),      # LN g, b
            w2((D, D)), w2((1, D)),      # Wv
        ],
        out_specs=pl.BlockSpec((tm, D), lambda i: (i, 0)),
        compiler_params=pltpu.CompilerParams(dimension_semantics=("parallel",)),
    )(
        y2d,
        mlp_p["inp"]["w"], mlp_p["inp"]["b"].reshape(1, D),
        wh, bh,
        mlp_p["out"]["w"], mlp_p["out"]["b"].reshape(1, D),
        ln_p["g"].reshape(1, D), ln_p["b"].reshape(1, D),
        wv_p["w"], wv_p["b"].reshape(1, D),
    )


def encode_pallas(score_logits, v, enc_w, enc_b):
    B, N, Mo = score_logits.shape
    D = v.shape[-1]
    return pl.pallas_call(
        _encode_kernel,
        grid=(B,),
        out_shape=jax.ShapeDtypeStruct((B, Mo, D), jnp.float32),
        in_specs=[
            pl.BlockSpec((1, N, Mo), lambda b: (b, 0, 0)),
            pl.BlockSpec((1, N, D), lambda b: (b, 0, 0)),
            pl.BlockSpec((D, D), lambda b: (0, 0)),
            pl.BlockSpec((1, D), lambda b: (0, 0)),
        ],
        out_specs=pl.BlockSpec((1, Mo, D), lambda b: (b, 0, 0)),
        compiler_params=pltpu.CompilerParams(dimension_semantics=("parallel",)),
    )(score_logits, v, enc_w, enc_b.reshape(1, D))


def attn_block_pallas(z, bp, *, n_head, act_fn):
    B, Mo, D = z.shape
    wqkv = jnp.concatenate([bp["Wq"]["w"], bp["Wk"]["w"], bp["Wv"]["w"]], axis=1)   # (D, 3D)
    bqkv = jnp.concatenate([bp["Wq"]["b"], bp["Wk"]["b"], bp["Wv"]["b"]]).reshape(1, 3 * D)
    kernel = functools.partial(_attn_block_kernel, act_fn=act_fn, n_head=n_head)
    zspec = pl.BlockSpec((1, Mo, D), lambda b: (b, 0, 0))
    w2 = lambda s: pl.BlockSpec(s, lambda b: (0, 0))
    return pl.pallas_call(
        kernel,
        grid=(B,),
        out_shape=jax.ShapeDtypeStruct((B, Mo, D), jnp.float32),
        in_specs=[
            zspec,
            w2((1, D)), w2((1, D)),              # ln1
            w2((D, 3 * D)), w2((1, 3 * D)),      # fused QKV
            w2((D, D)), w2((1, D)),              # proj
            w2((1, D)), w2((1, D)),              # ln2
            w2((D, 2 * D)), w2((1, 2 * D)),      # mlp1
            w2((2 * D, D)), w2((1, D)),          # mlp2
        ],
        out_specs=zspec,
        compiler_params=pltpu.CompilerParams(dimension_semantics=("parallel",)),
    )(
        z,
        bp["ln1"]["g"].reshape(1, D), bp["ln1"]["b"].reshape(1, D),
        wqkv, bqkv,
        bp["proj"]["w"], bp["proj"]["b"].reshape(1, D),
        bp["ln2"]["g"].reshape(1, D), bp["ln2"]["b"].reshape(1, D),
        bp["mlp1"]["w"], bp["mlp1"]["b"].reshape(1, 2 * D),
        bp["mlp2"]["w"], bp["mlp2"]["b"].reshape(1, D),
    )


def decode_out_pallas(sd_logits, z, dec_p, out_p, *, act_fn, n_layer):
    B, Mq, Mo = sd_logits.shape
    D = z.shape[-1]
    y2 = out_p["out"]["w"].shape[1]
    wh, bh = _stack_hidden(out_p)
    tm = _row_tile(Mq)
    kernel = functools.partial(_decode_out_kernel, act_fn=act_fn, n_layer=n_layer)
    w2 = lambda s: pl.BlockSpec(s, lambda b, m: (0, 0))
    w3 = lambda s: pl.BlockSpec(s, lambda b, m: (0, 0, 0))
    return pl.pallas_call(
        kernel,
        grid=(B, pl.cdiv(Mq, tm)),
        out_shape=jax.ShapeDtypeStruct((B, Mq, y2), jnp.float32),
        in_specs=[
            pl.BlockSpec((1, tm, Mo), lambda b, m: (b, m, 0)),
            pl.BlockSpec((1, Mo, D), lambda b, m: (b, 0, 0)),
            w2((D, D)), w2((1, D)),              # dec linear
            w2((D, D)), w2((1, D)),              # out MLP inp
            w3((n_layer, D, D)), w3((n_layer, 1, D)),
            w2((D, y2)), w2((1, y2)),            # out MLP out
        ],
        out_specs=pl.BlockSpec((1, tm, y2), lambda b, m: (b, m, 0)),
        compiler_params=pltpu.CompilerParams(dimension_semantics=("parallel", "parallel")),
    )(
        sd_logits, z,
        dec_p["w"], dec_p["b"].reshape(1, D),
        out_p["inp"]["w"], out_p["inp"]["b"].reshape(1, D),
        wh, bh,
        out_p["out"]["w"], out_p["out"]["b"].reshape(1, y2),
    )


# ---------------------------------------------------------------------------
# Parameter construction (deterministic, synthetic)
# ---------------------------------------------------------------------------
def init_linear(key, din, dout, std=0.02):
    kw, kb = jax.random.split(key)
    return {
        "w": jax.random.normal(kw, (din, dout), jnp.float32) * std,   # stored (Din, Dout)
        "b": jax.random.normal(kb, (dout,), jnp.float32) * std,
    }


def init_mlp(key, din, dh, dout, n_layer):
    keys = jax.random.split(key, n_layer + 2)
    return {
        "inp": init_linear(keys[0], din, dh),
        "hidden": [init_linear(keys[1 + i], dh, dh) for i in range(n_layer)],
        "out": init_linear(keys[n_layer + 1], dh, dout),
    }


def init_ln(d):
    return {"g": jnp.ones((d,), jnp.float32), "b": jnp.zeros((d,), jnp.float32)}


def init_attn_block(key, d):
    keys = jax.random.split(key, 6)
    return {
        "Wq": init_linear(keys[0], d, d),
        "Wk": init_linear(keys[1], d, d),
        "Wv": init_linear(keys[2], d, d),
        "proj": init_linear(keys[3], d, d),
        "mlp1": init_linear(keys[4], d, 2 * d),
        "mlp2": init_linear(keys[5], 2 * d, d),
        "ln1": init_ln(d),
        "ln2": init_ln(d),
    }


def init_lno(key, cfg):
    keys = jax.random.split(key, 8 + cfg["n_block"])
    d = cfg["n_dim"]
    return {
        "trunk": init_mlp(keys[0], cfg["x_dim"], d, d, cfg["n_layer"]),
        "branch": init_mlp(keys[1], cfg["x_dim"] + cfg["y1_dim"], d, d, cfg["n_layer"]),
        "out": init_mlp(keys[2], d, d, cfg["y2_dim"], cfg["n_layer"]),
        "mode": init_linear(keys[3], d, cfg["n_mode"]),
        "enc": init_linear(keys[4], d, d),
        "dec": init_linear(keys[5], d, d),
        "Wv": init_linear(keys[6], d, d),
        "ln": init_ln(d),
        "blocks": [init_attn_block(keys[8 + i], d) for i in range(cfg["n_block"])],
    }


# ---------------------------------------------------------------------------
# Forward pass (7 fused pallas_calls total for n_block=2)
# ---------------------------------------------------------------------------
def lno_forward(query, y, params, cfg):
    # TODO(synk): only the 'HNA' (Attention_Linear_GNOT) attention variant is implemented.
    act_fn = ACTIVATIONS[cfg["act"]]
    D, H, L, Mo = cfg["n_dim"], cfg["n_head"], cfg["n_layer"], cfg["n_mode"]
    B, Mq, _ = query.shape
    _, N, _ = y.shape

    # trunk MLP + mode head (trunk output is only consumed by the mode head -> fully fused)
    se_logits = trunk_mode_pallas(
        y[..., : cfg["x_dim"]].reshape(B * N, -1),
        params["trunk"], params["mode"]["w"], params["mode"]["b"],
        act_fn=act_fn, n_layer=L,
    ).reshape(B, N, Mo)
    sd_logits = trunk_mode_pallas(
        query.reshape(B * Mq, -1),
        params["trunk"], params["mode"]["w"], params["mode"]["b"],
        act_fn=act_fn, n_layer=L,
    ).reshape(B, Mq, Mo)

    # branch MLP + LayerNorm + Wv
    v = branch_v_pallas(
        y.reshape(B * N, -1), params["branch"], params["ln"], params["Wv"],
        act_fn=act_fn, n_layer=L,
    ).reshape(B, N, D)

    # encode: softmax over sequence + einsum 'bij,bic->bjc' + enc linear
    z = encode_pallas(se_logits, v, params["enc"]["w"], params["enc"]["b"])   # (B, n_mode, D)

    # attention blocks: one fused kernel per block (LN1+QKV+GNOT+proj+res+LN2+MLP+res)
    for bp in params["blocks"]:
        z = attn_block_pallas(z, bp, n_head=H, act_fn=act_fn)

    # dec linear + softmax(dim=-1) + einsum 'bij,bjc->bic' + out MLP
    return decode_out_pallas(sd_logits, z, params["dec"], params["out"],
                             act_fn=act_fn, n_layer=L)                        # (B, Mq, y2_dim)


# ---------------------------------------------------------------------------
# Pure-JAX reference (mirrors the PyTorch forward) for correctness checking
# ---------------------------------------------------------------------------
def ref_forward(query, y, params, cfg):
    act = ACTIVATIONS[cfg["act"]]
    D, H = cfg["n_dim"], cfg["n_head"]

    def lin(x, p):
        return x @ p["w"] + p["b"]

    def mlp(x, p):
        r = act(lin(x, p["inp"]))
        for hp in p["hidden"]:
            r = r + act(lin(r, hp))
        return lin(r, p["out"])

    def ln(x, p):
        mu = x.mean(-1, keepdims=True)
        var = ((x - mu) ** 2).mean(-1, keepdims=True)
        return (x - mu) / jnp.sqrt(var + 1e-5) * p["g"] + p["b"]

    def gnot(q, k, v):
        q = jax.nn.softmax(q, -1)
        k = jax.nn.softmax(k, -1)
        k_sum = k.sum(-2, keepdims=True)
        inv = 1.0 / (q * k_sum).sum(-1, keepdims=True)
        return q + (q @ (jnp.swapaxes(k, -2, -1) @ v)) * inv

    x = mlp(y[..., : cfg["x_dim"]], params["trunk"])
    qf = mlp(query, params["trunk"])
    se = jax.nn.softmax(lin(x, params["mode"]), axis=1)
    sd = jax.nn.softmax(lin(qf, params["mode"]), axis=-1)
    yb = mlp(y, params["branch"])
    v = lin(ln(yb, params["ln"]), params["Wv"])
    z = jnp.einsum("bij,bic->bjc", se, v)
    z = lin(z, params["enc"])
    for bp in params["blocks"]:
        h = ln(z, bp["ln1"])
        B, N, _ = h.shape
        qh = lin(h, bp["Wq"]).reshape(B, N, H, D // H).transpose(0, 2, 1, 3)
        kh = lin(h, bp["Wk"]).reshape(B, N, H, D // H).transpose(0, 2, 1, 3)
        vh = lin(h, bp["Wv"]).reshape(B, N, H, D // H).transpose(0, 2, 1, 3)
        r = gnot(qh, kh, vh).transpose(0, 2, 1, 3).reshape(B, N, D)
        z = z + lin(r, bp["proj"])
        h2 = ln(z, bp["ln2"])
        z = z + lin(act(lin(h2, bp["mlp1"])), bp["mlp2"])
    z = lin(z, params["dec"])
    r = jnp.einsum("bij,bjc->bic", sd, z)
    return mlp(r, params["out"])


# ---------------------------------------------------------------------------
if __name__ == "__main__":
    cfg = dict(
        n_block=2, n_mode=8, n_dim=32, n_head=4, n_layer=2,
        x_dim=2, y1_dim=3, y2_dim=1,
        attn="HNA",   # Attention_Linear_GNOT
        act="Tanh",
    )
    B, Mq, N = 2, 16, 12

    key = jax.random.PRNGKey(0)
    kp, kq, ky = jax.random.split(key, 3)
    params = init_lno(kp, cfg)
    query = jax.random.normal(kq, (B, Mq, cfg["x_dim"]), jnp.float32)
    y = jax.random.normal(ky, (B, N, cfg["x_dim"] + cfg["y1_dim"]), jnp.float32)

    fwd = jax.jit(lambda q_, y_, p_: lno_forward(q_, y_, p_, cfg))
    out = fwd(query, y, params)
    out = jax.block_until_ready(out)

    ref = jax.block_until_ready(ref_forward(query, y, params, cfg))
    assert out.shape == (B, Mq, cfg["y2_dim"]), out.shape
    assert jnp.allclose(out, ref, rtol=1e-3, atol=1e-4), float(jnp.abs(out - ref).max())

    print("KERNEL_OK")
</pallas_src>

<mosaic_0001>
module attributes {stable_mosaic.version = 11 : i64} {
  func.func @_trunk_mode_kernel(%arg0: i32, %arg1: memref<32x2xf32, #tpu.memory_space<vmem>>, %arg2: memref<2x32xf32, #tpu.memory_space<vmem>>, %arg3: memref<1x32xf32, #tpu.memory_space<vmem>>, %arg4: memref<2x32x32xf32, #tpu.memory_space<vmem>>, %arg5: memref<2x1x32xf32, #tpu.memory_space<vmem>>, %arg6: memref<32x32xf32, #tpu.memory_space<vmem>>, %arg7: memref<1x32xf32, #tpu.memory_space<vmem>>, %arg8: memref<32x8xf32, #tpu.memory_space<vmem>>, %arg9: memref<1x8xf32, #tpu.memory_space<vmem>>, %arg10: memref<32x8xf32, #tpu.memory_space<vmem>>) attributes {dimension_semantics = [#tpu.dimension_semantics<parallel>], iteration_bounds = array<i64: 1>, scalar_prefetch = 0 : i64, scratch_operands = 0 : i64, tpu.core_type = #tpu.core_type<tc>, window_params = [{transform_indices = @transform_0, window_bounds = array<i64: 32, 2>}, {pipeline_mode = #tpu.pipeline_mode<synchronous>, transform_indices = @transform_1, window_bounds = array<i64: 2, 32>}, {pipeline_mode = #tpu.pipeline_mode<synchronous>, transform_indices = @transform_2, window_bounds = array<i64: 1, 32>}, {pipeline_mode = #tpu.pipeline_mode<synchronous>, transform_indices = @transform_3, window_bounds = array<i64: 2, 32, 32>}, {pipeline_mode = #tpu.pipeline_mode<synchronous>, transform_indices = @transform_4, window_bounds = array<i64: 2, 1, 32>}, {pipeline_mode = #tpu.pipeline_mode<synchronous>, transform_indices = @transform_5, window_bounds = array<i64: 32, 32>}, {pipeline_mode = #tpu.pipeline_mode<synchronous>, transform_indices = @transform_6, window_bounds = array<i64: 1, 32>}, {pipeline_mode = #tpu.pipeline_mode<synchronous>, transform_indices = @transform_7, window_bounds = array<i64: 32, 8>}, {pipeline_mode = #tpu.pipeline_mode<synchronous>, transform_indices = @transform_8, window_bounds = array<i64: 1, 8>}, {transform_indices = @transform_9, window_bounds = array<i64: 32, 8>}]} {
    %c0 = arith.constant 0 : index
    %c0_0 = arith.constant 0 : index
    %0 = vector.load %arg1[%c0, %c0_0] : memref<32x2xf32, #tpu.memory_space<vmem>>, vector<32x2xf32>
    %c0_1 = arith.constant 0 : index
    %c0_2 = arith.constant 0 : index
    %1 = vector.load %arg2[%c0_1, %c0_2] : memref<2x32xf32, #tpu.memory_space<vmem>>, vector<2x32xf32>
    %cst = arith.constant dense<0.000000e+00> : vector<32x32xf32>
    %2 = tpu.matmul %0, %1, %cst {dimension_numbers = #tpu.dot_dimension_numbers<[1], [0], [0], [1], [0, 0, 1, 1], [], []>} : vector<32x2xf32>, vector<2x32xf32>, vector<32x32xf32> -> vector<32x32xf32>
    %c0_3 = arith.constant 0 : index
    %c0_4 = arith.constant 0 : index
    %3 = vector.load %arg3[%c0_3, %c0_4] : memref<1x32xf32, #tpu.memory_space<vmem>>, vector<1x32xf32>
    %4 = vector.broadcast %3 : vector<1x32xf32> to vector<32x32xf32>
    %5 = arith.addf %2, %4 : vector<32x32xf32>
    %6 = math.tanh %5 : vector<32x32xf32>
    %c0_5 = arith.constant 0 : index
    %c0_6 = arith.constant 0 : index
    %c0_7 = arith.constant 0 : index
    %7 = vector.load %arg4[%c0_5, %c0_6, %c0_7] : memref<2x32x32xf32, #tpu.memory_space<vmem>>, vector<1x32x32xf32>
    %8 = vector.shape_cast %7 : vector<1x32x32xf32> to vector<32x32xf32>
    %cst_8 = arith.constant dense<0.000000e+00> : vector<32x32xf32>
    %9 = tpu.matmul %6, %8, %cst_8 {dimension_numbers = #tpu.dot_dimension_numbers<[1], [0], [0], [1], [0, 0, 1, 1], [], []>} : vector<32x32xf32>, vector<32x32xf32>, vector<32x32xf32> -> vector<32x32xf32>
    %c0_9 = arith.constant 0 : index
    %c0_10 = arith.constant 0 : index
    %c0_11 = arith.constant 0 : index
    %10 = vector.load %arg5[%c0_9, %c0_10, %c0_11] : memref<2x1x32xf32, #tpu.memory_space<vmem>>, vector<1x1x32xf32>
    %11 = vector.shape_cast %10 : vector<1x1x32xf32> to vector<1x32xf32>
    %12 = vector.broadcast %11 : vector<1x32xf32> to vector<32x32xf32>
    %13 = arith.addf %9, %12 : vector<32x32xf32>
    %14 = math.tanh %13 : vector<32x32xf32>
    %15 = arith.addf %6, %14 : vector<32x32xf32>
    %c1 = arith.constant 1 : index
    %c0_12 = arith.constant 0 : index
    %c0_13 = arith.constant 0 : index
    %16 = vector.load %arg4[%c1, %c0_12, %c0_13] : memref<2x32x32xf32, #tpu.memory_space<vmem>>, vector<1x32x32xf32>
    %17 = vector.shape_cast %16 : vector<1x32x32xf32> to vector<32x32xf32>
    %cst_14 = arith.constant dense<0.000000e+00> : vector<32x32xf32>
    %18 = tpu.matmul %15, %17, %cst_14 {dimension_numbers = #tpu.dot_dimension_numbers<[1], [0], [0], [1], [0, 0, 1, 1], [], []>} : vector<32x32xf32>, vector<32x32xf32>, vector<32x32xf32> -> vector<32x32xf32>
    %c1_15 = arith.constant 1 : index
    %c0_16 = arith.constant 0 : index
    %c0_17 = arith.constant 0 : index
    %19 = vector.load %arg5[%c1_15, %c0_16, %c0_17] : memref<2x1x32xf32, #tpu.memory_space<vmem>>, vector<1x1x32xf32>
    %20 = vector.shape_cast %19 : vector<1x1x32xf32> to vector<1x32xf32>
    %21 = vector.broadcast %20 : vector<1x32xf32> to vector<32x32xf32>
    %22 = arith.addf %18, %21 : vector<32x32xf32>
    %23 = math.tanh %22 : vector<32x32xf32>
    %24 = arith.addf %15, %23 : vector<32x32xf32>
    %c0_18 = arith.constant 0 : index
    %c0_19 = arith.constant 0 : index
    %25 = vector.load %arg6[%c0_18, %c0_19] : memref<32x32xf32, #tpu.memory_space<vmem>>, vector<32x32xf32>
    %cst_20 = arith.constant dense<0.000000e+00> : vector<32x32xf32>
    %26 = tpu.matmul %24, %25, %cst_20 {dimension_numbers = #tpu.dot_dimension_numbers<[1], [0], [0], [1], [0, 0, 1, 1], [], []>} : vector<32x32xf32>, vector<32x32xf32>, vector<32x32xf32> -> vector<32x32xf32>
    %c0_21 = arith.constant 0 : index
    %c0_22 = arith.constant 0 : index
    %27 = vector.load %arg7[%c0_21, %c0_22] : memref<1x32xf32, #tpu.memory_space<vmem>>, vector<1x32xf32>
    %28 = vector.broadcast %27 : vector<1x32xf32> to vector<32x32xf32>
    %29 = arith.addf %26, %28 : vector<32x32xf32>
    %c0_23 = arith.constant 0 : index
    %c0_24 = arith.constant 0 : index
    %30 = vector.load %arg8[%c0_23, %c0_24] : memref<32x8xf32, #tpu.memory_space<vmem>>, vector<32x8xf32>
    %cst_25 = arith.constant dense<0.000000e+00> : vector<32x8xf32>
    %31 = tpu.matmul %29, %30, %cst_25 {dimension_numbers = #tpu.dot_dimension_numbers<[1], [0], [0], [1], [0, 0, 1, 1], [], []>} : vector<32x32xf32>, vector<32x8xf32>, vector<32x8xf32> -> vector<32x8xf32>
    %c0_26 = arith.constant 0 : index
    %c0_27 = arith.constant 0 : index
    %32 = vector.load %arg9[%c0_26, %c0_27] : memref<1x8xf32, #tpu.memory_space<vmem>>, vector<1x8xf32>
    %33 = vector.broadcast %32 : vector<1x8xf32> to vector<32x8xf32>
    %34 = arith.addf %31, %33 : vector<32x8xf32>
    %c0_28 = arith.constant 0 : index
    %c0_29 = arith.constant 0 : index
    %35 = vector.load %arg10[%c0_28, %c0_29] : memref<32x8xf32, #tpu.memory_space<vmem>>, vector<32x8xf32>
    tpu.vector_store %arg10[%c0_28, %c0_29], %34 {strides = array<i32>} : memref<32x8xf32, #tpu.memory_space<vmem>>, vector<32x8xf32>,
    return
  }
  func.func @transform_0(%arg0: i32) -> (i32, i32) {
    %c0_i32 = arith.constant 0 : i32
    %c0_i32_0 = arith.constant 0 : i32
    return %arg0, %c0_i32 : i32, i32
  }
  func.func @transform_1(%arg0: i32) -> (i32, i32) {
    %c0_i32 = arith.constant 0 : i32
    %c0_i32_0 = arith.constant 0 : i32
    %c0_i32_1 = arith.constant 0 : i32
    return %c0_i32, %c0_i32_0 : i32, i32
  }
  func.func @transform_2(%arg0: i32) -> (i32, i32) {
    %c0_i32 = arith.constant 0 : i32
    %c0_i32_0 = arith.constant 0 : i32
    %c0_i32_1 = arith.constant 0 : i32
    return %c0_i32, %c0_i32_0 : i32, i32
  }
  func.func @transform_3(%arg0: i32) -> (i32, i32, i32) {
    %c0_i32 = arith.constant 0 : i32
    %c0_i32_0 = arith.constant 0 : i32
    %c0_i32_1 = arith.constant 0 : i32
    %c0_i32_2 = arith.constant 0 : i32
    return %c0_i32, %c0_i32_0, %c0_i32_1 : i32, i32, i32
  }
  func.func @transform_4(%arg0: i32) -> (i32, i32, i32) {
    %c0_i32 = arith.constant 0 : i32
    %c0_i32_0 = arith.constant 0 : i32
    %c0_i32_1 = arith.constant 0 : i32
    %c0_i32_2 = arith.constant 0 : i32
    return %c0_i32, %c0_i32_0, %c0_i32_1 : i32, i32, i32
  }
  func.func @transform_5(%arg0: i32) -> (i32, i32) {
    %c0_i32 = arith.constant 0 : i32
    %c0_i32_0 = arith.constant 0 : i32
    %c0_i32_1 = arith.constant 0 : i32
    return %c0_i32, %c0_i32_0 : i32, i32
  }
  func.func @transform_6(%arg0: i32) -> (i32, i32) {
    %c0_i32 = arith.constant 0 : i32
    %c0_i32_0 = arith.constant 0 : i32
    %c0_i32_1 = arith.constant 0 : i32
    return %c0_i32, %c0_i32_0 : i32, i32
  }
  func.func @transform_7(%arg0: i32) -> (i32, i32) {
    %c0_i32 = arith.constant 0 : i32
    %c0_i32_0 = arith.constant 0 : i32
    %c0_i32_1 = arith.constant 0 : i32
    return %c0_i32, %c0_i32_0 : i32, i32
  }
  func.func @transform_8(%arg0: i32) -> (i32, i32) {
    %c0_i32 = arith.constant 0 : i32
    %c0_i32_0 = arith.constant 0 : i32
    %c0_i32_1 = arith.constant 0 : i32
    return %c0_i32, %c0_i32_0 : i32, i32
  }
  func.func @transform_9(%arg0: i32) -> (i32, i32) {
    %c0_i32 = arith.constant 0 : i32
    %c0_i32_0 = arith.constant 0 : i32
    return %arg0, %c0_i32 : i32, i32
  }
}

module attributes {stable_mosaic.version = 11 : i64} {
  func.func @_trunk_mode_kernel(%arg0: i32, %arg1: memref<24x2xf32, #tpu.memory_space<vmem>>, %arg2: memref<2x32xf32, #tpu.memory_space<vmem>>, %arg3: memref<1x32xf32, #tpu.memory_space<vmem>>, %arg4: memref<2x32x32xf32, #tpu.memory_space<vmem>>, %arg5: memref<2x1x32xf32, #tpu.memory_space<vmem>>, %arg6: memref<32x32xf32, #tpu.memory_space<vmem>>, %arg7: memref<1x32xf32, #tpu.memory_space<vmem>>, %arg8: memref<32x8xf32, #tpu.memory_space<vmem>>, %arg9: memref<1x8xf32, #tpu.memory_space<vmem>>, %arg10: memref<24x8xf32, #tpu.memory_space<vmem>>) attributes {dimension_semantics = [#tpu.dimension_semantics<parallel>], iteration_bounds = array<i64: 1>, scalar_prefetch = 0 : i64, scratch_operands = 0 : i64, tpu.core_type = #tpu.core_type<tc>, window_params = [{transform_indices = @transform_0, window_bounds = array<i64: 24, 2>}, {pipeline_mode = #tpu.pipeline_mode<synchronous>, transform_indices = @transform_1, window_bounds = array<i64: 2, 32>}, {pipeline_mode = #tpu.pipeline_mode<synchronous>, transform_indices = @transform_2, window_bounds = array<i64: 1, 32>}, {pipeline_mode = #tpu.pipeline_mode<synchronous>, transform_indices = @transform_3, window_bounds = array<i64: 2, 32, 32>}, {pipeline_mode = #tpu.pipeline_mode<synchronous>, transform_indices = @transform_4, window_bounds = array<i64: 2, 1, 32>}, {pipeline_mode = #tpu.pipeline_mode<synchronous>, transform_indices = @transform_5, window_bounds = array<i64: 32, 32>}, {pipeline_mode = #tpu.pipeline_mode<synchronous>, transform_indices = @transform_6, window_bounds = array<i64: 1, 32>}, {pipeline_mode = #tpu.pipeline_mode<synchronous>, transform_indices = @transform_7, window_bounds = array<i64: 32, 8>}, {pipeline_mode = #tpu.pipeline_mode<synchronous>, transform_indices = @transform_8, window_bounds = array<i64: 1, 8>}, {transform_indices = @transform_9, window_bounds = array<i64: 24, 8>}]} {
    %c0 = arith.constant 0 : index
    %c0_0 = arith.constant 0 : index
    %0 = vector.load %arg1[%c0, %c0_0] : memref<24x2xf32, #tpu.memory_space<vmem>>, vector<24x2xf32>
    %c0_1 = arith.constant 0 : index
    %c0_2 = arith.constant 0 : index
    %1 = vector.load %arg2[%c0_1, %c0_2] : memref<2x32xf32, #tpu.memory_space<vmem>>, vector<2x32xf32>
    %cst = arith.constant dense<0.000000e+00> : vector<24x32xf32>
    %2 = tpu.matmul %0, %1, %cst {dimension_numbers = #tpu.dot_dimension_numbers<[1], [0], [0], [1], [0, 0, 1, 1], [], []>} : vector<24x2xf32>, vector<2x32xf32>, vector<24x32xf32> -> vector<24x32xf32>
    %c0_3 = arith.constant 0 : index
    %c0_4 = arith.constant 0 : index
    %3 = vector.load %arg3[%c0_3, %c0_4] : memref<1x32xf32, #tpu.memory_space<vmem>>, vector<1x32xf32>
    %4 = vector.broadcast %3 : vector<1x32xf32> to vector<24x32xf32>
    %5 = arith.addf %2, %4 : vector<24x32xf32>
    %6 = math.tanh %5 : vector<24x32xf32>
    %c0_5 = arith.constant 0 : index
    %c0_6 = arith.constant 0 : index
    %c0_7 = arith.constant 0 : index
    %7 = vector.load %arg4[%c0_5, %c0_6, %c0_7] : memref<2x32x32xf32, #tpu.memory_space<vmem>>, vector<1x32x32xf32>
    %8 = vector.shape_cast %7 : vector<1x32x32xf32> to vector<32x32xf32>
    %cst_8 = arith.constant dense<0.000000e+00> : vector<24x32xf32>
    %9 = tpu.matmul %6, %8, %cst_8 {dimension_numbers = #tpu.dot_dimension_numbers<[1], [0], [0], [1], [0, 0, 1, 1], [], []>} : vector<24x32xf32>, vector<32x32xf32>, vector<24x32xf32> -> vector<24x32xf32>
    %c0_9 = arith.constant 0 : index
    %c0_10 = arith.constant 0 : index
    %c0_11 = arith.constant 0 : index
    %10 = vector.load %arg5[%c0_9, %c0_10, %c0_11] : memref<2x1x32xf32, #tpu.memory_space<vmem>>, vector<1x1x32xf32>
    %11 = vector.shape_cast %10 : vector<1x1x32xf32> to vector<1x32xf32>
    %12 = vector.broadcast %11 : vector<1x32xf32> to vector<24x32xf32>
    %13 = arith.addf %9, %12 : vector<24x32xf32>
    %14 = math.tanh %13 : vector<24x32xf32>
    %15 = arith.addf %6, %14 : vector<24x32xf32>
    %c1 = arith.constant 1 : index
    %c0_12 = arith.constant 0 : index
    %c0_13 = arith.constant 0 : index
    %16 = vector.load %arg4[%c1, %c0_12, %c0_13] : memref<2x32x32xf32, #tpu.memory_space<vmem>>, vector<1x32x32xf32>
    %17 = vector.shape_cast %16 : vector<1x32x32xf32> to vector<32x32xf32>
    %cst_14 = arith.constant dense<0.000000e+00> : vector<24x32xf32>
    %18 = tpu.matmul %15, %17, %cst_14 {dimension_numbers = #tpu.dot_dimension_numbers<[1], [0], [0], [1], [0, 0, 1, 1], [], []>} : vector<24x32xf32>, vector<32x32xf32>, vector<24x32xf32> -> vector<24x32xf32>
    %c1_15 = arith.constant 1 : index
    %c0_16 = arith.constant 0 : index
    %c0_17 = arith.constant 0 : index
    %19 = vector.load %arg5[%c1_15, %c0_16, %c0_17] : memref<2x1x32xf32, #tpu.memory_space<vmem>>, vector<1x1x32xf32>
    %20 = vector.shape_cast %19 : vector<1x1x32xf32> to vector<1x32xf32>
    %21 = vector.broadcast %20 : vector<1x32xf32> to vector<24x32xf32>
    %22 = arith.addf %18, %21 : vector<24x32xf32>
    %23 = math.tanh %22 : vector<24x32xf32>
    %24 = arith.addf %15, %23 : vector<24x32xf32>
    %c0_18 = arith.constant 0 : index
    %c0_19 = arith.constant 0 : index
    %25 = vector.load %arg6[%c0_18, %c0_19] : memref<32x32xf32, #tpu.memory_space<vmem>>, vector<32x32xf32>
    %cst_20 = arith.constant dense<0.000000e+00> : vector<24x32xf32>
    %26 = tpu.matmul %24, %25, %cst_20 {dimension_numbers = #tpu.dot_dimension_numbers<[1], [0], [0], [1], [0, 0, 1, 1], [], []>} : vector<24x32xf32>, vector<32x32xf32>, vector<24x32xf32> -> vector<24x32xf32>
    %c0_21 = arith.constant 0 : index
    %c0_22 = arith.constant 0 : index
    %27 = vector.load %arg7[%c0_21, %c0_22] : memref<1x32xf32, #tpu.memory_space<vmem>>, vector<1x32xf32>
    %28 = vector.broadcast %27 : vector<1x32xf32> to vector<24x32xf32>
    %29 = arith.addf %26, %28 : vector<24x32xf32>
    %c0_23 = arith.constant 0 : index
    %c0_24 = arith.constant 0 : index
    %30 = vector.load %arg8[%c0_23, %c0_24] : memref<32x8xf32, #tpu.memory_space<vmem>>, vector<32x8xf32>
    %cst_25 = arith.constant dense<0.000000e+00> : vector<24x8xf32>
    %31 = tpu.matmul %29, %30, %cst_25 {dimension_numbers = #tpu.dot_dimension_numbers<[1], [0], [0], [1], [0, 0, 1, 1], [], []>} : vector<24x32xf32>, vector<32x8xf32>, vector<24x8xf32> -> vector<24x8xf32>
    %c0_26 = arith.constant 0 : index
    %c0_27 = arith.constant 0 : index
    %32 = vector.load %arg9[%c0_26, %c0_27] : memref<1x8xf32, #tpu.memory_space<vmem>>, vector<1x8xf32>
    %33 = vector.broadcast %32 : vector<1x8xf32> to vector<24x8xf32>
    %34 = arith.addf %31, %33 : vector<24x8xf32>
    %c0_28 = arith.constant 0 : index
    %c0_29 = arith.constant 0 : index
    %35 = vector.load %arg10[%c0_28, %c0_29] : memref<24x8xf32, #tpu.memory_space<vmem>>, vector<24x8xf32>
    tpu.vector_store %arg10[%c0_28, %c0_29], %34 {strides = array<i32>} : memref<24x8xf32, #tpu.memory_space<vmem>>, vector<24x8xf32>,
    return
  }
  func.func @transform_0(%arg0: i32) -> (i32, i32) {
    %c0_i32 = arith.constant 0 : i32
    %c0_i32_0 = arith.constant 0 : i32
    return %arg0, %c0_i32 : i32, i32
  }
  func.func @transform_1(%arg0: i32) -> (i32, i32) {
    %c0_i32 = arith.constant 0 : i32
    %c0_i32_0 = arith.constant 0 : i32
    %c0_i32_1 = arith.constant 0 : i32
    return %c0_i32, %c0_i32_0 : i32, i32
  }
  func.func @transform_2(%arg0: i32) -> (i32, i32) {
    %c0_i32 = arith.constant 0 : i32
    %c0_i32_0 = arith.constant 0 : i32
    %c0_i32_1 = arith.constant 0 : i32
    return %c0_i32, %c0_i32_0 : i32, i32
  }
  func.func @transform_3(%arg0: i32) -> (i32, i32, i32) {
    %c0_i32 = arith.constant 0 : i32
    %c0_i32_0 = arith.constant 0 : i32
    %c0_i32_1 = arith.constant 0 : i32
    %c0_i32_2 = arith.constant 0 : i32
    return %c0_i32, %c0_i32_0, %c0_i32_1 : i32, i32, i32
  }
  func.func @transform_4(%arg0: i32) -> (i32, i32, i32) {
    %c0_i32 = arith.constant 0 : i32
    %c0_i32_0 = arith.constant 0 : i32
    %c0_i32_1 = arith.constant 0 : i32
    %c0_i32_2 = arith.constant 0 : i32
    return %c0_i32, %c0_i32_0, %c0_i32_1 : i32, i32, i32
  }
  func.func @transform_5(%arg0: i32) -> (i32, i32) {
    %c0_i32 = arith.constant 0 : i32
    %c0_i32_0 = arith.constant 0 : i32
    %c0_i32_1 = arith.constant 0 : i32
    return %c0_i32, %c0_i32_0 : i32, i32
  }
  func.func @transform_6(%arg0: i32) -> (i32, i32) {
    %c0_i32 = arith.constant 0 : i32
    %c0_i32_0 = arith.constant 0 : i32
    %c0_i32_1 = arith.constant 0 : i32
    return %c0_i32, %c0_i32_0 : i32, i32
  }
  func.func @transform_7(%arg0: i32) -> (i32, i32) {
    %c0_i32 = arith.constant 0 : i32
    %c0_i32_0 = arith.constant 0 : i32
    %c0_i32_1 = arith.constant 0 : i32
    return %c0_i32, %c0_i32_0 : i32, i32
  }
  func.func @transform_8(%arg0: i32) -> (i32, i32) {
    %c0_i32 = arith.constant 0 : i32
    %c0_i32_0 = arith.constant 0 : i32
    %c0_i32_1 = arith.constant 0 : i32
    return %c0_i32, %c0_i32_0 : i32, i32
  }
  func.func @transform_9(%arg0: i32) -> (i32, i32) {
    %c0_i32 = arith.constant 0 : i32
    %c0_i32_0 = arith.constant 0 : i32
    return %arg0, %c0_i32 : i32, i32
  }
}

module attributes {stable_mosaic.version = 11 : i64} {
  func.func @_encode_kernel(%arg0: i32, %arg1: memref<1x12x8xf32, #tpu.memory_space<vmem>>, %arg2: memref<1x12x32xf32, #tpu.memory_space<vmem>>, %arg3: memref<32x32xf32, #tpu.memory_space<vmem>>, %arg4: memref<1x32xf32, #tpu.memory_space<vmem>>, %arg5: memref<1x8x32xf32, #tpu.memory_space<vmem>>) attributes {dimension_semantics = [#tpu.dimension_semantics<parallel>], iteration_bounds = array<i64: 2>, scalar_prefetch = 0 : i64, scratch_operands = 0 : i64, tpu.core_type = #tpu.core_type<tc>, window_params = [{transform_indices = @transform_0, window_bounds = array<i64: 1, 12, 8>}, {transform_indices = @transform_1, window_bounds = array<i64: 1, 12, 32>}, {pipeline_mode = #tpu.pipeline_mode<synchronous>, transform_indices = @transform_2, window_bounds = array<i64: 32, 32>}, {pipeline_mode = #tpu.pipeline_mode<synchronous>, transform_indices = @transform_3, window_bounds = array<i64: 1, 32>}, {transform_indices = @transform_4, window_bounds = array<i64: 1, 8, 32>}]} {
    %c0 = arith.constant 0 : index
    %c0_0 = arith.constant 0 : index
    %c0_1 = arith.constant 0 : index
    %0 = vector.load %arg1[%c0, %c0_0, %c0_1] : memref<1x12x8xf32, #tpu.memory_space<vmem>>, vector<1x12x8xf32>
    %1 = vector.shape_cast %0 : vector<1x12x8xf32> to vector<12x8xf32>
    %cst = arith.constant dense<0xFF800000> : vector<8xf32>
    %2 = vector.multi_reduction <maximumf>, %1, %cst [0] : vector<12x8xf32> to vector<8xf32>
    %cst_2 = arith.constant 0xFF800000 : f32
    %3 = vector.broadcast %cst_2 : f32 to vector<8xf32>
    %4 = arith.maximumf %3, %2 : vector<8xf32>
    %5 = vector.shape_cast %4 : vector<8xf32> to vector<1x8xf32>
    %6 = vector.broadcast %5 : vector<1x8xf32> to vector<12x8xf32>
    %7 = arith.subf %1, %6 : vector<12x8xf32>
    %8 = math.exp %7 : vector<12x8xf32>
    %cst_3 = arith.constant dense<0.000000e+00> : vector<8xf32>
    %9 = vector.multi_reduction <add>, %8, %cst_3 [0] : vector<12x8xf32> to vector<8xf32>
    %10 = vector.shape_cast %9 : vector<8xf32> to vector<1x8xf32>
    %11 = vector.broadcast %10 : vector<1x8xf32> to vector<12x8xf32>
    %12 = arith.divf %8, %11 : vector<12x8xf32>
    %c0_4 = arith.constant 0 : index
    %c0_5 = arith.constant 0 : index
    %c0_6 = arith.constant 0 : index
    %13 = vector.load %arg2[%c0_4, %c0_5, %c0_6] : memref<1x12x32xf32, #tpu.memory_space<vmem>>, vector<1x12x32xf32>
    %14 = vector.shape_cast %13 : vector<1x12x32xf32> to vector<12x32xf32>
    %cst_7 = arith.constant dense<0.000000e+00> : vector<8x32xf32>
    %15 = tpu.matmul %12, %14, %cst_7 {dimension_numbers = #tpu.dot_dimension_numbers<[0], [0], [1], [1], [0, 1, 1, 1], [], []>} : vector<12x8xf32>, vector<12x32xf32>, vector<8x32xf32> -> vector<8x32xf32>
    %c0_8 = arith.constant 0 : index
    %c0_9 = arith.constant 0 : index
    %16 = vector.load %arg3[%c0_8, %c0_9] : memref<32x32xf32, #tpu.memory_space<vmem>>, vector<32x32xf32>
    %cst_10 = arith.constant dense<0.000000e+00> : vector<8x32xf32>
    %17 = tpu.matmul %15, %16, %cst_10 {dimension_numbers = #tpu.dot_dimension_numbers<[1], [0], [0], [1], [0, 0, 1, 1], [], []>} : vector<8x32xf32>, vector<32x32xf32>, vector<8x32xf32> -> vector<8x32xf32>
    %c0_11 = arith.constant 0 : index
    %c0_12 = arith.constant 0 : index
    %18 = vector.load %arg4[%c0_11, %c0_12] : memref<1x32xf32, #tpu.memory_space<vmem>>, vector<1x32xf32>
    %19 = vector.broadcast %18 : vector<1x32xf32> to vector<8x32xf32>
    %20 = arith.addf %17, %19 : vector<8x32xf32>
    %c0_13 = arith.constant 0 : index
    %c0_14 = arith.constant 0 : index
    %c0_15 = arith.constant 0 : index
    %21 = vector.load %arg5[%c0_13, %c0_14, %c0_15] : memref<1x8x32xf32, #tpu.memory_space<vmem>>, vector<1x8x32xf32>
    %22 = vector.shape_cast %21 : vector<1x8x32xf32> to vector<8x32xf32>
    %23 = vector.shape_cast %20 : vector<8x32xf32> to vector<1x8x32xf32>
    tpu.vector_store %arg5[%c0_13, %c0_14, %c0_15], %23 {strides = array<i32>} : memref<1x8x32xf32, #tpu.memory_space<vmem>>, vector<1x8x32xf32>,
    return
  }
  func.func @transform_0(%arg0: i32) -> (i32, i32, i32) {
    %c0_i32 = arith.constant 0 : i32
    %c0_i32_0 = arith.constant 0 : i32
    %c0_i32_1 = arith.constant 0 : i32
    return %arg0, %c0_i32, %c0_i32_0 : i32, i32, i32
  }
  func.func @transform_1(%arg0: i32) -> (i32, i32, i32) {
    %c0_i32 = arith.constant 0 : i32
    %c0_i32_0 = arith.constant 0 : i32
    %c0_i32_1 = arith.constant 0 : i32
    return %arg0, %c0_i32, %c0_i32_0 : i32, i32, i32
  }
  func.func @transform_2(%arg0: i32) -> (i32, i32) {
    %c0_i32 = arith.constant 0 : i32
    %c0_i32_0 = arith.constant 0 : i32
    %c0_i32_1 = arith.constant 0 : i32
    return %c0_i32, %c0_i32_0 : i32, i32
  }
  func.func @transform_3(%arg0: i32) -> (i32, i32) {
    %c0_i32 = arith.constant 0 : i32
    %c0_i32_0 = arith.constant 0 : i32
    %c0_i32_1 = arith.constant 0 : i32
    return %c0_i32, %c0_i32_0 : i32, i32
  }
  func.func @transform_4(%arg0: i32) -> (i32, i32, i32) {
    %c0_i32 = arith.constant 0 : i32
    %c0_i32_0 = arith.constant 0 : i32
    %c0_i32_1 = arith.constant 0 : i32
    return %arg0, %c0_i32, %c0_i32_0 : i32, i32, i32
  }
}

module attributes {stable_mosaic.version = 11 : i64} {
  func.func @_branch_v_kernel(%arg0: i32, %arg1: memref<24x5xf32, #tpu.memory_space<vmem>>, %arg2: memref<5x32xf32, #tpu.memory_space<vmem>>, %arg3: memref<1x32xf32, #tpu.memory_space<vmem>>, %arg4: memref<2x32x32xf32, #tpu.memory_space<vmem>>, %arg5: memref<2x1x32xf32, #tpu.memory_space<vmem>>, %arg6: memref<32x32xf32, #tpu.memory_space<vmem>>, %arg7: memref<1x32xf32, #tpu.memory_space<vmem>>, %arg8: memref<1x32xf32, #tpu.memory_space<vmem>>, %arg9: memref<1x32xf32, #tpu.memory_space<vmem>>, %arg10: memref<32x32xf32, #tpu.memory_space<vmem>>, %arg11: memref<1x32xf32, #tpu.memory_space<vmem>>, %arg12: memref<24x32xf32, #tpu.memory_space<vmem>>) attributes {dimension_semantics = [#tpu.dimension_semantics<parallel>], iteration_bounds = array<i64: 1>, scalar_prefetch = 0 : i64, scratch_operands = 0 : i64, tpu.core_type = #tpu.core_type<tc>, window_params = [{transform_indices = @transform_0, window_bounds = array<i64: 24, 5>}, {pipeline_mode = #tpu.pipeline_mode<synchronous>, transform_indices = @transform_1, window_bounds = array<i64: 5, 32>}, {pipeline_mode = #tpu.pipeline_mode<synchronous>, transform_indices = @transform_2, window_bounds = array<i64: 1, 32>}, {pipeline_mode = #tpu.pipeline_mode<synchronous>, transform_indices = @transform_3, window_bounds = array<i64: 2, 32, 32>}, {pipeline_mode = #tpu.pipeline_mode<synchronous>, transform_indices = @transform_4, window_bounds = array<i64: 2, 1, 32>}, {pipeline_mode = #tpu.pipeline_mode<synchronous>, transform_indices = @transform_5, window_bounds = array<i64: 32, 32>}, {pipeline_mode = #tpu.pipeline_mode<synchronous>, transform_indices = @transform_6, window_bounds = array<i64: 1, 32>}, {pipeline_mode = #tpu.pipeline_mode<synchronous>, transform_indices = @transform_7, window_bounds = array<i64: 1, 32>}, {pipeline_mode = #tpu.pipeline_mode<synchronous>, transform_indices = @transform_8, window_bounds = array<i64: 1, 32>}, {pipeline_mode = #tpu.pipeline_mode<synchronous>, transform_indices = @transform_9, window_bounds = array<i64: 32, 32>}, {pipeline_mode = #tpu.pipeline_mode<synchronous>, transform_indices = @transform_10, window_bounds = array<i64: 1, 32>}, {transform_indices = @transform_11, window_bounds = array<i64: 24, 32>}]} {
    %c0 = arith.constant 0 : index
    %c0_0 = arith.constant 0 : index
    %0 = vector.load %arg1[%c0, %c0_0] : memref<24x5xf32, #tpu.memory_space<vmem>>, vector<24x5xf32>
    %c0_1 = arith.constant 0 : index
    %c0_2 = arith.constant 0 : index
    %1 = vector.load %arg2[%c0_1, %c0_2] : memref<5x32xf32, #tpu.memory_space<vmem>>, vector<5x32xf32>
    %cst = arith.constant dense<0.000000e+00> : vector<24x32xf32>
    %2 = tpu.matmul %0, %1, %cst {dimension_numbers = #tpu.dot_dimension_numbers<[1], [0], [0], [1], [0, 0, 1, 1], [], []>} : vector<24x5xf32>, vector<5x32xf32>, vector<24x32xf32> -> vector<24x32xf32>
    %c0_3 = arith.constant 0 : index
    %c0_4 = arith.constant 0 : index
    %3 = vector.load %arg3[%c0_3, %c0_4] : memref<1x32xf32, #tpu.memory_space<vmem>>, vector<1x32xf32>
    %4 = vector.broadcast %3 : vector<1x32xf32> to vector<24x32xf32>
    %5 = arith.addf %2, %4 : vector<24x32xf32>
    %6 = math.tanh %5 : vector<24x32xf32>
    %c0_5 = arith.constant 0 : index
    %c0_6 = arith.constant 0 : index
    %c0_7 = arith.constant 0 : index
    %7 = vector.load %arg4[%c0_5, %c0_6, %c0_7] : memref<2x32x32xf32, #tpu.memory_space<vmem>>, vector<1x32x32xf32>
    %8 = vector.shape_cast %7 : vector<1x32x32xf32> to vector<32x32xf32>
    %cst_8 = arith.constant dense<0.000000e+00> : vector<24x32xf32>
    %9 = tpu.matmul %6, %8, %cst_8 {dimension_numbers = #tpu.dot_dimension_numbers<[1], [0], [0], [1], [0, 0, 1, 1], [], []>} : vector<24x32xf32>, vector<32x32xf32>, vector<24x32xf32> -> vector<24x32xf32>
    %c0_9 = arith.constant 0 : index
    %c0_10 = arith.constant 0 : index
    %c0_11 = arith.constant 0 : index
    %10 = vector.load %arg5[%c0_9, %c0_10, %c0_11] : memref<2x1x32xf32, #tpu.memory_space<vmem>>, vector<1x1x32xf32>
    %11 = vector.shape_cast %10 : vector<1x1x32xf32> to vector<1x32xf32>
    %12 = vector.broadcast %11 : vector<1x32xf32> to vector<24x32xf32>
    %13 = arith.addf %9, %12 : vector<24x32xf32>
    %14 = math.tanh %13 : vector<24x32xf32>
    %15 = arith.addf %6, %14 : vector<24x32xf32>
    %c1 = arith.constant 1 : index
    %c0_12 = arith.constant 0 : index
    %c0_13 = arith.constant 0 : index
    %16 = vector.load %arg4[%c1, %c0_12, %c0_13] : memref<2x32x32xf32, #tpu.memory_space<vmem>>, vector<1x32x32xf32>
    %17 = vector.shape_cast %16 : vector<1x32x32xf32> to vector<32x32xf32>
    %cst_14 = arith.constant dense<0.000000e+00> : vector<24x32xf32>
    %18 = tpu.matmul %15, %17, %cst_14 {dimension_numbers = #tpu.dot_dimension_numbers<[1], [0], [0], [1], [0, 0, 1, 1], [], []>} : vector<24x32xf32>, vector<32x32xf32>, vector<24x32xf32> -> vector<24x32xf32>
    %c1_15 = arith.constant 1 : index
    %c0_16 = arith.constant 0 : index
    %c0_17 = arith.constant 0 : index
    %19 = vector.load %arg5[%c1_15, %c0_16, %c0_17] : memref<2x1x32xf32, #tpu.memory_space<vmem>>, vector<1x1x32xf32>
    %20 = vector.shape_cast %19 : vector<1x1x32xf32> to vector<1x32xf32>
    %21 = vector.broadcast %20 : vector<1x32xf32> to vector<24x32xf32>
    %22 = arith.addf %18, %21 : vector<24x32xf32>
    %23 = math.tanh %22 : vector<24x32xf32>
    %24 = arith.addf %15, %23 : vector<24x32xf32>
    %c0_18 = arith.constant 0 : index
    %c0_19 = arith.constant 0 : index
    %25 = vector.load %arg6[%c0_18, %c0_19] : memref<32x32xf32, #tpu.memory_space<vmem>>, vector<32x32xf32>
    %cst_20 = arith.constant dense<0.000000e+00> : vector<24x32xf32>
    %26 = tpu.matmul %24, %25, %cst_20 {dimension_numbers = #tpu.dot_dimension_numbers<[1], [0], [0], [1], [0, 0, 1, 1], [], []>} : vector<24x32xf32>, vector<32x32xf32>, vector<24x32xf32> -> vector<24x32xf32>
    %c0_21 = arith.constant 0 : index
    %c0_22 = arith.constant 0 : index
    %27 = vector.load %arg7[%c0_21, %c0_22] : memref<1x32xf32, #tpu.memory_space<vmem>>, vector<1x32xf32>
    %28 = vector.broadcast %27 : vector<1x32xf32> to vector<24x32xf32>
    %29 = arith.addf %26, %28 : vector<24x32xf32>
    %c0_23 = arith.constant 0 : index
    %c0_24 = arith.constant 0 : index
    %30 = vector.load %arg8[%c0_23, %c0_24] : memref<1x32xf32, #tpu.memory_space<vmem>>, vector<1x32xf32>
    %c0_25 = arith.constant 0 : index
    %c0_26 = arith.constant 0 : index
    %31 = vector.load %arg9[%c0_25, %c0_26] : memref<1x32xf32, #tpu.memory_space<vmem>>, vector<1x32xf32>
    %cst_27 = arith.constant dense<0.000000e+00> : vector<24xf32>
    %32 = vector.multi_reduction <add>, %29, %cst_27 [1] : vector<24x32xf32> to vector<24xf32>
    %33 = vector.shape_cast %32 : vector<24xf32> to vector<24x1xf32>
    %cst_28 = arith.constant 3.200000e+01 : f32
    %34 = vector.broadcast %cst_28 : f32 to vector<24x1xf32>
    %35 = arith.divf %33, %34 : vector<24x1xf32>
    %36 = vector.broadcast %35 : vector<24x1xf32> to vector<24x32xf32>
    %37 = arith.subf %29, %36 : vector<24x32xf32>
    %38 = arith.mulf %37, %37 : vector<24x32xf32>
    %cst_29 = arith.constant dense<0.000000e+00> : vector<24xf32>
    %39 = vector.multi_reduction <add>, %38, %cst_29 [1] : vector<24x32xf32> to vector<24xf32>
    %40 = vector.shape_cast %39 : vector<24xf32> to vector<24x1xf32>
    %cst_30 = arith.constant 3.200000e+01 : f32
    %41 = vector.broadcast %cst_30 : f32 to vector<24x1xf32>
    %42 = arith.divf %40, %41 : vector<24x1xf32>
    %43 = vector.broadcast %35 : vector<24x1xf32> to vector<24x32xf32>
    %44 = arith.subf %29, %43 : vector<24x32xf32>
    %cst_31 = arith.constant 9.99999974E-6 : f32
    %45 = vector.broadcast %cst_31 : f32 to vector<24x1xf32>
    %46 = arith.addf %42, %45 : vector<24x1xf32>
    %47 = math.rsqrt %46 : vector<24x1xf32>
    %48 = vector.broadcast %47 : vector<24x1xf32> to vector<24x32xf32>
    %49 = arith.mulf %44, %48 : vector<24x32xf32>
    %50 = vector.broadcast %30 : vector<1x32xf32> to vector<24x32xf32>
    %51 = arith.mulf %49, %50 : vector<24x32xf32>
    %52 = vector.broadcast %31 : vector<1x32xf32> to vector<24x32xf32>
    %53 = arith.addf %51, %52 : vector<24x32xf32>
    %c0_32 = arith.constant 0 : index
    %c0_33 = arith.constant 0 : index
    %54 = vector.load %arg10[%c0_32, %c0_33] : memref<32x32xf32, #tpu.memory_space<vmem>>, vector<32x32xf32>
    %cst_34 = arith.constant dense<0.000000e+00> : vector<24x32xf32>
    %55 = tpu.matmul %53, %54, %cst_34 {dimension_numbers = #tpu.dot_dimension_numbers<[1], [0], [0], [1], [0, 0, 1, 1], [], []>} : vector<24x32xf32>, vector<32x32xf32>, vector<24x32xf32> -> vector<24x32xf32>
    %c0_35 = arith.constant 0 : index
    %c0_36 = arith.constant 0 : index
    %56 = vector.load %arg11[%c0_35, %c0_36] : memref<1x32xf32, #tpu.memory_space<vmem>>, vector<1x32xf32>
    %57 = vector.broadcast %56 : vector<1x32xf32> to vector<24x32xf32>
    %58 = arith.addf %55, %57 : vector<24x32xf32>
    %c0_37 = arith.constant 0 : index
    %c0_38 = arith.constant 0 : index
    %59 = vector.load %arg12[%c0_37, %c0_38] : memref<24x32xf32, #tpu.memory_space<vmem>>, vector<24x32xf32>
    tpu.vector_store %arg12[%c0_37, %c0_38], %58 {strides = array<i32>} : memref<24x32xf32, #tpu.memory_space<vmem>>, vector<24x32xf32>,
    return
  }
  func.func @transform_0(%arg0: i32) -> (i32, i32) {
    %c0_i32 = arith.constant 0 : i32
    %c0_i32_0 = arith.constant 0 : i32
    return %arg0, %c0_i32 : i32, i32
  }
  func.func @transform_1(%arg0: i32) -> (i32, i32) {
    %c0_i32 = arith.constant 0 : i32
    %c0_i32_0 = arith.constant 0 : i32
    %c0_i32_1 = arith.constant 0 : i32
    return %c0_i32, %c0_i32_0 : i32, i32
  }
  func.func @transform_2(%arg0: i32) -> (i32, i32) {
    %c0_i32 = arith.constant 0 : i32
    %c0_i32_0 = arith.constant 0 : i32
    %c0_i32_1 = arith.constant 0 : i32
    return %c0_i32, %c0_i32_0 : i32, i32
  }
  func.func @transform_3(%arg0: i32) -> (i32, i32, i32) {
    %c0_i32 = arith.constant 0 : i32
    %c0_i32_0 = arith.constant 0 : i32
    %c0_i32_1 = arith.constant 0 : i32
    %c0_i32_2 = arith.constant 0 : i32
    return %c0_i32, %c0_i32_0, %c0_i32_1 : i32, i32, i32
  }
  func.func @transform_4(%arg0: i32) -> (i32, i32, i32) {
    %c0_i32 = arith.constant 0 : i32
    %c0_i32_0 = arith.constant 0 : i32
    %c0_i32_1 = arith.constant 0 : i32
    %c0_i32_2 = arith.constant 0 : i32
    return %c0_i32, %c0_i32_0, %c0_i32_1 : i32, i32, i32
  }
  func.func @transform_5(%arg0: i32) -> (i32, i32) {
    %c0_i32 = arith.constant 0 : i32
    %c0_i32_0 = arith.constant 0 : i32
    %c0_i32_1 = arith.constant 0 : i32
    return %c0_i32, %c0_i32_0 : i32, i32
  }
  func.func @transform_6(%arg0: i32) -> (i32, i32) {
    %c0_i32 = arith.constant 0 : i32
    %c0_i32_0 = arith.constant 0 : i32
    %c0_i32_1 = arith.constant 0 : i32
    return %c0_i32, %c0_i32_0 : i32, i32
  }
  func.func @transform_7(%arg0: i32) -> (i32, i32) {
    %c0_i32 = arith.constant 0 : i32
    %c0_i32_0 = arith.constant 0 : i32
    %c0_i32_1 = arith.constant 0 : i32
    return %c0_i32, %c0_i32_0 : i32, i32
  }
  func.func @transform_8(%arg0: i32) -> (i32, i32) {
    %c0_i32 = arith.constant 0 : i32
    %c0_i32_0 = arith.constant 0 : i32
    %c0_i32_1 = arith.constant 0 : i32
    return %c0_i32, %c0_i32_0 : i32, i32
  }
  func.func @transform_9(%arg0: i32) -> (i32, i32) {
    %c0_i32 = arith.constant 0 : i32
    %c0_i32_0 = arith.constant 0 : i32
    %c0_i32_1 = arith.constant 0 : i32
    return %c0_i32, %c0_i32_0 : i32, i32
  }
  func.func @transform_10(%arg0: i32) -> (i32, i32) {
    %c0_i32 = arith.constant 0 : i32
    %c0_i32_0 = arith.constant 0 : i32
    %c0_i32_1 = arith.constant 0 : i32
    return %c0_i32, %c0_i32_0 : i32, i32
  }
  func.func @transform_11(%arg0: i32) -> (i32, i32) {
    %c0_i32 = arith.constant 0 : i32
    %c0_i32_0 = arith.constant 0 : i32
    return %arg0, %c0_i32 : i32, i32
  }
}

module attributes {stable_mosaic.version = 11 : i64} {
  func.func @_attn_block_kernel(%arg0: i32, %arg1: memref<1x8x32xf32, #tpu.memory_space<vmem>>, %arg2: memref<1x32xf32, #tpu.memory_space<vmem>>, %arg3: memref<1x32xf32, #tpu.memory_space<vmem>>, %arg4: memref<32x96xf32, #tpu.memory_space<vmem>>, %arg5: memref<1x96xf32, #tpu.memory_space<vmem>>, %arg6: memref<32x32xf32, #tpu.memory_space<vmem>>, %arg7: memref<1x32xf32, #tpu.memory_space<vmem>>, %arg8: memref<1x32xf32, #tpu.memory_space<vmem>>, %arg9: memref<1x32xf32, #tpu.memory_space<vmem>>, %arg10: memref<32x64xf32, #tpu.memory_space<vmem>>, %arg11: memref<1x64xf32, #tpu.memory_space<vmem>>, %arg12: memref<64x32xf32, #tpu.memory_space<vmem>>, %arg13: memref<1x32xf32, #tpu.memory_space<vmem>>, %arg14: memref<1x8x32xf32, #tpu.memory_space<vmem>>) attributes {dimension_semantics = [#tpu.dimension_semantics<parallel>], iteration_bounds = array<i64: 2>, scalar_prefetch = 0 : i64, scratch_operands = 0 : i64, tpu.core_type = #tpu.core_type<tc>, window_params = [{transform_indices = @transform_0, window_bounds = array<i64: 1, 8, 32>}, {pipeline_mode = #tpu.pipeline_mode<synchronous>, transform_indices = @transform_1, window_bounds = array<i64: 1, 32>}, {pipeline_mode = #tpu.pipeline_mode<synchronous>, transform_indices = @transform_2, window_bounds = array<i64: 1, 32>}, {pipeline_mode = #tpu.pipeline_mode<synchronous>, transform_indices = @transform_3, window_bounds = array<i64: 32, 96>}, {pipeline_mode = #tpu.pipeline_mode<synchronous>, transform_indices = @transform_4, window_bounds = array<i64: 1, 96>}, {pipeline_mode = #tpu.pipeline_mode<synchronous>, transform_indices = @transform_5, window_bounds = array<i64: 32, 32>}, {pipeline_mode = #tpu.pipeline_mode<synchronous>, transform_indices = @transform_6, window_bounds = array<i64: 1, 32>}, {pipeline_mode = #tpu.pipeline_mode<synchronous>, transform_indices = @transform_7, window_bounds = array<i64: 1, 32>}, {pipeline_mode = #tpu.pipeline_mode<synchronous>, transform_indices = @transform_8, window_bounds = array<i64: 1, 32>}, {pipeline_mode = #tpu.pipeline_mode<synchronous>, transform_indices = @transform_9, window_bounds = array<i64: 32, 64>}, {pipeline_mode = #tpu.pipeline_mode<synchronous>, transform_indices = @transform_10, window_bounds = array<i64: 1, 64>}, {pipeline_mode = #tpu.pipeline_mode<synchronous>, transform_indices = @transform_11, window_bounds = array<i64: 64, 32>}, {pipeline_mode = #tpu.pipeline_mode<synchronous>, transform_indices = @transform_12, window_bounds = array<i64: 1, 32>}, {transform_indices = @transform_13, window_bounds = array<i64: 1, 8, 32>}]} {
    %c0 = arith.constant 0 : index
    %c0_0 = arith.constant 0 : index
    %c0_1 = arith.constant 0 : index
    %0 = vector.load %arg1[%c0, %c0_0, %c0_1] : memref<1x8x32xf32, #tpu.memory_space<vmem>>, vector<1x8x32xf32>
    %1 = vector.shape_cast %0 : vector<1x8x32xf32> to vector<8x32xf32>
    %c0_2 = arith.constant 0 : index
    %c0_3 = arith.constant 0 : index
    %2 = vector.load %arg2[%c0_2, %c0_3] : memref<1x32xf32, #tpu.memory_space<vmem>>, vector<1x32xf32>
    %c0_4 = arith.constant 0 : index
    %c0_5 = arith.constant 0 : index
    %3 = vector.load %arg3[%c0_4, %c0_5] : memref<1x32xf32, #tpu.memory_space<vmem>>, vector<1x32xf32>
    %cst = arith.constant dense<0.000000e+00> : vector<8xf32>
    %4 = vector.multi_reduction <add>, %1, %cst [1] : vector<8x32xf32> to vector<8xf32>
    %5 = vector.shape_cast %4 : vector<8xf32> to vector<8x1xf32>
    %cst_6 = arith.constant 3.200000e+01 : f32
    %6 = vector.broadcast %cst_6 : f32 to vector<8x1xf32>
    %7 = arith.divf %5, %6 : vector<8x1xf32>
    %8 = vector.broadcast %7 : vector<8x1xf32> to vector<8x32xf32>
    %9 = arith.subf %1, %8 : vector<8x32xf32>
    %10 = arith.mulf %9, %9 : vector<8x32xf32>
    %cst_7 = arith.constant dense<0.000000e+00> : vector<8xf32>
    %11 = vector.multi_reduction <add>, %10, %cst_7 [1] : vector<8x32xf32> to vector<8xf32>
    %12 = vector.shape_cast %11 : vector<8xf32> to vector<8x1xf32>
    %cst_8 = arith.constant 3.200000e+01 : f32
    %13 = vector.broadcast %cst_8 : f32 to vector<8x1xf32>
    %14 = arith.divf %12, %13 : vector<8x1xf32>
    %15 = vector.broadcast %7 : vector<8x1xf32> to vector<8x32xf32>
    %16 = arith.subf %1, %15 : vector<8x32xf32>
    %cst_9 = arith.constant 9.99999974E-6 : f32
    %17 = vector.broadcast %cst_9 : f32 to vector<8x1xf32>
    %18 = arith.addf %14, %17 : vector<8x1xf32>
    %19 = math.rsqrt %18 : vector<8x1xf32>
    %20 = vector.broadcast %19 : vector<8x1xf32> to vector<8x32xf32>
    %21 = arith.mulf %16, %20 : vector<8x32xf32>
    %22 = vector.broadcast %2 : vector<1x32xf32> to vector<8x32xf32>
    %23 = arith.mulf %21, %22 : vector<8x32xf32>
    %24 = vector.broadcast %3 : vector<1x32xf32> to vector<8x32xf32>
    %25 = arith.addf %23, %24 : vector<8x32xf32>
    %c0_10 = arith.constant 0 : index
    %c0_11 = arith.constant 0 : index
    %26 = vector.load %arg4[%c0_10, %c0_11] : memref<32x96xf32, #tpu.memory_space<vmem>>, vector<32x96xf32>
    %cst_12 = arith.constant dense<0.000000e+00> : vector<8x96xf32>
    %27 = tpu.matmul %25, %26, %cst_12 {dimension_numbers = #tpu.dot_dimension_numbers<[1], [0], [0], [1], [0, 0, 1, 1], [], []>} : vector<8x32xf32>, vector<32x96xf32>, vector<8x96xf32> -> vector<8x96xf32>
    %c0_13 = arith.constant 0 : index
    %c0_14 = arith.constant 0 : index
    %28 = vector.load %arg5[%c0_13, %c0_14] : memref<1x96xf32, #tpu.memory_space<vmem>>, vector<1x96xf32>
    %29 = vector.broadcast %28 : vector<1x96xf32> to vector<8x96xf32>
    %30 = arith.addf %27, %29 : vector<8x96xf32>
    %31 = vector.extract_strided_slice %30 {offsets = [0, 0], sizes = [8, 32], strides = [1, 1]} : vector<8x96xf32> to vector<8x32xf32>
    %32 = vector.extract_strided_slice %30 {offsets = [0, 32], sizes = [8, 32], strides = [1, 1]} : vector<8x96xf32> to vector<8x32xf32>
    %33 = vector.extract_strided_slice %30 {offsets = [0, 64], sizes = [8, 32], strides = [1, 1]} : vector<8x96xf32> to vector<8x32xf32>
    %34 = vector.extract_strided_slice %31 {offsets = [0, 0], sizes = [8, 8], strides = [1, 1]} : vector<8x32xf32> to vector<8x8xf32>
    %cst_15 = arith.constant dense<0xFF800000> : vector<8xf32>
    %35 = vector.multi_reduction <maximumf>, %34, %cst_15 [1] : vector<8x8xf32> to vector<8xf32>
    %cst_16 = arith.constant 0xFF800000 : f32
    %36 = vector.broadcast %cst_16 : f32 to vector<8xf32>
    %37 = arith.maximumf %36, %35 : vector<8xf32>
    %38 = vector.shape_cast %37 : vector<8xf32> to vector<8x1xf32>
    %39 = vector.broadcast %38 : vector<8x1xf32> to vector<8x8xf32>
    %40 = arith.subf %34, %39 : vector<8x8xf32>
    %41 = math.exp %40 : vector<8x8xf32>
    %cst_17 = arith.constant dense<0.000000e+00> : vector<8xf32>
    %42 = vector.multi_reduction <add>, %41, %cst_17 [1] : vector<8x8xf32> to vector<8xf32>
    %43 = vector.shape_cast %42 : vector<8xf32> to vector<8x1xf32>
    %44 = vector.broadcast %43 : vector<8x1xf32> to vector<8x8xf32>
    %45 = arith.divf %41, %44 : vector<8x8xf32>
    %46 = vector.extract_strided_slice %32 {offsets = [0, 0], sizes = [8, 8], strides = [1, 1]} : vector<8x32xf32> to vector<8x8xf32>
    %cst_18 = arith.constant dense<0xFF800000> : vector<8xf32>
    %47 = vector.multi_reduction <maximumf>, %46, %cst_18 [1] : vector<8x8xf32> to vector<8xf32>
    %cst_19 = arith.constant 0xFF800000 : f32
    %48 = vector.broadcast %cst_19 : f32 to vector<8xf32>
    %49 = arith.maximumf %48, %47 : vector<8xf32>
    %50 = vector.shape_cast %49 : vector<8xf32> to vector<8x1xf32>
    %51 = vector.broadcast %50 : vector<8x1xf32> to vector<8x8xf32>
    %52 = arith.subf %46, %51 : vector<8x8xf32>
    %53 = math.exp %52 : vector<8x8xf32>
    %cst_20 = arith.constant dense<0.000000e+00> : vector<8xf32>
    %54 = vector.multi_reduction <add>, %53, %cst_20 [1] : vector<8x8xf32> to vector<8xf32>
    %55 = vector.shape_cast %54 : vector<8xf32> to vector<8x1xf32>
    %56 = vector.broadcast %55 : vector<8x1xf32> to vector<8x8xf32>
    %57 = arith.divf %53, %56 : vector<8x8xf32>
    %58 = vector.extract_strided_slice %33 {offsets = [0, 0], sizes = [8, 8], strides = [1, 1]} : vector<8x32xf32> to vector<8x8xf32>
    %cst_21 = arith.constant dense<0.000000e+00> : vector<8xf32>
    %59 = vector.multi_reduction <add>, %57, %cst_21 [0] : vector<8x8xf32> to vector<8xf32>
    %60 = vector.shape_cast %59 : vector<8xf32> to vector<1x8xf32>
    %61 = vector.broadcast %60 : vector<1x8xf32> to vector<8x8xf32>
    %62 = arith.mulf %45, %61 : vector<8x8xf32>
    %cst_22 = arith.constant dense<0.000000e+00> : vector<8xf32>
    %63 = vector.multi_reduction <add>, %62, %cst_22 [1] : vector<8x8xf32> to vector<8xf32>
    %64 = vector.shape_cast %63 : vector<8xf32> to vector<8x1xf32>
    %cst_23 = arith.constant 1.000000e+00 : f32
    %65 = vector.broadcast %cst_23 : f32 to vector<8x1xf32>
    %66 = arith.divf %65, %64 : vector<8x1xf32>
    %cst_24 = arith.constant dense<0.000000e+00> : vector<8x8xf32>
    %67 = tpu.matmul %57, %58, %cst_24 {dimension_numbers = #tpu.dot_dimension_numbers<[0], [0], [1], [1], [0, 1, 1, 1], [], []>} : vector<8x8xf32>, vector<8x8xf32>, vector<8x8xf32> -> vector<8x8xf32>
    %cst_25 = arith.constant dense<0.000000e+00> : vector<8x8xf32>
    %68 = tpu.matmul %45, %67, %cst_25 {dimension_numbers = #tpu.dot_dimension_numbers<[1], [0], [0], [1], [0, 0, 1, 1], [], []>} : vector<8x8xf32>, vector<8x8xf32>, vector<8x8xf32> -> vector<8x8xf32>
    %69 = vector.broadcast %66 : vector<8x1xf32> to vector<8x8xf32>
    %70 = arith.mulf %68, %69 : vector<8x8xf32>
    %71 = arith.addf %45, %70 : vector<8x8xf32>
    %72 = vector.extract_strided_slice %31 {offsets = [0, 8], sizes = [8, 8], strides = [1, 1]} : vector<8x32xf32> to vector<8x8xf32>
    %cst_26 = arith.constant dense<0xFF800000> : vector<8xf32>
    %73 = vector.multi_reduction <maximumf>, %72, %cst_26 [1] : vector<8x8xf32> to vector<8xf32>
    %cst_27 = arith.constant 0xFF800000 : f32
    %74 = vector.broadcast %cst_27 : f32 to vector<8xf32>
    %75 = arith.maximumf %74, %73 : vector<8xf32>
    %76 = vector.shape_cast %75 : vector<8xf32> to vector<8x1xf32>
    %77 = vector.broadcast %76 : vector<8x1xf32> to vector<8x8xf32>
    %78 = arith.subf %72, %77 : vector<8x8xf32>
    %79 = math.exp %78 : vector<8x8xf32>
    %cst_28 = arith.constant dense<0.000000e+00> : vector<8xf32>
    %80 = vector.multi_reduction <add>, %79, %cst_28 [1] : vector<8x8xf32> to vector<8xf32>
    %81 = vector.shape_cast %80 : vector<8xf32> to vector<8x1xf32>
    %82 = vector.broadcast %81 : vector<8x1xf32> to vector<8x8xf32>
    %83 = arith.divf %79, %82 : vector<8x8xf32>
    %84 = vector.extract_strided_slice %32 {offsets = [0, 8], sizes = [8, 8], strides = [1, 1]} : vector<8x32xf32> to vector<8x8xf32>
    %cst_29 = arith.constant dense<0xFF800000> : vector<8xf32>
    %85 = vector.multi_reduction <maximumf>, %84, %cst_29 [1] : vector<8x8xf32> to vector<8xf32>
    %cst_30 = arith.constant 0xFF800000 : f32
    %86 = vector.broadcast %cst_30 : f32 to vector<8xf32>
    %87 = arith.maximumf %86, %85 : vector<8xf32>
    %88 = vector.shape_cast %87 : vector<8xf32> to vector<8x1xf32>
    %89 = vector.broadcast %88 : vector<8x1xf32> to vector<8x8xf32>
    %90 = arith.subf %84, %89 : vector<8x8xf32>
    %91 = math.exp %90 : vector<8x8xf32>
    %cst_31 = arith.constant dense<0.000000e+00> : vector<8xf32>
    %92 = vector.multi_reduction <add>, %91, %cst_31 [1] : vector<8x8xf32> to vector<8xf32>
    %93 = vector.shape_cast %92 : vector<8xf32> to vector<8x1xf32>
    %94 = vector.broadcast %93 : vector<8x1xf32> to vector<8x8xf32>
    %95 = arith.divf %91, %94 : vector<8x8xf32>
    %96 = vector.extract_strided_slice %33 {offsets = [0, 8], sizes = [8, 8], strides = [1, 1]} : vector<8x32xf32> to vector<8x8xf32>
    %cst_32 = arith.constant dense<0.000000e+00> : vector<8xf32>
    %97 = vector.multi_reduction <add>, %95, %cst_32 [0] : vector<8x8xf32> to vector<8xf32>
    %98 = vector.shape_cast %97 : vector<8xf32> to vector<1x8xf32>
    %99 = vector.broadcast %98 : vector<1x8xf32> to vector<8x8xf32>
    %100 = arith.mulf %83, %99 : vector<8x8xf32>
    %cst_33 = arith.constant dense<0.000000e+00> : vector<8xf32>
    %101 = vector.multi_reduction <add>, %100, %cst_33 [1] : vector<8x8xf32> to vector<8xf32>
    %102 = vector.shape_cast %101 : vector<8xf32> to vector<8x1xf32>
    %cst_34 = arith.constant 1.000000e+00 : f32
    %103 = vector.broadcast %cst_34 : f32 to vector<8x1xf32>
    %104 = arith.divf %103, %102 : vector<8x1xf32>
    %cst_35 = arith.constant dense<0.000000e+00> : vector<8x8xf32>
    %105 = tpu.matmul %95, %96, %cst_35 {dimension_numbers = #tpu.dot_dimension_numbers<[0], [0], [1], [1], [0, 1, 1, 1], [], []>} : vector<8x8xf32>, vector<8x8xf32>, vector<8x8xf32> -> vector<8x8xf32>
    %cst_36 = arith.constant dense<0.000000e+00> : vector<8x8xf32>
    %106 = tpu.matmul %83, %105, %cst_36 {dimension_numbers = #tpu.dot_dimension_numbers<[1], [0], [0], [1], [0, 0, 1, 1], [], []>} : vector<8x8xf32>, vector<8x8xf32>, vector<8x8xf32> -> vector<8x8xf32>
    %107 = vector.broadcast %104 : vector<8x1xf32> to vector<8x8xf32>
    %108 = arith.mulf %106, %107 : vector<8x8xf32>
    %109 = arith.addf %83, %108 : vector<8x8xf32>
    %110 = vector.extract_strided_slice %31 {offsets = [0, 16], sizes = [8, 8], strides = [1, 1]} : vector<8x32xf32> to vector<8x8xf32>
    %cst_37 = arith.constant dense<0xFF800000> : vector<8xf32>
    %111 = vector.multi_reduction <maximumf>, %110, %cst_37 [1] : vector<8x8xf32> to vector<8xf32>
    %cst_38 = arith.constant 0xFF800000 : f32
    %112 = vector.broadcast %cst_38 : f32 to vector<8xf32>
    %113 = arith.maximumf %112, %111 : vector<8xf32>
    %114 = vector.shape_cast %113 : vector<8xf32> to vector<8x1xf32>
    %115 = vector.broadcast %114 : vector<8x1xf32> to vector<8x8xf32>
    %116 = arith.subf %110, %115 : vector<8x8xf32>
    %117 = math.exp %116 : vector<8x8xf32>
    %cst_39 = arith.constant dense<0.000000e+00> : vector<8xf32>
    %118 = vector.multi_reduction <add>, %117, %cst_39 [1] : vector<8x8xf32> to vector<8xf32>
    %119 = vector.shape_cast %118 : vector<8xf32> to vector<8x1xf32>
    %120 = vector.broadcast %119 : vector<8x1xf32> to vector<8x8xf32>
    %121 = arith.divf %117, %120 : vector<8x8xf32>
    %122 = vector.extract_strided_slice %32 {offsets = [0, 16], sizes = [8, 8], strides = [1, 1]} : vector<8x32xf32> to vector<8x8xf32>
    %cst_40 = arith.constant dense<0xFF800000> : vector<8xf32>
    %123 = vector.multi_reduction <maximumf>, %122, %cst_40 [1] : vector<8x8xf32> to vector<8xf32>
    %cst_41 = arith.constant 0xFF800000 : f32
    %124 = vector.broadcast %cst_41 : f32 to vector<8xf32>
    %125 = arith.maximumf %124, %123 : vector<8xf32>
    %126 = vector.shape_cast %125 : vector<8xf32> to vector<8x1xf32>
    %127 = vector.broadcast %126 : vector<8x1xf32> to vector<8x8xf32>
    %128 = arith.subf %122, %127 : vector<8x8xf32>
    %129 = math.exp %128 : vector<8x8xf32>
    %cst_42 = arith.constant dense<0.000000e+00> : vector<8xf32>
    %130 = vector.multi_reduction <add>, %129, %cst_42 [1] : vector<8x8xf32> to vector<8xf32>
    %131 = vector.shape_cast %130 : vector<8xf32> to vector<8x1xf32>
    %132 = vector.broadcast %131 : vector<8x1xf32> to vector<8x8xf32>
    %133 = arith.divf %129, %132 : vector<8x8xf32>
    %134 = vector.extract_strided_slice %33 {offsets = [0, 16], sizes = [8, 8], strides = [1, 1]} : vector<8x32xf32> to vector<8x8xf32>
    %cst_43 = arith.constant dense<0.000000e+00> : vector<8xf32>
    %135 = vector.multi_reduction <add>, %133, %cst_43 [0] : vector<8x8xf32> to vector<8xf32>
    %136 = vector.shape_cast %135 : vector<8xf32> to vector<1x8xf32>
    %137 = vector.broadcast %136 : vector<1x8xf32> to vector<8x8xf32>
    %138 = arith.mulf %121, %137 : vector<8x8xf32>
    %cst_44 = arith.constant dense<0.000000e+00> : vector<8xf32>
    %139 = vector.multi_reduction <add>, %138, %cst_44 [1] : vector<8x8xf32> to vector<8xf32>
    %140 = vector.shape_cast %139 : vector<8xf32> to vector<8x1xf32>
    %cst_45 = arith.constant 1.000000e+00 : f32
    %141 = vector.broadcast %cst_45 : f32 to vector<8x1xf32>
    %142 = arith.divf %141, %140 : vector<8x1xf32>
    %cst_46 = arith.constant dense<0.000000e+00> : vector<8x8xf32>
    %143 = tpu.matmul %133, %134, %cst_46 {dimension_numbers = #tpu.dot_dimension_numbers<[0], [0], [1], [1], [0, 1, 1, 1], [], []>} : vector<8x8xf32>, vector<8x8xf32>, vector<8x8xf32> -> vector<8x8xf32>
    %cst_47 = arith.constant dense<0.000000e+00> : vector<8x8xf32>
    %144 = tpu.matmul %121, %143, %cst_47 {dimension_numbers = #tpu.dot_dimension_numbers<[1], [0], [0], [1], [0, 0, 1, 1], [], []>} : vector<8x8xf32>, vector<8x8xf32>, vector<8x8xf32> -> vector<8x8xf32>
    %145 = vector.broadcast %142 : vector<8x1xf32> to vector<8x8xf32>
    %146 = arith.mulf %144, %145 : vector<8x8xf32>
    %147 = arith.addf %121, %146 : vector<8x8xf32>
    %148 = vector.extract_strided_slice %31 {offsets = [0, 24], sizes = [8, 8], strides = [1, 1]} : vector<8x32xf32> to vector<8x8xf32>
    %cst_48 = arith.constant dense<0xFF800000> : vector<8xf32>
    %149 = vector.multi_reduction <maximumf>, %148, %cst_48 [1] : vector<8x8xf32> to vector<8xf32>
    %cst_49 = arith.constant 0xFF800000 : f32
    %150 = vector.broadcast %cst_49 : f32 to vector<8xf32>
    %151 = arith.maximumf %150, %149 : vector<8xf32>
    %152 = vector.shape_cast %151 : vector<8xf32> to vector<8x1xf32>
    %153 = vector.broadcast %152 : vector<8x1xf32> to vector<8x8xf32>
    %154 = arith.subf %148, %153 : vector<8x8xf32>
    %155 = math.exp %154 : vector<8x8xf32>
    %cst_50 = arith.constant dense<0.000000e+00> : vector<8xf32>
    %156 = vector.multi_reduction <add>, %155, %cst_50 [1] : vector<8x8xf32> to vector<8xf32>
    %157 = vector.shape_cast %156 : vector<8xf32> to vector<8x1xf32>
    %158 = vector.broadcast %157 : vector<8x1xf32> to vector<8x8xf32>
    %159 = arith.divf %155, %158 : vector<8x8xf32>
    %160 = vector.extract_strided_slice %32 {offsets = [0, 24], sizes = [8, 8], strides = [1, 1]} : vector<8x32xf32> to vector<8x8xf32>
    %cst_51 = arith.constant dense<0xFF800000> : vector<8xf32>
    %161 = vector.multi_reduction <maximumf>, %160, %cst_51 [1] : vector<8x8xf32> to vector<8xf32>
    %cst_52 = arith.constant 0xFF800000 : f32
    %162 = vector.broadcast %cst_52 : f32 to vector<8xf32>
    %163 = arith.maximumf %162, %161 : vector<8xf32>
    %164 = vector.shape_cast %163 : vector<8xf32> to vector<8x1xf32>
    %165 = vector.broadcast %164 : vector<8x1xf32> to vector<8x8xf32>
    %166 = arith.subf %160, %165 : vector<8x8xf32>
    %167 = math.exp %166 : vector<8x8xf32>
    %cst_53 = arith.constant dense<0.000000e+00> : vector<8xf32>
    %168 = vector.multi_reduction <add>, %167, %cst_53 [1] : vector<8x8xf32> to vector<8xf32>
    %169 = vector.shape_cast %168 : vector<8xf32> to vector<8x1xf32>
    %170 = vector.broadcast %169 : vector<8x1xf32> to vector<8x8xf32>
    %171 = arith.divf %167, %170 : vector<8x8xf32>
    %172 = vector.extract_strided_slice %33 {offsets = [0, 24], sizes = [8, 8], strides = [1, 1]} : vector<8x32xf32> to vector<8x8xf32>
    %cst_54 = arith.constant dense<0.000000e+00> : vector<8xf32>
    %173 = vector.multi_reduction <add>, %171, %cst_54 [0] : vector<8x8xf32> to vector<8xf32>
    %174 = vector.shape_cast %173 : vector<8xf32> to vector<1x8xf32>
    %175 = vector.broadcast %174 : vector<1x8xf32> to vector<8x8xf32>
    %176 = arith.mulf %159, %175 : vector<8x8xf32>
    %cst_55 = arith.constant dense<0.000000e+00> : vector<8xf32>
    %177 = vector.multi_reduction <add>, %176, %cst_55 [1] : vector<8x8xf32> to vector<8xf32>
    %178 = vector.shape_cast %177 : vector<8xf32> to vector<8x1xf32>
    %cst_56 = arith.constant 1.000000e+00 : f32
    %179 = vector.broadcast %cst_56 : f32 to vector<8x1xf32>
    %180 = arith.divf %179, %178 : vector<8x1xf32>
    %cst_57 = arith.constant dense<0.000000e+00> : vector<8x8xf32>
    %181 = tpu.matmul %171, %172, %cst_57 {dimension_numbers = #tpu.dot_dimension_numbers<[0], [0], [1], [1], [0, 1, 1, 1], [], []>} : vector<8x8xf32>, vector<8x8xf32>, vector<8x8xf32> -> vector<8x8xf32>
    %cst_58 = arith.constant dense<0.000000e+00> : vector<8x8xf32>
    %182 = tpu.matmul %159, %181, %cst_58 {dimension_numbers = #tpu.dot_dimension_numbers<[1], [0], [0], [1], [0, 0, 1, 1], [], []>} : vector<8x8xf32>, vector<8x8xf32>, vector<8x8xf32> -> vector<8x8xf32>
    %183 = vector.broadcast %180 : vector<8x1xf32> to vector<8x8xf32>
    %184 = arith.mulf %182, %183 : vector<8x8xf32>
    %185 = arith.addf %159, %184 : vector<8x8xf32>
    %186 = tpu.concatenate %71, %109, %147, %185 in 1 : vector<8x8xf32>, vector<8x8xf32>, vector<8x8xf32>, vector<8x8xf32> -> vector<8x32xf32>
    %c0_59 = arith.constant 0 : index
    %c0_60 = arith.constant 0 : index
    %187 = vector.load %arg6[%c0_59, %c0_60] : memref<32x32xf32, #tpu.memory_space<vmem>>, vector<32x32xf32>
    %cst_61 = arith.constant dense<0.000000e+00> : vector<8x32xf32>
    %188 = tpu.matmul %186, %187, %cst_61 {dimension_numbers = #tpu.dot_dimension_numbers<[1], [0], [0], [1], [0, 0, 1, 1], [], []>} : vector<8x32xf32>, vector<32x32xf32>, vector<8x32xf32> -> vector<8x32xf32>
    %189 = arith.addf %1, %188 : vector<8x32xf32>
    %c0_62 = arith.constant 0 : index
    %c0_63 = arith.constant 0 : index
    %190 = vector.load %arg7[%c0_62, %c0_63] : memref<1x32xf32, #tpu.memory_space<vmem>>, vector<1x32xf32>
    %191 = vector.broadcast %190 : vector<1x32xf32> to vector<8x32xf32>
    %192 = arith.addf %189, %191 : vector<8x32xf32>
    %c0_64 = arith.constant 0 : index
    %c0_65 = arith.constant 0 : index
    %193 = vector.load %arg8[%c0_64, %c0_65] : memref<1x32xf32, #tpu.memory_space<vmem>>, vector<1x32xf32>
    %c0_66 = arith.constant 0 : index
    %c0_67 = arith.constant 0 : index
    %194 = vector.load %arg9[%c0_66, %c0_67] : memref<1x32xf32, #tpu.memory_space<vmem>>, vector<1x32xf32>
    %cst_68 = arith.constant dense<0.000000e+00> : vector<8xf32>
    %195 = vector.multi_reduction <add>, %192, %cst_68 [1] : vector<8x32xf32> to vector<8xf32>
    %196 = vector.shape_cast %195 : vector<8xf32> to vector<8x1xf32>
    %cst_69 = arith.constant 3.200000e+01 : f32
    %197 = vector.broadcast %cst_69 : f32 to vector<8x1xf32>
    %198 = arith.divf %196, %197 : vector<8x1xf32>
    %199 = vector.broadcast %198 : vector<8x1xf32> to vector<8x32xf32>
    %200 = arith.subf %192, %199 : vector<8x32xf32>
    %201 = arith.mulf %200, %200 : vector<8x32xf32>
    %cst_70 = arith.constant dense<0.000000e+00> : vector<8xf32>
    %202 = vector.multi_reduction <add>, %201, %cst_70 [1] : vector<8x32xf32> to vector<8xf32>
    %203 = vector.shape_cast %202 : vector<8xf32> to vector<8x1xf32>
    %cst_71 = arith.constant 3.200000e+01 : f32
    %204 = vector.broadcast %cst_71 : f32 to vector<8x1xf32>
    %205 = arith.divf %203, %204 : vector<8x1xf32>
    %206 = vector.broadcast %198 : vector<8x1xf32> to vector<8x32xf32>
    %207 = arith.subf %192, %206 : vector<8x32xf32>
    %cst_72 = arith.constant 9.99999974E-6 : f32
    %208 = vector.broadcast %cst_72 : f32 to vector<8x1xf32>
    %209 = arith.addf %205, %208 : vector<8x1xf32>
    %210 = math.rsqrt %209 : vector<8x1xf32>
    %211 = vector.broadcast %210 : vector<8x1xf32> to vector<8x32xf32>
    %212 = arith.mulf %207, %211 : vector<8x32xf32>
    %213 = vector.broadcast %193 : vector<1x32xf32> to vector<8x32xf32>
    %214 = arith.mulf %212, %213 : vector<8x32xf32>
    %215 = vector.broadcast %194 : vector<1x32xf32> to vector<8x32xf32>
    %216 = arith.addf %214, %215 : vector<8x32xf32>
    %c0_73 = arith.constant 0 : index
    %c0_74 = arith.constant 0 : index
    %217 = vector.load %arg10[%c0_73, %c0_74] : memref<32x64xf32, #tpu.memory_space<vmem>>, vector<32x64xf32>
    %cst_75 = arith.constant dense<0.000000e+00> : vector<8x64xf32>
    %218 = tpu.matmul %216, %217, %cst_75 {dimension_numbers = #tpu.dot_dimension_numbers<[1], [0], [0], [1], [0, 0, 1, 1], [], []>} : vector<8x32xf32>, vector<32x64xf32>, vector<8x64xf32> -> vector<8x64xf32>
    %c0_76 = arith.constant 0 : index
    %c0_77 = arith.constant 0 : index
    %219 = vector.load %arg11[%c0_76, %c0_77] : memref<1x64xf32, #tpu.memory_space<vmem>>, vector<1x64xf32>
    %220 = vector.broadcast %219 : vector<1x64xf32> to vector<8x64xf32>
    %221 = arith.addf %218, %220 : vector<8x64xf32>
    %222 = math.tanh %221 : vector<8x64xf32>
    %c0_78 = arith.constant 0 : index
    %c0_79 = arith.constant 0 : index
    %223 = vector.load %arg12[%c0_78, %c0_79] : memref<64x32xf32, #tpu.memory_space<vmem>>, vector<64x32xf32>
    %cst_80 = arith.constant dense<0.000000e+00> : vector<8x32xf32>
    %224 = tpu.matmul %222, %223, %cst_80 {dimension_numbers = #tpu.dot_dimension_numbers<[1], [0], [0], [1], [0, 0, 1, 1], [], []>} : vector<8x64xf32>, vector<64x32xf32>, vector<8x32xf32> -> vector<8x32xf32>
    %c0_81 = arith.constant 0 : index
    %c0_82 = arith.constant 0 : index
    %225 = vector.load %arg13[%c0_81, %c0_82] : memref<1x32xf32, #tpu.memory_space<vmem>>, vector<1x32xf32>
    %226 = vector.broadcast %225 : vector<1x32xf32> to vector<8x32xf32>
    %227 = arith.addf %224, %226 : vector<8x32xf32>
    %228 = arith.addf %192, %227 : vector<8x32xf32>
    %c0_83 = arith.constant 0 : index
    %c0_84 = arith.constant 0 : index
    %c0_85 = arith.constant 0 : index
    %229 = vector.load %arg14[%c0_83, %c0_84, %c0_85] : memref<1x8x32xf32, #tpu.memory_space<vmem>>, vector<1x8x32xf32>
    %230 = vector.shape_cast %229 : vector<1x8x32xf32> to vector<8x32xf32>
    %231 = vector.shape_cast %228 : vector<8x32xf32> to vector<1x8x32xf32>
    tpu.vector_store %arg14[%c0_83, %c0_84, %c0_85], %231 {strides = array<i32>} : memref<1x8x32xf32, #tpu.memory_space<vmem>>, vector<1x8x32xf32>,
    return
  }
  func.func @transform_0(%arg0: i32) -> (i32, i32, i32) {
    %c0_i32 = arith.constant 0 : i32
    %c0_i32_0 = arith.constant 0 : i32
    %c0_i32_1 = arith.constant 0 : i32
    return %arg0, %c0_i32, %c0_i32_0 : i32, i32, i32
  }
  func.func @transform_1(%arg0: i32) -> (i32, i32) {
    %c0_i32 = arith.constant 0 : i32
    %c0_i32_0 = arith.constant 0 : i32
    %c0_i32_1 = arith.constant 0 : i32
    return %c0_i32, %c0_i32_0 : i32, i32
  }
  func.func @transform_2(%arg0: i32) -> (i32, i32) {
    %c0_i32 = arith.constant 0 : i32
    %c0_i32_0 = arith.constant 0 : i32
    %c0_i32_1 = arith.constant 0 : i32
    return %c0_i32, %c0_i32_0 : i32, i32
  }
  func.func @transform_3(%arg0: i32) -> (i32, i32) {
    %c0_i32 = arith.constant 0 : i32
    %c0_i32_0 = arith.constant 0 : i32
    %c0_i32_1 = arith.constant 0 : i32
    return %c0_i32, %c0_i32_0 : i32, i32
  }
  func.func @transform_4(%arg0: i32) -> (i32, i32) {
    %c0_i32 = arith.constant 0 : i32
    %c0_i32_0 = arith.constant 0 : i32
    %c0_i32_1 = arith.constant 0 : i32
    return %c0_i32, %c0_i32_0 : i32, i32
  }
  func.func @transform_5(%arg0: i32) -> (i32, i32) {
    %c0_i32 = arith.constant 0 : i32
    %c0_i32_0 = arith.constant 0 : i32
    %c0_i32_1 = arith.constant 0 : i32
    return %c0_i32, %c0_i32_0 : i32, i32
  }
  func.func @transform_6(%arg0: i32) -> (i32, i32) {
    %c0_i32 = arith.constant 0 : i32
    %c0_i32_0 = arith.constant 0 : i32
    %c0_i32_1 = arith.constant 0 : i32
    return %c0_i32, %c0_i32_0 : i32, i32
  }
  func.func @transform_7(%arg0: i32) -> (i32, i32) {
    %c0_i32 = arith.constant 0 : i32
    %c0_i32_0 = arith.constant 0 : i32
    %c0_i32_1 = arith.constant 0 : i32
    return %c0_i32, %c0_i32_0 : i32, i32
  }
  func.func @transform_8(%arg0: i32) -> (i32, i32) {
    %c0_i32 = arith.constant 0 : i32
    %c0_i32_0 = arith.constant 0 : i32
    %c0_i32_1 = arith.constant 0 : i32
    return %c0_i32, %c0_i32_0 : i32, i32
  }
  func.func @transform_9(%arg0: i32) -> (i32, i32) {
    %c0_i32 = arith.constant 0 : i32
    %c0_i32_0 = arith.constant 0 : i32
    %c0_i32_1 = arith.constant 0 : i32
    return %c0_i32, %c0_i32_0 : i32, i32
  }
  func.func @transform_10(%arg0: i32) -> (i32, i32) {
    %c0_i32 = arith.constant 0 : i32
    %c0_i32_0 = arith.constant 0 : i32
    %c0_i32_1 = arith.constant 0 : i32
    return %c0_i32, %c0_i32_0 : i32, i32
  }
  func.func @transform_11(%arg0: i32) -> (i32, i32) {
    %c0_i32 = arith.constant 0 : i32
    %c0_i32_0 = arith.constant 0 : i32
    %c0_i32_1 = arith.constant 0 : i32
    return %c0_i32, %c0_i32_0 : i32, i32
  }
  func.func @transform_12(%arg0: i32) -> (i32, i32) {
    %c0_i32 = arith.constant 0 : i32
    %c0_i32_0 = arith.constant 0 : i32
    %c0_i32_1 = arith.constant 0 : i32
    return %c0_i32, %c0_i32_0 : i32, i32
  }
  func.func @transform_13(%arg0: i32) -> (i32, i32, i32) {
    %c0_i32 = arith.constant 0 : i32
    %c0_i32_0 = arith.constant 0 : i32
    %c0_i32_1 = arith.constant 0 : i32
    return %arg0, %c0_i32, %c0_i32_0 : i32, i32, i32
  }
}

module attributes {stable_mosaic.version = 11 : i64} {
  func.func @_decode_out_kernel(%arg0: i32, %arg1: i32, %arg2: memref<1x16x8xf32, #tpu.memory_space<vmem>>, %arg3: memref<1x8x32xf32, #tpu.memory_space<vmem>>, %arg4: memref<32x32xf32, #tpu.memory_space<vmem>>, %arg5: memref<1x32xf32, #tpu.memory_space<vmem>>, %arg6: memref<32x32xf32, #tpu.memory_space<vmem>>, %arg7: memref<1x32xf32, #tpu.memory_space<vmem>>, %arg8: memref<2x32x32xf32, #tpu.memory_space<vmem>>, %arg9: memref<2x1x32xf32, #tpu.memory_space<vmem>>, %arg10: memref<32x1xf32, #tpu.memory_space<vmem>>, %arg11: memref<1x1xf32, #tpu.memory_space<vmem>>, %arg12: memref<1x16x1xf32, #tpu.memory_space<vmem>>) attributes {dimension_semantics = [#tpu.dimension_semantics<parallel>, #tpu.dimension_semantics<parallel>], iteration_bounds = array<i64: 2, 1>, scalar_prefetch = 0 : i64, scratch_operands = 0 : i64, tpu.core_type = #tpu.core_type<tc>, window_params = [{transform_indices = @transform_0, window_bounds = array<i64: 1, 16, 8>}, {transform_indices = @transform_1, window_bounds = array<i64: 1, 8, 32>}, {pipeline_mode = #tpu.pipeline_mode<synchronous>, transform_indices = @transform_2, window_bounds = array<i64: 32, 32>}, {pipeline_mode = #tpu.pipeline_mode<synchronous>, transform_indices = @transform_3, window_bounds = array<i64: 1, 32>}, {pipeline_mode = #tpu.pipeline_mode<synchronous>, transform_indices = @transform_4, window_bounds = array<i64: 32, 32>}, {pipeline_mode = #tpu.pipeline_mode<synchronous>, transform_indices = @transform_5, window_bounds = array<i64: 1, 32>}, {pipeline_mode = #tpu.pipeline_mode<synchronous>, transform_indices = @transform_6, window_bounds = array<i64: 2, 32, 32>}, {pipeline_mode = #tpu.pipeline_mode<synchronous>, transform_indices = @transform_7, window_bounds = array<i64: 2, 1, 32>}, {pipeline_mode = #tpu.pipeline_mode<synchronous>, transform_indices = @transform_8, window_bounds = array<i64: 32, 1>}, {pipeline_mode = #tpu.pipeline_mode<synchronous>, transform_indices = @transform_9, window_bounds = array<i64: 1, 1>}, {transform_indices = @transform_10, window_bounds = array<i64: 1, 16, 1>}]} {
    %c0 = arith.constant 0 : index
    %c0_0 = arith.constant 0 : index
    %c0_1 = arith.constant 0 : index
    %0 = vector.load %arg3[%c0, %c0_0, %c0_1] : memref<1x8x32xf32, #tpu.memory_space<vmem>>, vector<1x8x32xf32>
    %1 = vector.shape_cast %0 : vector<1x8x32xf32> to vector<8x32xf32>
    %c0_2 = arith.constant 0 : index
    %c0_3 = arith.constant 0 : index
    %2 = vector.load %arg4[%c0_2, %c0_3] : memref<32x32xf32, #tpu.memory_space<vmem>>, vector<32x32xf32>
    %cst = arith.constant dense<0.000000e+00> : vector<8x32xf32>
    %3 = tpu.matmul %1, %2, %cst {dimension_numbers = #tpu.dot_dimension_numbers<[1], [0], [0], [1], [0, 0, 1, 1], [], []>} : vector<8x32xf32>, vector<32x32xf32>, vector<8x32xf32> -> vector<8x32xf32>
    %c0_4 = arith.constant 0 : index
    %c0_5 = arith.constant 0 : index
    %4 = vector.load %arg5[%c0_4, %c0_5] : memref<1x32xf32, #tpu.memory_space<vmem>>, vector<1x32xf32>
    %5 = vector.broadcast %4 : vector<1x32xf32> to vector<8x32xf32>
    %6 = arith.addf %3, %5 : vector<8x32xf32>
    %c0_6 = arith.constant 0 : index
    %c0_7 = arith.constant 0 : index
    %c0_8 = arith.constant 0 : index
    %7 = vector.load %arg2[%c0_6, %c0_7, %c0_8] : memref<1x16x8xf32, #tpu.memory_space<vmem>>, vector<1x16x8xf32>
    %8 = vector.shape_cast %7 : vector<1x16x8xf32> to vector<16x8xf32>
    %cst_9 = arith.constant dense<0xFF800000> : vector<16xf32>
    %9 = vector.multi_reduction <maximumf>, %8, %cst_9 [1] : vector<16x8xf32> to vector<16xf32>
    %cst_10 = arith.constant 0xFF800000 : f32
    %10 = vector.broadcast %cst_10 : f32 to vector<16xf32>
    %11 = arith.maximumf %10, %9 : vector<16xf32>
    %12 = vector.shape_cast %11 : vector<16xf32> to vector<16x1xf32>
    %13 = vector.broadcast %12 : vector<16x1xf32> to vector<16x8xf32>
    %14 = arith.subf %8, %13 : vector<16x8xf32>
    %15 = math.exp %14 : vector<16x8xf32>
    %cst_11 = arith.constant dense<0.000000e+00> : vector<16xf32>
    %16 = vector.multi_reduction <add>, %15, %cst_11 [1] : vector<16x8xf32> to vector<16xf32>
    %17 = vector.shape_cast %16 : vector<16xf32> to vector<16x1xf32>
    %18 = vector.broadcast %17 : vector<16x1xf32> to vector<16x8xf32>
    %19 = arith.divf %15, %18 : vector<16x8xf32>
    %cst_12 = arith.constant dense<0.000000e+00> : vector<16x32xf32>
    %20 = tpu.matmul %19, %6, %cst_12 {dimension_numbers = #tpu.dot_dimension_numbers<[1], [0], [0], [1], [0, 0, 1, 1], [], []>} : vector<16x8xf32>, vector<8x32xf32>, vector<16x32xf32> -> vector<16x32xf32>
    %c0_13 = arith.constant 0 : index
    %c0_14 = arith.constant 0 : index
    %21 = vector.load %arg6[%c0_13, %c0_14] : memref<32x32xf32, #tpu.memory_space<vmem>>, vector<32x32xf32>
    %cst_15 = arith.constant dense<0.000000e+00> : vector<16x32xf32>
    %22 = tpu.matmul %20, %21, %cst_15 {dimension_numbers = #tpu.dot_dimension_numbers<[1], [0], [0], [1], [0, 0, 1, 1], [], []>} : vector<16x32xf32>, vector<32x32xf32>, vector<16x32xf32> -> vector<16x32xf32>
    %c0_16 = arith.constant 0 : index
    %c0_17 = arith.constant 0 : index
    %23 = vector.load %arg7[%c0_16, %c0_17] : memref<1x32xf32, #tpu.memory_space<vmem>>, vector<1x32xf32>
    %24 = vector.broadcast %23 : vector<1x32xf32> to vector<16x32xf32>
    %25 = arith.addf %22, %24 : vector<16x32xf32>
    %26 = math.tanh %25 : vector<16x32xf32>
    %c0_18 = arith.constant 0 : index
    %c0_19 = arith.constant 0 : index
    %c0_20 = arith.constant 0 : index
    %27 = vector.load %arg8[%c0_18, %c0_19, %c0_20] : memref<2x32x32xf32, #tpu.memory_space<vmem>>, vector<1x32x32xf32>
    %28 = vector.shape_cast %27 : vector<1x32x32xf32> to vector<32x32xf32>
    %cst_21 = arith.constant dense<0.000000e+00> : vector<16x32xf32>
    %29 = tpu.matmul %26, %28, %cst_21 {dimension_numbers = #tpu.dot_dimension_numbers<[1], [0], [0], [1], [0, 0, 1, 1], [], []>} : vector<16x32xf32>, vector<32x32xf32>, vector<16x32xf32> -> vector<16x32xf32>
    %c0_22 = arith.constant 0 : index
    %c0_23 = arith.constant 0 : index
    %c0_24 = arith.constant 0 : index
    %30 = vector.load %arg9[%c0_22, %c0_23, %c0_24] : memref<2x1x32xf32, #tpu.memory_space<vmem>>, vector<1x1x32xf32>
    %31 = vector.shape_cast %30 : vector<1x1x32xf32> to vector<1x32xf32>
    %32 = vector.broadcast %31 : vector<1x32xf32> to vector<16x32xf32>
    %33 = arith.addf %29, %32 : vector<16x32xf32>
    %34 = math.tanh %33 : vector<16x32xf32>
    %35 = arith.addf %26, %34 : vector<16x32xf32>
    %c1 = arith.constant 1 : index
    %c0_25 = arith.constant 0 : index
    %c0_26 = arith.constant 0 : index
    %36 = vector.load %arg8[%c1, %c0_25, %c0_26] : memref<2x32x32xf32, #tpu.memory_space<vmem>>, vector<1x32x32xf32>
    %37 = vector.shape_cast %36 : vector<1x32x32xf32> to vector<32x32xf32>
    %cst_27 = arith.constant dense<0.000000e+00> : vector<16x32xf32>
    %38 = tpu.matmul %35, %37, %cst_27 {dimension_numbers = #tpu.dot_dimension_numbers<[1], [0], [0], [1], [0, 0, 1, 1], [], []>} : vector<16x32xf32>, vector<32x32xf32>, vector<16x32xf32> -> vector<16x32xf32>
    %c1_28 = arith.constant 1 : index
    %c0_29 = arith.constant 0 : index
    %c0_30 = arith.constant 0 : index
    %39 = vector.load %arg9[%c1_28, %c0_29, %c0_30] : memref<2x1x32xf32, #tpu.memory_space<vmem>>, vector<1x1x32xf32>
    %40 = vector.shape_cast %39 : vector<1x1x32xf32> to vector<1x32xf32>
    %41 = vector.broadcast %40 : vector<1x32xf32> to vector<16x32xf32>
    %42 = arith.addf %38, %41 : vector<16x32xf32>
    %43 = math.tanh %42 : vector<16x32xf32>
    %44 = arith.addf %35, %43 : vector<16x32xf32>
    %c0_31 = arith.constant 0 : index
    %c0_32 = arith.constant 0 : index
    %45 = vector.load %arg10[%c0_31, %c0_32] : memref<32x1xf32, #tpu.memory_space<vmem>>, vector<32x1xf32>
    %cst_33 = arith.constant dense<0.000000e+00> : vector<16x1xf32>
    %46 = tpu.matmul %44, %45, %cst_33 {dimension_numbers = #tpu.dot_dimension_numbers<[1], [0], [0], [1], [0, 0, 1, 1], [], []>} : vector<16x32xf32>, vector<32x1xf32>, vector<16x1xf32> -> vector<16x1xf32>
    %c0_34 = arith.constant 0 : index
    %c0_35 = arith.constant 0 : index
    %47 = vector.load %arg11[%c0_34, %c0_35] : memref<1x1xf32, #tpu.memory_space<vmem>>, vector<1x1xf32>
    %48 = vector.broadcast %47 : vector<1x1xf32> to vector<16x1xf32>
    %49 = arith.addf %46, %48 : vector<16x1xf32>
    %c0_36 = arith.constant 0 : index
    %c0_37 = arith.constant 0 : index
    %c0_38 = arith.constant 0 : index
    %50 = vector.load %arg12[%c0_36, %c0_37, %c0_38] : memref<1x16x1xf32, #tpu.memory_space<vmem>>, vector<1x16x1xf32>
    %51 = vector.shape_cast %50 : vector<1x16x1xf32> to vector<16x1xf32>
    %52 = vector.shape_cast %49 : vector<16x1xf32> to vector<1x16x1xf32>
    tpu.vector_store %arg12[%c0_36, %c0_37, %c0_38], %52 {strides = array<i32>} : memref<1x16x1xf32, #tpu.memory_space<vmem>>, vector<1x16x1xf32>,
    return
  }
  func.func @transform_0(%arg0: i32, %arg1: i32) -> (i32, i32, i32) {
    %c0_i32 = arith.constant 0 : i32
    %c0_i32_0 = arith.constant 0 : i32
    return %arg0, %arg1, %c0_i32 : i32, i32, i32
  }
  func.func @transform_1(%arg0: i32, %arg1: i32) -> (i32, i32, i32) {
    %c0_i32 = arith.constant 0 : i32
    %c0_i32_0 = arith.constant 0 : i32
    %c0_i32_1 = arith.constant 0 : i32
    return %arg0, %c0_i32, %c0_i32_0 : i32, i32, i32
  }
  func.func @transform_2(%arg0: i32, %arg1: i32) -> (i32, i32) {
    %c0_i32 = arith.constant 0 : i32
    %c0_i32_0 = arith.constant 0 : i32
    %c0_i32_1 = arith.constant 0 : i32
    return %c0_i32, %c0_i32_0 : i32, i32
  }
  func.func @transform_3(%arg0: i32, %arg1: i32) -> (i32, i32) {
    %c0_i32 = arith.constant 0 : i32
    %c0_i32_0 = arith.constant 0 : i32
    %c0_i32_1 = arith.constant 0 : i32
    return %c0_i32, %c0_i32_0 : i32, i32
  }
  func.func @transform_4(%arg0: i32, %arg1: i32) -> (i32, i32) {
    %c0_i32 = arith.constant 0 : i32
    %c0_i32_0 = arith.constant 0 : i32
    %c0_i32_1 = arith.constant 0 : i32
    return %c0_i32, %c0_i32_0 : i32, i32
  }
  func.func @transform_5(%arg0: i32, %arg1: i32) -> (i32, i32) {
    %c0_i32 = arith.constant 0 : i32
    %c0_i32_0 = arith.constant 0 : i32
    %c0_i32_1 = arith.constant 0 : i32
    return %c0_i32, %c0_i32_0 : i32, i32
  }
  func.func @transform_6(%arg0: i32, %arg1: i32) -> (i32, i32, i32) {
    %c0_i32 = arith.constant 0 : i32
    %c0_i32_0 = arith.constant 0 : i32
    %c0_i32_1 = arith.constant 0 : i32
    %c0_i32_2 = arith.constant 0 : i32
    return %c0_i32, %c0_i32_0, %c0_i32_1 : i32, i32, i32
  }
  func.func @transform_7(%arg0: i32, %arg1: i32) -> (i32, i32, i32) {
    %c0_i32 = arith.constant 0 : i32
    %c0_i32_0 = arith.constant 0 : i32
    %c0_i32_1 = arith.constant 0 : i32
    %c0_i32_2 = arith.constant 0 : i32
    return %c0_i32, %c0_i32_0, %c0_i32_1 : i32, i32, i32
  }
  func.func @transform_8(%arg0: i32, %arg1: i32) -> (i32, i32) {
    %c0_i32 = arith.constant 0 : i32
    %c0_i32_0 = arith.constant 0 : i32
    %c0_i32_1 = arith.constant 0 : i32
    return %c0_i32, %c0_i32_0 : i32, i32
  }
  func.func @transform_9(%arg0: i32, %arg1: i32) -> (i32, i32) {
    %c0_i32 = arith.constant 0 : i32
    %c0_i32_0 = arith.constant 0 : i32
    %c0_i32_1 = arith.constant 0 : i32
    return %c0_i32, %c0_i32_0 : i32, i32
  }
  func.func @transform_10(%arg0: i32, %arg1: i32) -> (i32, i32, i32) {
    %c0_i32 = arith.constant 0 : i32
    %c0_i32_0 = arith.constant 0 : i32
    return %arg0, %arg1, %c0_i32 : i32, i32, i32
  }
}

</mosaic_0001>

<llo_original>
// kernel: _lambda_.10
$region0: #{_lambda_.10}
  #allocation0 [shape = 'u32[]', space=smem, size = 0x4, offset = 0x4, fixed_abs, tag = 'smem constant byte address 0x4 - core index']
  #allocation1 [shape = 'u32[72,128]{1,0:T(1,128)}', space=vmem, size = 0x9000, scoped, tag = 'internal scratch']
  %s0 = inlined_call_operand.vmem [shape: f32[2,12,8], index: 0, kind: input, shape index: {}]
  %s1 = inlined_call_operand.vmem [shape: f32[2,12,32], index: 1, kind: input, shape index: {}]
  %s2 = inlined_call_operand.vmem [shape: f32[32,32], index: 2, kind: input, shape index: {}]
  %s3 = inlined_call_operand.vmem [shape: f32[1,32], index: 3, kind: input, shape index: {}]
  %s4 = inlined_call_operand.vmem [shape: f32[2,8,32], index: 4, kind: output, shape index: {}]
  %s5 = sld [smem:[#allocation0]]
  $region49: #{_lambda_.10} parent=0
    _
  %s7 = ssub.s32 1, %s5
  %s8 = scalar_select 0, %s7, %s5
  loop: start=0, step=1, limit=4
  $region2: #{_lambda_.10} parent=0 // loop_pre_header
    _
  $region3: #{_lambda_.10} parent=0 // loop_header
    %s10 = sphi 0, %s14
    %p11 = scmp.ge.s32.totalorder %s10, 4
    %s20 = sphi 0, %s22
    %s23 = sphi 0, %s20
    %s24 = sphi 0, %s23
    %s40 = sphi 0, %s24
    %s46 = sphi 0, %s48
    %s49 = sphi 0, %s46
    %s50 = sphi 0, %s49
    %s66 = sphi 0, %s50
    %s70 = sphi 0, %s70
    %s72 = sphi 0, %s70
    %s73 = sphi 0, %s72
    %s87 = sphi 0, %s73
    %s91 = sphi 0, %s91
    %s93 = sphi 0, %s91
    %s94 = sphi 0, %s93
    %s108 = sphi 0, %s94
    %s114 = sphi 0, %s116
    %s117 = sphi 0, %s114
    %s118 = sphi 0, %s117
    %s134 = sphi 0, %s118
  $region4: #{_lambda_.10} parent=0 // loop_header_branch
    %13 = sbr.rel (%p11) target = $region8
  $region5: #{_lambda_.10} parent=0 // loop_body
    %s15 = ssub.s32 %s10, 1
    %s16 = ssub.s32 %s10, 2
    %s17 = sadd.s32 %s10, 1
    %s18 = ssub.s32 %s10, %s17
    %p19 = scmp.eq.s32.totalorder %s18, 0
    %s21 = sadd.s32 %s20, 1
    %s22 = scalar_select %p19, %s20, %s21
    %p25 = pneg %p19
    %p26 = scmp.eq.s32.totalorder %s10, 1
    %p27 = por %p25, %p26
    %p28 = scmp.ne.s32.totalorder %s20, %s23
    %p29 = scmp.eq.s32.totalorder %s10, 0
    %p30 = por %p28, %p29
    %p31 = scmp.ne.s32.totalorder %s20, %s23
    %p32 = scmp.eq.s32.totalorder %s15, 1
    %p33 = por %p31, %p32
    %p34 = scmp.ne.s32.totalorder %s23, %s24
    %p35 = scmp.eq.s32.totalorder %s15, 0
    %p36 = por %p34, %p35
    %p37 = scmp.ne.s32.totalorder %s23, %s24
    %p38 = scmp.eq.s32.totalorder %s16, 1
    %p39 = por %p37, %p38
    %p41 = scmp.ne.s32.totalorder %s24, %s40
    %p42 = scmp.eq.s32.totalorder %s16, 0
    %p43 = por %p41, %p42
    %s44 = ssub.s32 %s10, %s17
    %p45 = scmp.eq.s32.totalorder %s44, 0
    %s47 = sadd.s32 %s46, 1
    %s48 = scalar_select %p45, %s46, %s47
    %p51 = pneg %p45
    %p52 = scmp.eq.s32.totalorder %s10, 1
    %p53 = por %p51, %p52
    %p54 = scmp.ne.s32.totalorder %s46, %s49
    %p55 = scmp.eq.s32.totalorder %s10, 0
    %p56 = por %p54, %p55
    %p57 = scmp.ne.s32.totalorder %s46, %s49
    %p58 = scmp.eq.s32.totalorder %s15, 1
    %p59 = por %p57, %p58
    %p60 = scmp.ne.s32.totalorder %s49, %s50
    %p61 = scmp.eq.s32.totalorder %s15, 0
    %p62 = por %p60, %p61
    %p63 = scmp.ne.s32.totalorder %s49, %s50
    %p64 = scmp.eq.s32.totalorder %s16, 1
    %p65 = por %p63, %p64
    %p67 = scmp.ne.s32.totalorder %s50, %s66
    %p68 = scmp.eq.s32.totalorder %s16, 0
    %p69 = por %p67, %p68
    %s71 = sadd.s32 %s70, 1
    %p74 = scmp.eq.s32.totalorder %s10, 1
    %p75 = scmp.ne.s32.totalorder %s70, %s72
    %p76 = scmp.eq.s32.totalorder %s10, 0
    %p77 = por %p75, %p76
    %p78 = scmp.ne.s32.totalorder %s70, %s72
    %p79 = scmp.eq.s32.totalorder %s15, 1
    %p80 = por %p78, %p79
    %p81 = scmp.ne.s32.totalorder %s72, %s73
    %p82 = scmp.eq.s32.totalorder %s15, 0
    %p83 = por %p81, %p82
    %p84 = scmp.ne.s32.totalorder %s72, %s73
    %p85 = scmp.eq.s32.totalorder %s16, 1
    %p86 = por %p84, %p85
    %p88 = scmp.ne.s32.totalorder %s73, %s87
    %p89 = scmp.eq.s32.totalorder %s16, 0
    %p90 = por %p88, %p89
    %s92 = sadd.s32 %s91, 1
    %p95 = scmp.eq.s32.totalorder %s10, 1
    %p96 = scmp.ne.s32.totalorder %s91, %s93
    %p97 = scmp.eq.s32.totalorder %s10, 0
    %p98 = por %p96, %p97
    %p99 = scmp.ne.s32.totalorder %s91, %s93
    %p100 = scmp.eq.s32.totalorder %s15, 1
    %p101 = por %p99, %p100
    %p102 = scmp.ne.s32.totalorder %s93, %s94
    %p103 = scmp.eq.s32.totalorder %s15, 0
    %p104 = por %p102, %p103
    %p105 = scmp.ne.s32.totalorder %s93, %s94
    %p106 = scmp.eq.s32.totalorder %s16, 1
    %p107 = por %p105, %p106
    %p109 = scmp.ne.s32.totalorder %s94, %s108
    %p110 = scmp.eq.s32.totalorder %s16, 0
    %p111 = por %p109, %p110
    %s112 = ssub.s32 %s10, %s17
    %p113 = scmp.eq.s32.totalorder %s112, 0
    %s115 = sadd.s32 %s114, 1
    %s116 = scalar_select %p113, %s114, %s115
    %p119 = pneg %p113
    %p120 = scmp.eq.s32.totalorder %s10, 1
    %p121 = por %p119, %p120
    %p122 = scmp.ne.s32.totalorder %s114, %s117
    %p123 = scmp.eq.s32.totalorder %s10, 0
    %p124 = por %p122, %p123
    %p125 = scmp.ne.s32.totalorder %s114, %s117
    %p126 = scmp.eq.s32.totalorder %s15, 1
    %p127 = por %p125, %p126
    %p128 = scmp.ne.s32.totalorder %s117, %s118
    %p129 = scmp.eq.s32.totalorder %s15, 0
    %p130 = por %p128, %p129
    %p131 = scmp.ne.s32.totalorder %s117, %s118
    %p132 = scmp.eq.s32.totalorder %s16, 1
    %p133 = por %p131, %p132
    %p135 = scmp.ne.s32.totalorder %s118, %s134
    %p136 = scmp.eq.s32.totalorder %s16, 0
    %p137 = por %p135, %p136
    %p138 = scmp.le.s32.totalorder 1, %s10
    %p139 = scmp.lt.s32.totalorder %s10, 3
    %p140 = pnand %p138, %p139
    %p141 = pneg %p140
    // Predicated region
    $region9: #{_lambda_.10} parent=5 // pred_check
      _
    $region10: #{_lambda_.10} parent=5 // pred_check_branch
      %143 = sbr.rel (%p140) target = $region12
    $region11: #{_lambda_.10} parent=5 // pred_region
      %s144 = ssub.s32 %s10, 1
      // Predicated region
      $region13: #{_lambda_.10} parent=11 // pred_check
        %p145 = pneg %p83
      $region14: #{_lambda_.10} parent=11 // pred_check_branch
        %147 = sbr.rel (%p145) target = $region16
      $region15: #{_lambda_.10} parent=11 // pred_region
        _
      $region16: #{_lambda_.10} parent=11 // pred_fallthru
        _
      // Predicated region
      $region17: #{_lambda_.10} parent=11 // pred_check
        %p148 = pneg %p104
      $region18: #{_lambda_.10} parent=11 // pred_check_branch
        %150 = sbr.rel (%p148) target = $region20
      $region19: #{_lambda_.10} parent=11 // pred_region
        _
      $region20: #{_lambda_.10} parent=11 // pred_fallthru
        _
    $region12: #{_lambda_.10} parent=5 // pred_fallthru
      _
    %p151 = scmp.lt.s32.totalorder %s10, 2
    // Predicated region
    $region21: #{_lambda_.10} parent=5 // pred_check
      %p152 = pneg %p151
    $region22: #{_lambda_.10} parent=5 // pred_check_branch
      %154 = sbr.rel (%p152) target = $region24
    $region23: #{_lambda_.10} parent=5 // pred_region
      // Predicated region
      $region25: #{_lambda_.10} parent=23 // pred_check
        %p155 = pneg %p30
      $region26: #{_lambda_.10} parent=23 // pred_check_branch
        %157 = sbr.rel (%p155) target = $region28
      $region27: #{_lambda_.10} parent=23 // pred_region
        %p158 = scmp.lt.s32.totalorder %s10, 1
        %s159 = scalar_select %p158, %s10, 1
        %s160 = smul.addr %s159, 2
        %s161 = smul.addr %s160, 8
        %s162 = scalar_lea.vmem %s0, %s161
      $region28: #{_lambda_.10} parent=23 // pred_fallthru
        _
      // Predicated region
      $region29: #{_lambda_.10} parent=23 // pred_check
        %p163 = pneg %p56
      $region30: #{_lambda_.10} parent=23 // pred_check_branch
        %165 = sbr.rel (%p163) target = $region32
      $region31: #{_lambda_.10} parent=23 // pred_region
        %p166 = scmp.lt.s32.totalorder %s10, 1
        %s167 = scalar_select %p166, %s10, 1
        %s168 = smul.addr %s167, 2
        %s169 = smul.addr %s168, 8
        %s170 = scalar_lea.vmem %s1, %s169
      $region32: #{_lambda_.10} parent=23 // pred_fallthru
        _
    $region24: #{_lambda_.10} parent=5 // pred_fallthru
      _
    %p171 = scmp.le.s32.totalorder 1, %s10
    %p172 = scmp.lt.s32.totalorder %s10, 3
    %p173 = pnand %p171, %p172
    %p174 = pneg %p173
    // Predicated region
    $region33: #{_lambda_.10} parent=5 // pred_check
      _
    $region34: #{_lambda_.10} parent=5 // pred_check_branch
      %176 = sbr.rel (%p173) target = $region36
    $region35: #{_lambda_.10} parent=5 // pred_region
      %s177 = ssub.s32 %s10, 1
      %p178 = scmp.lt.s32.totalorder %s15, 1
      %s179 = scalar_select %p178, %s15, 1
      %s180 = smul.addr %s179, 2
      %s181 = smul.addr %s180, 8
      %s182 = scalar_lea.vmem %s0, %s181
      %p183 = pneg %p36
      %p184 = pneg %p33
      %p185 = scmp.lt.s32.totalorder %s15, 1
      %s186 = scalar_select %p185, %s15, 1
      %s187 = smul.addr %s186, 2
      %s188 = smul.addr %s187, 8
      %s189 = scalar_lea.vmem %s1, %s188
      %p190 = pneg %p62
      %p191 = pneg %p59
      %p192 = pneg %p83
      %p193 = pneg %p80
      %p194 = pneg %p104
      %p195 = pneg %p101
      %p196 = pneg %p130
      %p197 = pneg %p127
      %p198 = scmp.lt.s32.totalorder %s15, 1
      %s199 = scalar_select %p198, %s15, 1
      %s200 = smul.addr %s199, 8
      %s201 = scalar_lea.vmem %s4, %s200
      %p202 = scmp.lt.s32.totalorder %s15, 1
      %s203 = scalar_select %p202, %s15, 1
      %s204 = smul.addr %s203, 2
      %s205 = smul.addr %s204, 8
      %s206 = scalar_lea.vmem %s0, %s205
      %p207 = scmp.lt.s32.totalorder %s15, 1
      %s208 = scalar_select %p207, %s15, 1
      %s209 = smul.addr %s208, 2
      %s210 = smul.addr %s209, 8
      %s211 = scalar_lea.vmem %s1, %s210
      %p212 = scmp.lt.s32.totalorder %s15, 1
      %s213 = scalar_select %p212, %s15, 1
      %s214 = smul.addr %s213, 8
      %s215 = scalar_lea.vmem %s4, %s214
      %v216 = vld [vmem:[%s206] sm:$0xff]
      %v217 = vld [vmem:[%s206 + $0x8] sm:$0xf]
      %vm218 = vcmask 64512
      %v219 = vsel %vm218, %v216, -inf
      %vm220 = vcmask 60416
      %v221 = vsel %vm220, %v217, -inf
      %v222 = vmax.f32 %v219, %v221
      %v223 = vrot.slane %v222, 4
      %v224 = vmax.f32 %v222, %v223
      %v225 = vrot.slane %v224, 2
      %v226 = vmax.f32 %v224, %v225
      %v227 = vrot.slane %v226, 1
      %v228 = vmax.f32 %v226, %v227
      %v229 = vsub.f32 %v216, %v228
      %v230 = vsub.f32 %v217, %v228
      %v231 = vmul.f32 %v229, 1.442695
      %v232 = vpow.pop %v231
      %v233 = vmul.f32 %v230, 1.442695
      %v234 = vpow.pop %v233
      %v235 = vsel %vm218, %v232, 0.0
      %v236 = vsel %vm220, %v234, 0.0
      %v237 = vadd.f32 %v235, %v236
      %v238 = vrot.slane %v237, 4
      %v239 = vadd.f32 %v237, %v238
      %v240 = vrot.slane %v239, 2
      %v241 = vadd.f32 %v239, %v240
      %v242 = vrot.slane %v241, 1
      %v243 = vadd.f32 %v241, %v242
      %v244 = vrcp.pop %v243
      %v245 = vmul.f32 %v243, %v244
      %v246 = vsub.f32 1.0, %v245
      %v247 = vmul.f32 %v244, %v246
      %v248 = vadd.f32 %v244, %v247
      %vm249 = vweird.f32 %v243
      %vm250 = vweird.f32 %v244
      %vm251 = vmor %vm249, %vm250
      %v252 = vsel %vm251, %v244, %v248
      %v253 = vand.u32 2147483647, %v243
      %vm254 = vcmp.eq.f32.partialorder %v253, 8.507059e+37
      %v255 = vand.u32 %v243, 2147483648
      %v256 = vor.u32 1.1754944e-38, %v255
      %v257 = vsel %vm254, %v256, %v252
      %v258 = vmul.f32 %v232, %v257
      %v259 = vmul.f32 %v234, %v257
      %v260 = vld [vmem:[%s211] sm:$0xff]
      %v261 = vld [vmem:[%s211 + $0x8] sm:$0xf]
      %262 = vxpose.xlu0.b32.start [1/16] %v258, 128
      %263 = vxpose.xlu0.b32.cont [2/16] %v259, 128
      %264 = vxpose.xlu0.b32.cont [3/16] 0.0, 128
      %265 = vxpose.xlu0.b32.cont [4/16] 0.0, 128
      %266 = vxpose.xlu0.b32.cont [5/16] 0.0, 128
      %267 = vxpose.xlu0.b32.cont [6/16] 0.0, 128
      %268 = vxpose.xlu0.b32.cont [7/16] 0.0, 128
      %269 = vxpose.xlu0.b32.cont [8/16] 0.0, 128
      %270 = vxpose.xlu0.b32.cont [9/16] 0.0, 128
      %271 = vxpose.xlu0.b32.cont [10/16] 0.0, 128
      %272 = vxpose.xlu0.b32.cont [11/16] 0.0, 128
      %273 = vxpose.xlu0.b32.cont [12/16] 0.0, 128
      %274 = vxpose.xlu0.b32.cont [13/16] 0.0, 128
      %275 = vxpose.xlu0.b32.cont [14/16] 0.0, 128
      %276 = vxpose.xlu0.b32.cont [15/16] 0.0, 128
      %277 = vxpose.xlu0.b32.end [16/16] 0.0, 128
      %v278 = vpop.trf.xlu0
      %v279 = vpop.trf.xlu0
      %v280 = vpop.trf.xlu0
      %v281 = vpop.trf.xlu0
      %v282 = vpop.trf.xlu0
      %v283 = vpop.trf.xlu0
      %v284 = vpop.trf.xlu0
      %v285 = vpop.trf.xlu0
      %v286 = vpop.trf.xlu0
      %v287 = vpop.trf.xlu0
      %v288 = vpop.trf.xlu0
      %v289 = vpop.trf.xlu0
      %v290 = vpop.trf.xlu0
      %v291 = vpop.trf.xlu0
      %v292 = vpop.trf.xlu0
      %v293 = vpop.trf.xlu0
      %vm294 = vcmask 97280
      %v296 = vsel %vm294, %v278, 0
      %vm298 = vcmask 1043456
      %v300 = vsel %vm298, %v261, 0
      %302 = vmatpush.msra.mxu0 0.0
      %303 = vmatpush.msra.mxu0 0.0
      %304 = vmatpush.msra.mxu0 0.0
      %305 = vmatpush.msra.mxu0 0.0
      %306 = vmatpush.msra.mxu0 0.0
      %307 = vmatpush.msra.mxu0 0.0
      %308 = vmatpush.msra.mxu0 0.0
      %309 = vmatpush.msra.mxu0 0.0
      %310 = vmatpush.msra.mxu0 0.0
      %311 = vmatpush.msra.mxu0 0.0
      %312 = vmatpush.msra.mxu0 0.0
      %313 = vmatpush.msra.mxu0 0.0
      %314 = vmatpush.msra.mxu0 0.0
      %315 = vmatpush.msra.mxu0 0.0
      %316 = vmatpush.msra.mxu0 %v300
      %317 = vmatpush.msra.mxu0 %v260
      %318 = vmatmul.f32.gmra.mxu0 %v296
      %v319 = vpop.f32.mrf.mxu0
      %v320 = vadd.f32 0.0, %v319
      %321 = vdwg.mxu0
      %v322 = vld [vmem:[%s2] sm:$0xff]
      %v323 = vld [vmem:[%s2 + $0x8] sm:$0xff]
      %v324 = vld [vmem:[%s2 + $0x10] sm:$0xff]
      %v325 = vld [vmem:[%s2 + $0x18] sm:$0xff]
      %v326 = vld [vmem:[%s3] sm:$0x1]
      %v328 = vperm.slane %v326, 0
      %vm330 = vcmask 261120
      %v332 = vsel %vm330, %v320, 0
      %334 = vmatpush.msra.mxu0 0.0
      %335 = vmatpush.msra.mxu0 0.0
      %336 = vmatpush.msra.mxu0 0.0
      %337 = vmatpush.msra.mxu0 0.0
      %338 = vmatpush.msra.mxu0 0.0
      %339 = vmatpush.msra.mxu0 0.0
      %340 = vmatpush.msra.mxu0 0.0
      %341 = vmatpush.msra.mxu0 0.0
      %342 = vmatpush.msra.mxu0 0.0
      %343 = vmatpush.msra.mxu0 0.0
      %344 = vmatpush.msra.mxu0 0.0
      %345 = vmatpush.msra.mxu0 0.0
      %346 = vmatpush.msra.mxu0 %v325
      %347 = vmatpush.msra.mxu0 %v324
      %348 = vmatpush.msra.mxu0 %v323
      %349 = vmatpush.msra.mxu0 %v322
      %350 = vmatmul.f32.gmra.mxu0 %v332
      %v351 = vpop.f32.mrf.mxu0
      %v352 = vadd.f32 %v328, %v351
      %353 = vdwg.mxu0
      %354 = vst.msk [vmem:[%s215] sm:$0xff] %vm330, %v352
      %p355 = scmp.lt.s32.totalorder %s15, 1
      %s356 = scalar_select %p355, %s15, 1
      %s357 = smul.addr %s356, 8
      %s358 = scalar_lea.vmem %s4, %s357
      // Predicated region
      $region37: #{_lambda_.10} parent=35 // pred_check
        %p359 = pneg %p127
      $region38: #{_lambda_.10} parent=35 // pred_check_branch
        %361 = sbr.rel (%p359) target = $region40
      $region39: #{_lambda_.10} parent=35 // pred_region
        _
      $region40: #{_lambda_.10} parent=35 // pred_fallthru
        _
    $region36: #{_lambda_.10} parent=5 // pred_fallthru
      _
    %p362 = scmp.le.s32.totalorder 2, %s10
    // Predicated region
    $region41: #{_lambda_.10} parent=5 // pred_check
      %p363 = pneg %p362
    $region42: #{_lambda_.10} parent=5 // pred_check_branch
      %365 = sbr.rel (%p363) target = $region44
    $region43: #{_lambda_.10} parent=5 // pred_region
      %s366 = ssub.s32 %s10, 2
      // Predicated region
      $region45: #{_lambda_.10} parent=43 // pred_check
        %p367 = pneg %p133
      $region46: #{_lambda_.10} parent=43 // pred_check_branch
        %369 = sbr.rel (%p367) target = $region48
      $region47: #{_lambda_.10} parent=43 // pred_region
        %p370 = scmp.lt.s32.totalorder %s16, 1
        %s371 = scalar_select %p370, %s16, 1
        %s372 = smul.addr %s371, 8
        %s373 = scalar_lea.vmem %s4, %s372
      $region48: #{_lambda_.10} parent=43 // pred_fallthru
        _
    $region44: #{_lambda_.10} parent=5 // pred_fallthru
      _
  $region6: #{_lambda_.10} parent=0 // loop_footer
    %s14 = sadd.s32 1, %s10
  $region7: #{_lambda_.10} parent=0 // loop_footer_branch
    %9 = sbr.rel target = $region3
  $region8: #{_lambda_.10} parent=0 // loop_exit
    _

// kernel: _lambda_.8
$region0: #{_lambda_.8}
  #allocation0 [shape = 'u32[]', space=smem, size = 0x4, offset = 0x4, fixed_abs, tag = 'smem constant byte address 0x4 - core index']
  #allocation1 [shape = 'u32[72,128]{1,0:T(1,128)}', space=vmem, size = 0x9000, scoped, tag = 'internal scratch']
  %s0 = inlined_call_operand.vmem [shape: f32[32,2], index: 0, kind: input, shape index: {}]
  %s1 = inlined_call_operand.vmem [shape: f32[2,32], index: 1, kind: input, shape index: {}]
  %s2 = inlined_call_operand.vmem [shape: f32[1,32], index: 2, kind: input, shape index: {}]
  %s3 = inlined_call_operand.vmem [shape: f32[2,32,32], index: 3, kind: input, shape index: {}]
  %s4 = inlined_call_operand.vmem [shape: f32[2,1,32], index: 4, kind: input, shape index: {}]
  %s5 = inlined_call_operand.vmem [shape: f32[32,32], index: 5, kind: input, shape index: {}]
  %s6 = inlined_call_operand.vmem [shape: f32[1,32], index: 6, kind: input, shape index: {}]
  %s7 = inlined_call_operand.vmem [shape: f32[32,8], index: 7, kind: input, shape index: {}]
  %s8 = inlined_call_operand.vmem [shape: f32[1,8], index: 8, kind: input, shape index: {}]
  %s9 = inlined_call_operand.vmem [shape: f32[32,8], index: 9, kind: output, shape index: {}]
  %s10 = sld [smem:[#allocation0]]
  $region46: #{_lambda_.8} parent=0
    _
  %s12 = ssub.s32 1, %s10
  %s13 = scalar_select 0, %s12, %s10
  // Predicated region
  $region2: #{_lambda_.8} parent=0 // pred_check
    _
  $region3: #{_lambda_.8} parent=0 // pred_check_branch
    %15 = sbr.rel (0) target = $region5
  $region4: #{_lambda_.8} parent=0 // pred_region
    _
  $region5: #{_lambda_.8} parent=0 // pred_fallthru
    _
  // Predicated region
  $region6: #{_lambda_.8} parent=0 // pred_check
    _
  $region7: #{_lambda_.8} parent=0 // pred_check_branch
    %17 = sbr.rel (0) target = $region9
  $region8: #{_lambda_.8} parent=0 // pred_region
    _
  $region9: #{_lambda_.8} parent=0 // pred_fallthru
    _
  // Predicated region
  $region10: #{_lambda_.8} parent=0 // pred_check
    _
  $region11: #{_lambda_.8} parent=0 // pred_check_branch
    %19 = sbr.rel (0) target = $region13
  $region12: #{_lambda_.8} parent=0 // pred_region
    _
  $region13: #{_lambda_.8} parent=0 // pred_fallthru
    _
  // Predicated region
  $region14: #{_lambda_.8} parent=0 // pred_check
    _
  $region15: #{_lambda_.8} parent=0 // pred_check_branch
    %21 = sbr.rel (0) target = $region17
  $region16: #{_lambda_.8} parent=0 // pred_region
    _
  $region17: #{_lambda_.8} parent=0 // pred_fallthru
    _
  // Predicated region
  $region18: #{_lambda_.8} parent=0 // pred_check
    _
  $region19: #{_lambda_.8} parent=0 // pred_check_branch
    %23 = sbr.rel (0) target = $region21
  $region20: #{_lambda_.8} parent=0 // pred_region
    _
  $region21: #{_lambda_.8} parent=0 // pred_fallthru
    _
  // Predicated region
  $region22: #{_lambda_.8} parent=0 // pred_check
    _
  $region23: #{_lambda_.8} parent=0 // pred_check_branch
    %25 = sbr.rel (0) target = $region25
  $region24: #{_lambda_.8} parent=0 // pred_region
    _
  $region25: #{_lambda_.8} parent=0 // pred_fallthru
    _
  // Predicated region
  $region26: #{_lambda_.8} parent=0 // pred_check
    _
  $region27: #{_lambda_.8} parent=0 // pred_check_branch
    %27 = sbr.rel (0) target = $region29
  $region28: #{_lambda_.8} parent=0 // pred_region
    _
  $region29: #{_lambda_.8} parent=0 // pred_fallthru
    _
  // Predicated region
  $region30: #{_lambda_.8} parent=0 // pred_check
    _
  $region31: #{_lambda_.8} parent=0 // pred_check_branch
    %29 = sbr.rel (0) target = $region33
  $region32: #{_lambda_.8} parent=0 // pred_region
    _
  $region33: #{_lambda_.8} parent=0 // pred_fallthru
    _
  // Predicated region
  $region34: #{_lambda_.8} parent=0 // pred_check
    _
  $region35: #{_lambda_.8} parent=0 // pred_check_branch
    %31 = sbr.rel (0) target = $region37
  $region36: #{_lambda_.8} parent=0 // pred_region
    _
  $region37: #{_lambda_.8} parent=0 // pred_fallthru
    _
  %v32 = vld [vmem:[%s0] sm:$0xff]
  %v33 = vld [vmem:[%s0 + $0x8] sm:$0xff]
  %v34 = vld [vmem:[%s0 + $0x10] sm:$0xff]
  %v35 = vld [vmem:[%s0 + $0x18] sm:$0xff]
  %v36 = vld [vmem:[%s1] sm:$0x3]
  %v37 = vld [vmem:[%s2] sm:$0x1]
  %v39 = vperm.slane %v37, 0
  %vm41 = vcmask 15360
  %v43 = vsel %vm41, %v32, 0
  %v46 = vsel %vm41, %v33, 0
  %v49 = vsel %vm41, %v34, 0
  %v52 = vsel %vm41, %v35, 0
  %vm54 = vcmask 1041408
  %v56 = vsel %vm54, %v36, 0
  %58 = vmatpush.msra.mxu0 0.0
  %59 = vmatpush.msra.mxu0 0.0
  %60 = vmatpush.msra.mxu0 0.0
  %61 = vmatpush.msra.mxu0 0.0
  %62 = vmatpush.msra.mxu0 0.0
  %63 = vmatpush.msra.mxu0 0.0
  %64 = vmatpush.msra.mxu0 0.0
  %65 = vmatpush.msra.mxu0 0.0
  %66 = vmatpush.msra.mxu0 0.0
  %67 = vmatpush.msra.mxu0 0.0
  %68 = vmatpush.msra.mxu0 0.0
  %69 = vmatpush.msra.mxu0 0.0
  %70 = vmatpush.msra.mxu0 0.0
  %71 = vmatpush.msra.mxu0 0.0
  %72 = vmatpush.msra.mxu0 0.0
  %73 = vmatpush.msra.mxu0 %v56
  %74 = vmatmul.f32.gmra.mxu0 %v43
  %v75 = vpop.f32.mrf.mxu0
  %v76 = vadd.f32 %v39, %v75
  %77 = vmatmul.f32.gmra.mxu0 %v46
  %v78 = vpop.f32.mrf.mxu0
  %v79 = vadd.f32 %v39, %v78
  %80 = vmatmul.f32.gmra.mxu0 %v49
  %v81 = vpop.f32.mrf.mxu0
  %v82 = vadd.f32 %v39, %v81
  %83 = vmatmul.f32.gmra.mxu0 %v52
  %v84 = vpop.f32.mrf.mxu0
  %v85 = vadd.f32 %v39, %v84
  %86 = vdwg.mxu0
  %v87 = vtanh.pop %v76
  %v88 = vtanh.pop %v79
  %v89 = vtanh.pop %v82
  %v90 = vtanh.pop %v85
  %v91 = vld [vmem:[%s3] sm:$0xff]
  %v92 = vld [vmem:[%s3 + $0x8] sm:$0xff]
  %v93 = vld [vmem:[%s3 + $0x10] sm:$0xff]
  %v94 = vld [vmem:[%s3 + $0x18] sm:$0xff]
  %v95 = vld [vmem:[%s4] sm:$0x1]
  %v97 = vperm.slane %v95, 0
  %vm99 = vcmask 261120
  %v101 = vsel %vm99, %v87, 0
  %v104 = vsel %vm99, %v88, 0
  %v107 = vsel %vm99, %v89, 0
  %v110 = vsel %vm99, %v90, 0
  %112 = vmatpush.msra.mxu0 0.0
  %113 = vmatpush.msra.mxu0 0.0
  %114 = vmatpush.msra.mxu0 0.0
  %115 = vmatpush.msra.mxu0 0.0
  %116 = vmatpush.msra.mxu0 0.0
  %117 = vmatpush.msra.mxu0 0.0
  %118 = vmatpush.msra.mxu0 0.0
  %119 = vmatpush.msra.mxu0 0.0
  %120 = vmatpush.msra.mxu0 0.0
  %121 = vmatpush.msra.mxu0 0.0
  %122 = vmatpush.msra.mxu0 0.0
  %123 = vmatpush.msra.mxu0 0.0
  %124 = vmatpush.msra.mxu0 %v94
  %125 = vmatpush.msra.mxu0 %v93
  %126 = vmatpush.msra.mxu0 %v92
  %127 = vmatpush.msra.mxu0 %v91
  %128 = vmatmul.f32.gmra.mxu0 %v101
  %v129 = vpop.f32.mrf.mxu0
  %v130 = vadd.f32 %v97, %v129
  %131 = vmatmul.f32.gmra.mxu0 %v104
  %v132 = vpop.f32.mrf.mxu0
  %v133 = vadd.f32 %v97, %v132
  %134 = vmatmul.f32.gmra.mxu0 %v107
  %v135 = vpop.f32.mrf.mxu0
  %v136 = vadd.f32 %v97, %v135
  %137 = vmatmul.f32.gmra.mxu0 %v110
  %v138 = vpop.f32.mrf.mxu0
  %v139 = vadd.f32 %v97, %v138
  %140 = vdwg.mxu0
  %v141 = vtanh.pop %v130
  %v142 = vtanh.pop %v133
  %v143 = vtanh.pop %v136
  %v144 = vtanh.pop %v139
  %v145 = vadd.f32 %v87, %v141
  %v146 = vadd.f32 %v88, %v142
  %v147 = vadd.f32 %v89, %v143
  %v148 = vadd.f32 %v90, %v144
  %s149 = scalar_lea.vmem %s3, 32
  %v150 = vld [vmem:[%s149] sm:$0xff]
  %v151 = vld [vmem:[%s149 + $0x8] sm:$0xff]
  %v152 = vld [vmem:[%s149 + $0x10] sm:$0xff]
  %v153 = vld [vmem:[%s149 + $0x18] sm:$0xff]
  %s154 = scalar_lea.vmem %s4, 1
  %v155 = vld [vmem:[%s154] sm:$0x1]
  %v157 = vperm.slane %v155, 0
  %v160 = vsel %vm99, %v145, 0
  %v163 = vsel %vm99, %v146, 0
  %v166 = vsel %vm99, %v147, 0
  %v169 = vsel %vm99, %v148, 0
  %171 = vmatpush.msra.mxu0 0.0
  %172 = vmatpush.msra.mxu0 0.0
  %173 = vmatpush.msra.mxu0 0.0
  %174 = vmatpush.msra.mxu0 0.0
  %175 = vmatpush.msra.mxu0 0.0
  %176 = vmatpush.msra.mxu0 0.0
  %177 = vmatpush.msra.mxu0 0.0
  %178 = vmatpush.msra.mxu0 0.0
  %179 = vmatpush.msra.mxu0 0.0
  %180 = vmatpush.msra.mxu0 0.0
  %181 = vmatpush.msra.mxu0 0.0
  %182 = vmatpush.msra.mxu0 0.0
  %183 = vmatpush.msra.mxu0 %v153
  %184 = vmatpush.msra.mxu0 %v152
  %185 = vmatpush.msra.mxu0 %v151
  %186 = vmatpush.msra.mxu0 %v150
  %187 = vmatmul.f32.gmra.mxu0 %v160
  %v188 = vpop.f32.mrf.mxu0
  %v189 = vadd.f32 %v157, %v188
  %190 = vmatmul.f32.gmra.mxu0 %v163
  %v191 = vpop.f32.mrf.mxu0
  %v192 = vadd.f32 %v157, %v191
  %193 = vmatmul.f32.gmra.mxu0 %v166
  %v194 = vpop.f32.mrf.mxu0
  %v195 = vadd.f32 %v157, %v194
  %196 = vmatmul.f32.gmra.mxu0 %v169
  %v197 = vpop.f32.mrf.mxu0
  %v198 = vadd.f32 %v157, %v197
  %199 = vdwg.mxu0
  %v200 = vtanh.pop %v189
  %v201 = vtanh.pop %v192
  %v202 = vtanh.pop %v195
  %v203 = vtanh.pop %v198
  %v204 = vadd.f32 %v145, %v200
  %v205 = vadd.f32 %v146, %v201
  %v206 = vadd.f32 %v147, %v202
  %v207 = vadd.f32 %v148, %v203
  %v208 = vld [vmem:[%s5] sm:$0xff]
  %v209 = vld [vmem:[%s5 + $0x8] sm:$0xff]
  %v210 = vld [vmem:[%s5 + $0x10] sm:$0xff]
  %v211 = vld [vmem:[%s5 + $0x18] sm:$0xff]
  %v212 = vld [vmem:[%s6] sm:$0x1]
  %v214 = vperm.slane %v212, 0
  %v217 = vsel %vm99, %v204, 0
  %v220 = vsel %vm99, %v205, 0
  %v223 = vsel %vm99, %v206, 0
  %v226 = vsel %vm99, %v207, 0
  %228 = vmatpush.msra.mxu0 0.0
  %229 = vmatpush.msra.mxu0 0.0
  %230 = vmatpush.msra.mxu0 0.0
  %231 = vmatpush.msra.mxu0 0.0
  %232 = vmatpush.msra.mxu0 0.0
  %233 = vmatpush.msra.mxu0 0.0
  %234 = vmatpush.msra.mxu0 0.0
  %235 = vmatpush.msra.mxu0 0.0
  %236 = vmatpush.msra.mxu0 0.0
  %237 = vmatpush.msra.mxu0 0.0
  %238 = vmatpush.msra.mxu0 0.0
  %239 = vmatpush.msra.mxu0 0.0
  %240 = vmatpush.msra.mxu0 %v211
  %241 = vmatpush.msra.mxu0 %v210
  %242 = vmatpush.msra.mxu0 %v209
  %243 = vmatpush.msra.mxu0 %v208
  %244 = vmatmul.f32.gmra.mxu0 %v217
  %v245 = vpop.f32.mrf.mxu0
  %v246 = vadd.f32 %v214, %v245
  %247 = vmatmul.f32.gmra.mxu0 %v220
  %v248 = vpop.f32.mrf.mxu0
  %v249 = vadd.f32 %v214, %v248
  %250 = vmatmul.f32.gmra.mxu0 %v223
  %v251 = vpop.f32.mrf.mxu0
  %v252 = vadd.f32 %v214, %v251
  %253 = vmatmul.f32.gmra.mxu0 %v226
  %v254 = vpop.f32.mrf.mxu0
  %v255 = vadd.f32 %v214, %v254
  %256 = vdwg.mxu0
  %v257 = vld [vmem:[%s7] sm:$0xff]
  %v258 = vld [vmem:[%s7 + $0x8] sm:$0xff]
  %v259 = vld [vmem:[%s7 + $0x10] sm:$0xff]
  %v260 = vld [vmem:[%s7 + $0x18] sm:$0xff]
  %v261 = vld [vmem:[%s8] sm:$0x1]
  %v263 = vperm.slane %v261, 0
  %v266 = vsel %vm99, %v246, 0
  %v269 = vsel %vm99, %v249, 0
  %v272 = vsel %vm99, %v252, 0
  %v275 = vsel %vm99, %v255, 0
  %277 = vmatpush.msra.mxu0 0.0
  %278 = vmatpush.msra.mxu0 0.0
  %279 = vmatpush.msra.mxu0 0.0
  %280 = vmatpush.msra.mxu0 0.0
  %281 = vmatpush.msra.mxu0 0.0
  %282 = vmatpush.msra.mxu0 0.0
  %283 = vmatpush.msra.mxu0 0.0
  %284 = vmatpush.msra.mxu0 0.0
  %285 = vmatpush.msra.mxu0 0.0
  %286 = vmatpush.msra.mxu0 0.0
  %287 = vmatpush.msra.mxu0 0.0
  %288 = vmatpush.msra.mxu0 0.0
  %289 = vmatpush.msra.mxu0 %v260
  %290 = vmatpush.msra.mxu0 %v259
  %291 = vmatpush.msra.mxu0 %v258
  %292 = vmatpush.msra.mxu0 %v257
  %293 = vmatmul.f32.gmra.mxu0 %v266
  %v294 = vpop.f32.mrf.mxu0
  %v295 = vadd.f32 %v263, %v294
  %296 = vmatmul.f32.gmra.mxu0 %v269
  %v297 = vpop.f32.mrf.mxu0
  %v298 = vadd.f32 %v263, %v297
  %299 = vmatmul.f32.gmra.mxu0 %v272
  %v300 = vpop.f32.mrf.mxu0
  %v301 = vadd.f32 %v263, %v300
  %302 = vmatmul.f32.gmra.mxu0 %v275
  %v303 = vpop.f32.mrf.mxu0
  %v304 = vadd.f32 %v263, %v303
  %305 = vdwg.mxu0
  %vm306 = vcmask 64512
  %307 = vst.msk [vmem:[%s9] sm:$0xff] %vm306, %v295
  %308 = vst.msk [vmem:[%s9 + $0x8] sm:$0xff] %vm306, %v298
  %309 = vst.msk [vmem:[%s9 + $0x10] sm:$0xff] %vm306, %v301
  %310 = vst.msk [vmem:[%s9 + $0x18] sm:$0xff] %vm306, %v304
  // Predicated region
  $region38: #{_lambda_.8} parent=0 // pred_check
    _
  $region39: #{_lambda_.8} parent=0 // pred_check_branch
    %312 = sbr.rel (0) target = $region41
  $region40: #{_lambda_.8} parent=0 // pred_region
    _
  $region41: #{_lambda_.8} parent=0 // pred_fallthru
    _
  // Predicated region
  $region42: #{_lambda_.8} parent=0 // pred_check
    _
  $region43: #{_lambda_.8} parent=0 // pred_check_branch
    %314 = sbr.rel (0) target = $region45
  $region44: #{_lambda_.8} parent=0 // pred_region
    _
  $region45: #{_lambda_.8} parent=0 // pred_fallthru
    _

// kernel: _lambda_.7
$region0: #{_lambda_.7}
  #allocation0 [shape = 'u32[]', space=smem, size = 0x4, offset = 0x4, fixed_abs, tag = 'smem constant byte address 0x4 - core index']
  #allocation1 [shape = 'u32[72,128]{1,0:T(1,128)}', space=vmem, size = 0x9000, scoped, tag = 'internal scratch']
  %s0 = inlined_call_operand.vmem [shape: f32[24,2], index: 0, kind: input, shape index: {}]
  %s1 = inlined_call_operand.vmem [shape: f32[2,32], index: 1, kind: input, shape index: {}]
  %s2 = inlined_call_operand.vmem [shape: f32[1,32], index: 2, kind: input, shape index: {}]
  %s3 = inlined_call_operand.vmem [shape: f32[2,32,32], index: 3, kind: input, shape index: {}]
  %s4 = inlined_call_operand.vmem [shape: f32[2,1,32], index: 4, kind: input, shape index: {}]
  %s5 = inlined_call_operand.vmem [shape: f32[32,32], index: 5, kind: input, shape index: {}]
  %s6 = inlined_call_operand.vmem [shape: f32[1,32], index: 6, kind: input, shape index: {}]
  %s7 = inlined_call_operand.vmem [shape: f32[32,8], index: 7, kind: input, shape index: {}]
  %s8 = inlined_call_operand.vmem [shape: f32[1,8], index: 8, kind: input, shape index: {}]
  %s9 = inlined_call_operand.vmem [shape: f32[24,8], index: 9, kind: output, shape index: {}]
  %s10 = sld [smem:[#allocation0]]
  $region46: #{_lambda_.7} parent=0
    _
  %s12 = ssub.s32 1, %s10
  %s13 = scalar_select 0, %s12, %s10
  // Predicated region
  $region2: #{_lambda_.7} parent=0 // pred_check
    _
  $region3: #{_lambda_.7} parent=0 // pred_check_branch
    %15 = sbr.rel (0) target = $region5
  $region4: #{_lambda_.7} parent=0 // pred_region
    _
  $region5: #{_lambda_.7} parent=0 // pred_fallthru
    _
  // Predicated region
  $region6: #{_lambda_.7} parent=0 // pred_check
    _
  $region7: #{_lambda_.7} parent=0 // pred_check_branch
    %17 = sbr.rel (0) target = $region9
  $region8: #{_lambda_.7} parent=0 // pred_region
    _
  $region9: #{_lambda_.7} parent=0 // pred_fallthru
    _
  // Predicated region
  $region10: #{_lambda_.7} parent=0 // pred_check
    _
  $region11: #{_lambda_.7} parent=0 // pred_check_branch
    %19 = sbr.rel (0) target = $region13
  $region12: #{_lambda_.7} parent=0 // pred_region
    _
  $region13: #{_lambda_.7} parent=0 // pred_fallthru
    _
  // Predicated region
  $region14: #{_lambda_.7} parent=0 // pred_check
    _
  $region15: #{_lambda_.7} parent=0 // pred_check_branch
    %21 = sbr.rel (0) target = $region17
  $region16: #{_lambda_.7} parent=0 // pred_region
    _
  $region17: #{_lambda_.7} parent=0 // pred_fallthru
    _
  // Predicated region
  $region18: #{_lambda_.7} parent=0 // pred_check
    _
  $region19: #{_lambda_.7} parent=0 // pred_check_branch
    %23 = sbr.rel (0) target = $region21
  $region20: #{_lambda_.7} parent=0 // pred_region
    _
  $region21: #{_lambda_.7} parent=0 // pred_fallthru
    _
  // Predicated region
  $region22: #{_lambda_.7} parent=0 // pred_check
    _
  $region23: #{_lambda_.7} parent=0 // pred_check_branch
    %25 = sbr.rel (0) target = $region25
  $region24: #{_lambda_.7} parent=0 // pred_region
    _
  $region25: #{_lambda_.7} parent=0 // pred_fallthru
    _
  // Predicated region
  $region26: #{_lambda_.7} parent=0 // pred_check
    _
  $region27: #{_lambda_.7} parent=0 // pred_check_branch
    %27 = sbr.rel (0) target = $region29
  $region28: #{_lambda_.7} parent=0 // pred_region
    _
  $region29: #{_lambda_.7} parent=0 // pred_fallthru
    _
  // Predicated region
  $region30: #{_lambda_.7} parent=0 // pred_check
    _
  $region31: #{_lambda_.7} parent=0 // pred_check_branch
    %29 = sbr.rel (0) target = $region33
  $region32: #{_lambda_.7} parent=0 // pred_region
    _
  $region33: #{_lambda_.7} parent=0 // pred_fallthru
    _
  // Predicated region
  $region34: #{_lambda_.7} parent=0 // pred_check
    _
  $region35: #{_lambda_.7} parent=0 // pred_check_branch
    %31 = sbr.rel (0) target = $region37
  $region36: #{_lambda_.7} parent=0 // pred_region
    _
  $region37: #{_lambda_.7} parent=0 // pred_fallthru
    _
  %v32 = vld [vmem:[%s0] sm:$0xff]
  %v33 = vld [vmem:[%s0 + $0x8] sm:$0xff]
  %v34 = vld [vmem:[%s0 + $0x10] sm:$0xff]
  %v35 = vld [vmem:[%s1] sm:$0x3]
  %v36 = vld [vmem:[%s2] sm:$0x1]
  %v38 = vperm.slane %v36, 0
  %vm40 = vcmask 15360
  %v42 = vsel %vm40, %v32, 0
  %v45 = vsel %vm40, %v33, 0
  %v48 = vsel %vm40, %v34, 0
  %vm50 = vcmask 1041408
  %v52 = vsel %vm50, %v35, 0
  %54 = vmatpush.msra.mxu0 0.0
  %55 = vmatpush.msra.mxu0 0.0
  %56 = vmatpush.msra.mxu0 0.0
  %57 = vmatpush.msra.mxu0 0.0
  %58 = vmatpush.msra.mxu0 0.0
  %59 = vmatpush.msra.mxu0 0.0
  %60 = vmatpush.msra.mxu0 0.0
  %61 = vmatpush.msra.mxu0 0.0
  %62 = vmatpush.msra.mxu0 0.0
  %63 = vmatpush.msra.mxu0 0.0
  %64 = vmatpush.msra.mxu0 0.0
  %65 = vmatpush.msra.mxu0 0.0
  %66 = vmatpush.msra.mxu0 0.0
  %67 = vmatpush.msra.mxu0 0.0
  %68 = vmatpush.msra.mxu0 0.0
  %69 = vmatpush.msra.mxu0 %v52
  %70 = vmatmul.f32.gmra.mxu0 %v42
  %v71 = vpop.f32.mrf.mxu0
  %v72 = vadd.f32 %v38, %v71
  %73 = vmatmul.f32.gmra.mxu0 %v45
  %v74 = vpop.f32.mrf.mxu0
  %v75 = vadd.f32 %v38, %v74
  %76 = vmatmul.f32.gmra.mxu0 %v48
  %v77 = vpop.f32.mrf.mxu0
  %v78 = vadd.f32 %v38, %v77
  %79 = vdwg.mxu0
  %v80 = vtanh.pop %v72
  %v81 = vtanh.pop %v75
  %v82 = vtanh.pop %v78
  %v83 = vld [vmem:[%s3] sm:$0xff]
  %v84 = vld [vmem:[%s3 + $0x8] sm:$0xff]
  %v85 = vld [vmem:[%s3 + $0x10] sm:$0xff]
  %v86 = vld [vmem:[%s3 + $0x18] sm:$0xff]
  %v87 = vld [vmem:[%s4] sm:$0x1]
  %v89 = vperm.slane %v87, 0
  %vm91 = vcmask 261120
  %v93 = vsel %vm91, %v80, 0
  %v96 = vsel %vm91, %v81, 0
  %v99 = vsel %vm91, %v82, 0
  %101 = vmatpush.msra.mxu0 0.0
  %102 = vmatpush.msra.mxu0 0.0
  %103 = vmatpush.msra.mxu0 0.0
  %104 = vmatpush.msra.mxu0 0.0
  %105 = vmatpush.msra.mxu0 0.0
  %106 = vmatpush.msra.mxu0 0.0
  %107 = vmatpush.msra.mxu0 0.0
  %108 = vmatpush.msra.mxu0 0.0
  %109 = vmatpush.msra.mxu0 0.0
  %110 = vmatpush.msra.mxu0 0.0
  %111 = vmatpush.msra.mxu0 0.0
  %112 = vmatpush.msra.mxu0 0.0
  %113 = vmatpush.msra.mxu0 %v86
  %114 = vmatpush.msra.mxu0 %v85
  %115 = vmatpush.msra.mxu0 %v84
  %116 = vmatpush.msra.mxu0 %v83
  %117 = vmatmul.f32.gmra.mxu0 %v93
  %v118 = vpop.f32.mrf.mxu0
  %v119 = vadd.f32 %v89, %v118
  %120 = vmatmul.f32.gmra.mxu0 %v96
  %v121 = vpop.f32.mrf.mxu0
  %v122 = vadd.f32 %v89, %v121
  %123 = vmatmul.f32.gmra.mxu0 %v99
  %v124 = vpop.f32.mrf.mxu0
  %v125 = vadd.f32 %v89, %v124
  %126 = vdwg.mxu0
  %v127 = vtanh.pop %v119
  %v128 = vtanh.pop %v122
  %v129 = vtanh.pop %v125
  %v130 = vadd.f32 %v80, %v127
  %v131 = vadd.f32 %v81, %v128
  %v132 = vadd.f32 %v82, %v129
  %s133 = scalar_lea.vmem %s3, 32
  %v134 = vld [vmem:[%s133] sm:$0xff]
  %v135 = vld [vmem:[%s133 + $0x8] sm:$0xff]
  %v136 = vld [vmem:[%s133 + $0x10] sm:$0xff]
  %v137 = vld [vmem:[%s133 + $0x18] sm:$0xff]
  %s138 = scalar_lea.vmem %s4, 1
  %v139 = vld [vmem:[%s138] sm:$0x1]
  %v141 = vperm.slane %v139, 0
  %v144 = vsel %vm91, %v130, 0
  %v147 = vsel %vm91, %v131, 0
  %v150 = vsel %vm91, %v132, 0
  %152 = vmatpush.msra.mxu0 0.0
  %153 = vmatpush.msra.mxu0 0.0
  %154 = vmatpush.msra.mxu0 0.0
  %155 = vmatpush.msra.mxu0 0.0
  %156 = vmatpush.msra.mxu0 0.0
  %157 = vmatpush.msra.mxu0 0.0
  %158 = vmatpush.msra.mxu0 0.0
  %159 = vmatpush.msra.mxu0 0.0
  %160 = vmatpush.msra.mxu0 0.0
  %161 = vmatpush.msra.mxu0 0.0
  %162 = vmatpush.msra.mxu0 0.0
  %163 = vmatpush.msra.mxu0 0.0
  %164 = vmatpush.msra.mxu0 %v137
  %165 = vmatpush.msra.mxu0 %v136
  %166 = vmatpush.msra.mxu0 %v135
  %167 = vmatpush.msra.mxu0 %v134
  %168 = vmatmul.f32.gmra.mxu0 %v144
  %v169 = vpop.f32.mrf.mxu0
  %v170 = vadd.f32 %v141, %v169
  %171 = vmatmul.f32.gmra.mxu0 %v147
  %v172 = vpop.f32.mrf.mxu0
  %v173 = vadd.f32 %v141, %v172
  %174 = vmatmul.f32.gmra.mxu0 %v150
  %v175 = vpop.f32.mrf.mxu0
  %v176 = vadd.f32 %v141, %v175
  %177 = vdwg.mxu0
  %v178 = vtanh.pop %v170
  %v179 = vtanh.pop %v173
  %v180 = vtanh.pop %v176
  %v181 = vadd.f32 %v130, %v178
  %v182 = vadd.f32 %v131, %v179
  %v183 = vadd.f32 %v132, %v180
  %v184 = vld [vmem:[%s5] sm:$0xff]
  %v185 = vld [vmem:[%s5 + $0x8] sm:$0xff]
  %v186 = vld [vmem:[%s5 + $0x10] sm:$0xff]
  %v187 = vld [vmem:[%s5 + $0x18] sm:$0xff]
  %v188 = vld [vmem:[%s6] sm:$0x1]
  %v190 = vperm.slane %v188, 0
  %v193 = vsel %vm91, %v181, 0
  %v196 = vsel %vm91, %v182, 0
  %v199 = vsel %vm91, %v183, 0
  %201 = vmatpush.msra.mxu0 0.0
  %202 = vmatpush.msra.mxu0 0.0
  %203 = vmatpush.msra.mxu0 0.0
  %204 = vmatpush.msra.mxu0 0.0
  %205 = vmatpush.msra.mxu0 0.0
  %206 = vmatpush.msra.mxu0 0.0
  %207 = vmatpush.msra.mxu0 0.0
  %208 = vmatpush.msra.mxu0 0.0
  %209 = vmatpush.msra.mxu0 0.0
  %210 = vmatpush.msra.mxu0 0.0
  %211 = vmatpush.msra.mxu0 0.0
  %212 = vmatpush.msra.mxu0 0.0
  %213 = vmatpush.msra.mxu0 %v187
  %214 = vmatpush.msra.mxu0 %v186
  %215 = vmatpush.msra.mxu0 %v185
  %216 = vmatpush.msra.mxu0 %v184
  %217 = vmatmul.f32.gmra.mxu0 %v193
  %v218 = vpop.f32.mrf.mxu0
  %v219 = vadd.f32 %v190, %v218
  %220 = vmatmul.f32.gmra.mxu0 %v196
  %v221 = vpop.f32.mrf.mxu0
  %v222 = vadd.f32 %v190, %v221
  %223 = vmatmul.f32.gmra.mxu0 %v199
  %v224 = vpop.f32.mrf.mxu0
  %v225 = vadd.f32 %v190, %v224
  %226 = vdwg.mxu0
  %v227 = vld [vmem:[%s7] sm:$0xff]
  %v228 = vld [vmem:[%s7 + $0x8] sm:$0xff]
  %v229 = vld [vmem:[%s7 + $0x10] sm:$0xff]
  %v230 = vld [vmem:[%s7 + $0x18] sm:$0xff]
  %v231 = vld [vmem:[%s8] sm:$0x1]
  %v233 = vperm.slane %v231, 0
  %v236 = vsel %vm91, %v219, 0
  %v239 = vsel %vm91, %v222, 0
  %v242 = vsel %vm91, %v225, 0
  %244 = vmatpush.msra.mxu0 0.0
  %245 = vmatpush.msra.mxu0 0.0
  %246 = vmatpush.msra.mxu0 0.0
  %247 = vmatpush.msra.mxu0 0.0
  %248 = vmatpush.msra.mxu0 0.0
  %249 = vmatpush.msra.mxu0 0.0
  %250 = vmatpush.msra.mxu0 0.0
  %251 = vmatpush.msra.mxu0 0.0
  %252 = vmatpush.msra.mxu0 0.0
  %253 = vmatpush.msra.mxu0 0.0
  %254 = vmatpush.msra.mxu0 0.0
  %255 = vmatpush.msra.mxu0 0.0
  %256 = vmatpush.msra.mxu0 %v230
  %257 = vmatpush.msra.mxu0 %v229
  %258 = vmatpush.msra.mxu0 %v228
  %259 = vmatpush.msra.mxu0 %v227
  %260 = vmatmul.f32.gmra.mxu0 %v236
  %v261 = vpop.f32.mrf.mxu0
  %v262 = vadd.f32 %v233, %v261
  %263 = vmatmul.f32.gmra.mxu0 %v239
  %v264 = vpop.f32.mrf.mxu0
  %v265 = vadd.f32 %v233, %v264
  %266 = vmatmul.f32.gmra.mxu0 %v242
  %v267 = vpop.f32.mrf.mxu0
  %v268 = vadd.f32 %v233, %v267
  %269 = vdwg.mxu0
  %vm270 = vcmask 64512
  %271 = vst.msk [vmem:[%s9] sm:$0xff] %vm270, %v262
  %272 = vst.msk [vmem:[%s9 + $0x8] sm:$0xff] %vm270, %v265
  %273 = vst.msk [vmem:[%s9 + $0x10] sm:$0xff] %vm270, %v268
  // Predicated region
  $region38: #{_lambda_.7} parent=0 // pred_check
    _
  $region39: #{_lambda_.7} parent=0 // pred_check_branch
    %275 = sbr.rel (0) target = $region41
  $region40: #{_lambda_.7} parent=0 // pred_region
    _
  $region41: #{_lambda_.7} parent=0 // pred_fallthru
    _
  // Predicated region
  $region42: #{_lambda_.7} parent=0 // pred_check
    _
  $region43: #{_lambda_.7} parent=0 // pred_check_branch
    %277 = sbr.rel (0) target = $region45
  $region44: #{_lambda_.7} parent=0 // pred_region
    _
  $region45: #{_lambda_.7} parent=0 // pred_fallthru
    _

// kernel: _lambda_.9
$region0: #{_lambda_.9}
  #allocation0 [shape = 'u32[]', space=smem, size = 0x4, offset = 0x4, fixed_abs, tag = 'smem constant byte address 0x4 - core index']
  #allocation1 [shape = 'u32[72,128]{1,0:T(1,128)}', space=vmem, size = 0x9000, scoped, tag = 'internal scratch']
  %s0 = inlined_call_operand.vmem [shape: f32[24,5], index: 0, kind: input, shape index: {}]
  %s1 = inlined_call_operand.vmem [shape: f32[5,32], index: 1, kind: input, shape index: {}]
  %s2 = inlined_call_operand.vmem [shape: f32[1,32], index: 2, kind: input, shape index: {}]
  %s3 = inlined_call_operand.vmem [shape: f32[2,32,32], index: 3, kind: input, shape index: {}]
  %s4 = inlined_call_operand.vmem [shape: f32[2,1,32], index: 4, kind: input, shape index: {}]
  %s5 = inlined_call_operand.vmem [shape: f32[32,32], index: 5, kind: input, shape index: {}]
  %s6 = inlined_call_operand.vmem [shape: f32[1,32], index: 6, kind: input, shape index: {}]
  %s7 = inlined_call_operand.vmem [shape: f32[1,32], index: 7, kind: input, shape index: {}]
  %s8 = inlined_call_operand.vmem [shape: f32[1,32], index: 8, kind: input, shape index: {}]
  %s9 = inlined_call_operand.vmem [shape: f32[32,32], index: 9, kind: input, shape index: {}]
  %s10 = inlined_call_operand.vmem [shape: f32[1,32], index: 10, kind: input, shape index: {}]
  %s11 = inlined_call_operand.vmem [shape: f32[24,32], index: 11, kind: output, shape index: {}]
  %s12 = sld [smem:[#allocation0]]
  $region54: #{_lambda_.9} parent=0
    _
  %s14 = ssub.s32 1, %s12
  %s15 = scalar_select 0, %s14, %s12
  // Predicated region
  $region2: #{_lambda_.9} parent=0 // pred_check
    _
  $region3: #{_lambda_.9} parent=0 // pred_check_branch
    %17 = sbr.rel (0) target = $region5
  $region4: #{_lambda_.9} parent=0 // pred_region
    _
  $region5: #{_lambda_.9} parent=0 // pred_fallthru
    _
  // Predicated region
  $region6: #{_lambda_.9} parent=0 // pred_check
    _
  $region7: #{_lambda_.9} parent=0 // pred_check_branch
    %19 = sbr.rel (0) target = $region9
  $region8: #{_lambda_.9} parent=0 // pred_region
    _
  $region9: #{_lambda_.9} parent=0 // pred_fallthru
    _
  // Predicated region
  $region10: #{_lambda_.9} parent=0 // pred_check
    _
  $region11: #{_lambda_.9} parent=0 // pred_check_branch
    %21 = sbr.rel (0) target = $region13
  $region12: #{_lambda_.9} parent=0 // pred_region
    _
  $region13: #{_lambda_.9} parent=0 // pred_fallthru
    _
  // Predicated region
  $region14: #{_lambda_.9} parent=0 // pred_check
    _
  $region15: #{_lambda_.9} parent=0 // pred_check_branch
    %23 = sbr.rel (0) target = $region17
  $region16: #{_lambda_.9} parent=0 // pred_region
    _
  $region17: #{_lambda_.9} parent=0 // pred_fallthru
    _
  // Predicated region
  $region18: #{_lambda_.9} parent=0 // pred_check
    _
  $region19: #{_lambda_.9} parent=0 // pred_check_branch
    %25 = sbr.rel (0) target = $region21
  $region20: #{_lambda_.9} parent=0 // pred_region
    _
  $region21: #{_lambda_.9} parent=0 // pred_fallthru
    _
  // Predicated region
  $region22: #{_lambda_.9} parent=0 // pred_check
    _
  $region23: #{_lambda_.9} parent=0 // pred_check_branch
    %27 = sbr.rel (0) target = $region25
  $region24: #{_lambda_.9} parent=0 // pred_region
    _
  $region25: #{_lambda_.9} parent=0 // pred_fallthru
    _
  // Predicated region
  $region26: #{_lambda_.9} parent=0 // pred_check
    _
  $region27: #{_lambda_.9} parent=0 // pred_check_branch
    %29 = sbr.rel (0) target = $region29
  $region28: #{_lambda_.9} parent=0 // pred_region
    _
  $region29: #{_lambda_.9} parent=0 // pred_fallthru
    _
  // Predicated region
  $region30: #{_lambda_.9} parent=0 // pred_check
    _
  $region31: #{_lambda_.9} parent=0 // pred_check_branch
    %31 = sbr.rel (0) target = $region33
  $region32: #{_lambda_.9} parent=0 // pred_region
    _
  $region33: #{_lambda_.9} parent=0 // pred_fallthru
    _
  // Predicated region
  $region34: #{_lambda_.9} parent=0 // pred_check
    _
  $region35: #{_lambda_.9} parent=0 // pred_check_branch
    %33 = sbr.rel (0) target = $region37
  $region36: #{_lambda_.9} parent=0 // pred_region
    _
  $region37: #{_lambda_.9} parent=0 // pred_fallthru
    _
  // Predicated region
  $region38: #{_lambda_.9} parent=0 // pred_check
    _
  $region39: #{_lambda_.9} parent=0 // pred_check_branch
    %35 = sbr.rel (0) target = $region41
  $region40: #{_lambda_.9} parent=0 // pred_region
    _
  $region41: #{_lambda_.9} parent=0 // pred_fallthru
    _
  // Predicated region
  $region42: #{_lambda_.9} parent=0 // pred_check
    _
  $region43: #{_lambda_.9} parent=0 // pred_check_branch
    %37 = sbr.rel (0) target = $region45
  $region44: #{_lambda_.9} parent=0 // pred_region
    _
  $region45: #{_lambda_.9} parent=0 // pred_fallthru
    _
  %v38 = vld [vmem:[%s0] sm:$0xff]
  %v39 = vld [vmem:[%s0 + $0x8] sm:$0xff]
  %v40 = vld [vmem:[%s0 + $0x10] sm:$0xff]
  %v41 = vld [vmem:[%s1] sm:$0x1f]
  %v42 = vld [vmem:[%s2] sm:$0x1]
  %v44 = vperm.slane %v42, 0
  %vm46 = vcmask 39936
  %v48 = vsel %vm46, %v38, 0
  %v51 = vsel %vm46, %v39, 0
  %v54 = vsel %vm46, %v40, 0
  %vm56 = vcmask 1044480
  %v58 = vsel %vm56, %v41, 0
  %60 = vmatpush.msra.mxu0 0.0
  %61 = vmatpush.msra.mxu0 0.0
  %62 = vmatpush.msra.mxu0 0.0
  %63 = vmatpush.msra.mxu0 0.0
  %64 = vmatpush.msra.mxu0 0.0
  %65 = vmatpush.msra.mxu0 0.0
  %66 = vmatpush.msra.mxu0 0.0
  %67 = vmatpush.msra.mxu0 0.0
  %68 = vmatpush.msra.mxu0 0.0
  %69 = vmatpush.msra.mxu0 0.0
  %70 = vmatpush.msra.mxu0 0.0
  %71 = vmatpush.msra.mxu0 0.0
  %72 = vmatpush.msra.mxu0 0.0
  %73 = vmatpush.msra.mxu0 0.0
  %74 = vmatpush.msra.mxu0 0.0
  %75 = vmatpush.msra.mxu0 %v58
  %76 = vmatmul.f32.gmra.mxu0 %v48
  %v77 = vpop.f32.mrf.mxu0
  %v78 = vadd.f32 %v44, %v77
  %79 = vmatmul.f32.gmra.mxu0 %v51
  %v80 = vpop.f32.mrf.mxu0
  %v81 = vadd.f32 %v44, %v80
  %82 = vmatmul.f32.gmra.mxu0 %v54
  %v83 = vpop.f32.mrf.mxu0
  %v84 = vadd.f32 %v44, %v83
  %85 = vdwg.mxu0
  %v86 = vtanh.pop %v78
  %v87 = vtanh.pop %v81
  %v88 = vtanh.pop %v84
  %v89 = vld [vmem:[%s3] sm:$0xff]
  %v90 = vld [vmem:[%s3 + $0x8] sm:$0xff]
  %v91 = vld [vmem:[%s3 + $0x10] sm:$0xff]
  %v92 = vld [vmem:[%s3 + $0x18] sm:$0xff]
  %v93 = vld [vmem:[%s4] sm:$0x1]
  %v95 = vperm.slane %v93, 0
  %vm97 = vcmask 261120
  %v99 = vsel %vm97, %v86, 0
  %v102 = vsel %vm97, %v87, 0
  %v105 = vsel %vm97, %v88, 0
  %107 = vmatpush.msra.mxu0 0.0
  %108 = vmatpush.msra.mxu0 0.0
  %109 = vmatpush.msra.mxu0 0.0
  %110 = vmatpush.msra.mxu0 0.0
  %111 = vmatpush.msra.mxu0 0.0
  %112 = vmatpush.msra.mxu0 0.0
  %113 = vmatpush.msra.mxu0 0.0
  %114 = vmatpush.msra.mxu0 0.0
  %115 = vmatpush.msra.mxu0 0.0
  %116 = vmatpush.msra.mxu0 0.0
  %117 = vmatpush.msra.mxu0 0.0
  %118 = vmatpush.msra.mxu0 0.0
  %119 = vmatpush.msra.mxu0 %v92
  %120 = vmatpush.msra.mxu0 %v91
  %121 = vmatpush.msra.mxu0 %v90
  %122 = vmatpush.msra.mxu0 %v89
  %123 = vmatmul.f32.gmra.mxu0 %v99
  %v124 = vpop.f32.mrf.mxu0
  %v125 = vadd.f32 %v95, %v124
  %126 = vmatmul.f32.gmra.mxu0 %v102
  %v127 = vpop.f32.mrf.mxu0
  %v128 = vadd.f32 %v95, %v127
  %129 = vmatmul.f32.gmra.mxu0 %v105
  %v130 = vpop.f32.mrf.mxu0
  %v131 = vadd.f32 %v95, %v130
  %132 = vdwg.mxu0
  %v133 = vtanh.pop %v125
  %v134 = vtanh.pop %v128
  %v135 = vtanh.pop %v131
  %v136 = vadd.f32 %v86, %v133
  %v137 = vadd.f32 %v87, %v134
  %v138 = vadd.f32 %v88, %v135
  %s139 = scalar_lea.vmem %s3, 32
  %v140 = vld [vmem:[%s139] sm:$0xff]
  %v141 = vld [vmem:[%s139 + $0x8] sm:$0xff]
  %v142 = vld [vmem:[%s139 + $0x10] sm:$0xff]
  %v143 = vld [vmem:[%s139 + $0x18] sm:$0xff]
  %s144 = scalar_lea.vmem %s4, 1
  %v145 = vld [vmem:[%s144] sm:$0x1]
  %v147 = vperm.slane %v145, 0
  %v150 = vsel %vm97, %v136, 0
  %v153 = vsel %vm97, %v137, 0
  %v156 = vsel %vm97, %v138, 0
  %158 = vmatpush.msra.mxu0 0.0
  %159 = vmatpush.msra.mxu0 0.0
  %160 = vmatpush.msra.mxu0 0.0
  %161 = vmatpush.msra.mxu0 0.0
  %162 = vmatpush.msra.mxu0 0.0
  %163 = vmatpush.msra.mxu0 0.0
  %164 = vmatpush.msra.mxu0 0.0
  %165 = vmatpush.msra.mxu0 0.0
  %166 = vmatpush.msra.mxu0 0.0
  %167 = vmatpush.msra.mxu0 0.0
  %168 = vmatpush.msra.mxu0 0.0
  %169 = vmatpush.msra.mxu0 0.0
  %170 = vmatpush.msra.mxu0 %v143
  %171 = vmatpush.msra.mxu0 %v142
  %172 = vmatpush.msra.mxu0 %v141
  %173 = vmatpush.msra.mxu0 %v140
  %174 = vmatmul.f32.gmra.mxu0 %v150
  %v175 = vpop.f32.mrf.mxu0
  %v176 = vadd.f32 %v147, %v175
  %177 = vmatmul.f32.gmra.mxu0 %v153
  %v178 = vpop.f32.mrf.mxu0
  %v179 = vadd.f32 %v147, %v178
  %180 = vmatmul.f32.gmra.mxu0 %v156
  %v181 = vpop.f32.mrf.mxu0
  %v182 = vadd.f32 %v147, %v181
  %183 = vdwg.mxu0
  %v184 = vtanh.pop %v176
  %v185 = vtanh.pop %v179
  %v186 = vtanh.pop %v182
  %v187 = vadd.f32 %v136, %v184
  %v188 = vadd.f32 %v137, %v185
  %v189 = vadd.f32 %v138, %v186
  %v190 = vld [vmem:[%s5] sm:$0xff]
  %v191 = vld [vmem:[%s5 + $0x8] sm:$0xff]
  %v192 = vld [vmem:[%s5 + $0x10] sm:$0xff]
  %v193 = vld [vmem:[%s5 + $0x18] sm:$0xff]
  %v194 = vld [vmem:[%s6] sm:$0x1]
  %v196 = vperm.slane %v194, 0
  %v199 = vsel %vm97, %v187, 0
  %v202 = vsel %vm97, %v188, 0
  %v205 = vsel %vm97, %v189, 0
  %207 = vmatpush.msra.mxu0 0.0
  %208 = vmatpush.msra.mxu0 0.0
  %209 = vmatpush.msra.mxu0 0.0
  %210 = vmatpush.msra.mxu0 0.0
  %211 = vmatpush.msra.mxu0 0.0
  %212 = vmatpush.msra.mxu0 0.0
  %213 = vmatpush.msra.mxu0 0.0
  %214 = vmatpush.msra.mxu0 0.0
  %215 = vmatpush.msra.mxu0 0.0
  %216 = vmatpush.msra.mxu0 0.0
  %217 = vmatpush.msra.mxu0 0.0
  %218 = vmatpush.msra.mxu0 0.0
  %219 = vmatpush.msra.mxu0 %v193
  %220 = vmatpush.msra.mxu0 %v192
  %221 = vmatpush.msra.mxu0 %v191
  %222 = vmatpush.msra.mxu0 %v190
  %223 = vmatmul.f32.gmra.mxu0 %v199
  %v224 = vpop.f32.mrf.mxu0
  %v225 = vadd.f32 %v196, %v224
  %226 = vmatmul.f32.gmra.mxu0 %v202
  %v227 = vpop.f32.mrf.mxu0
  %v228 = vadd.f32 %v196, %v227
  %229 = vmatmul.f32.gmra.mxu0 %v205
  %v230 = vpop.f32.mrf.mxu0
  %v231 = vadd.f32 %v196, %v230
  %232 = vdwg.mxu0
  %v233 = vld [vmem:[%s7] sm:$0x1]
  %v234 = vld [vmem:[%s8] sm:$0x1]
  %v235 = vsel %vm97, %v225, 0.0
  %236 = vadd.xlane.f32.xlu0 %v235
  %v237 = vpop.xlane.xlu0 %236
  %v238 = vsel %vm97, %v228, 0.0
  %239 = vadd.xlane.f32.xlu0 %v238
  %v240 = vpop.xlane.xlu0 %239
  %v241 = vsel %vm97, %v231, 0.0
  %242 = vadd.xlane.f32.xlu0 %v241
  %v243 = vpop.xlane.xlu0 %242
  %v244 = vrcp.pop 32.0
  %v245 = vmul.f32 32.0, %v244
  %v246 = vsub.f32 1.0, %v245
  %v247 = vmul.f32 %v244, %v246
  %v248 = vadd.f32 %v244, %v247
  %vm249 = vweird.f32 %v244
  %v250 = vsel %vm249, %v244, %v248
  %v251 = vmul.f32 %v237, %v250
  %v252 = vmul.f32 %v240, %v250
  %v253 = vmul.f32 %v243, %v250
  %v254 = vsub.f32 %v225, %v251
  %v255 = vsub.f32 %v228, %v252
  %v256 = vsub.f32 %v231, %v253
  %v257 = vmul.f32 %v254, %v254
  %v258 = vmul.f32 %v255, %v255
  %v259 = vmul.f32 %v256, %v256
  %v260 = vsel %vm97, %v257, 0.0
  %261 = vadd.xlane.f32.xlu0 %v260
  %v262 = vpop.xlane.xlu0 %261
  %v263 = vsel %vm97, %v258, 0.0
  %264 = vadd.xlane.f32.xlu0 %v263
  %v265 = vpop.xlane.xlu0 %264
  %v266 = vsel %vm97, %v259, 0.0
  %267 = vadd.xlane.f32.xlu0 %v266
  %v268 = vpop.xlane.xlu0 %267
  %v269 = vmul.f32 %v262, %v250
  %v270 = vmul.f32 %v265, %v250
  %v271 = vmul.f32 %v268, %v250
  %v272 = vadd.f32 %v269, 1e-05
  %v273 = vadd.f32 %v270, 1e-05
  %v274 = vadd.f32 %v271, 1e-05
  %v275 = vrsqrt.pop %v272
  %v276 = vmul.f32 %v275, %v272
  %v277 = vmul.f32 %v276, %v275
  %v278 = vmul.f32 0.5, %v277
  %v279 = vsub.f32 1.5, %v278
  %v280 = vmul.f32 %v275, %v279
  %vm281 = vweird.f32 %v272
  %vm282 = vweird.f32 %v275
  %vm283 = vmor %vm281, %vm282
  %v284 = vsel %vm283, %v275, %v280
  %v285 = vrsqrt.pop %v273
  %v286 = vmul.f32 %v285, %v273
  %v287 = vmul.f32 %v286, %v285
  %v288 = vmul.f32 0.5, %v287
  %v289 = vsub.f32 1.5, %v288
  %v290 = vmul.f32 %v285, %v289
  %vm291 = vweird.f32 %v273
  %vm292 = vweird.f32 %v285
  %vm293 = vmor %vm291, %vm292
  %v294 = vsel %vm293, %v285, %v290
  %v295 = vrsqrt.pop %v274
  %v296 = vmul.f32 %v295, %v274
  %v297 = vmul.f32 %v296, %v295
  %v298 = vmul.f32 0.5, %v297
  %v299 = vsub.f32 1.5, %v298
  %v300 = vmul.f32 %v295, %v299
  %vm301 = vweird.f32 %v274
  %vm302 = vweird.f32 %v295
  %vm303 = vmor %vm301, %vm302
  %v304 = vsel %vm303, %v295, %v300
  %v305 = vmul.f32 %v254, %v284
  %v306 = vmul.f32 %v255, %v294
  %v307 = vmul.f32 %v256, %v304
  %v309 = vperm.slane %v233, 0
  %v311 = vmul.f32 %v305, %v309
  %v312 = vmul.f32 %v306, %v309
  %v313 = vmul.f32 %v307, %v309
  %v315 = vperm.slane %v234, 0
  %v317 = vadd.f32 %v311, %v315
  %v318 = vadd.f32 %v312, %v315
  %v319 = vadd.f32 %v313, %v315
  %v320 = vld [vmem:[%s9] sm:$0xff]
  %v321 = vld [vmem:[%s9 + $0x8] sm:$0xff]
  %v322 = vld [vmem:[%s9 + $0x10] sm:$0xff]
  %v323 = vld [vmem:[%s9 + $0x18] sm:$0xff]
  %v324 = vld [vmem:[%s10] sm:$0x1]
  %v326 = vperm.slane %v324, 0
  %v329 = vsel %vm97, %v317, 0
  %v332 = vsel %vm97, %v318, 0
  %v335 = vsel %vm97, %v319, 0
  %337 = vmatpush.msra.mxu0 0.0
  %338 = vmatpush.msra.mxu0 0.0
  %339 = vmatpush.msra.mxu0 0.0
  %340 = vmatpush.msra.mxu0 0.0
  %341 = vmatpush.msra.mxu0 0.0
  %342 = vmatpush.msra.mxu0 0.0
  %343 = vmatpush.msra.mxu0 0.0
  %344 = vmatpush.msra.mxu0 0.0
  %345 = vmatpush.msra.mxu0 0.0
  %346 = vmatpush.msra.mxu0 0.0
  %347 = vmatpush.msra.mxu0 0.0
  %348 = vmatpush.msra.mxu0 0.0
  %349 = vmatpush.msra.mxu0 %v323
  %350 = vmatpush.msra.mxu0 %v322
  %351 = vmatpush.msra.mxu0 %v321
  %352 = vmatpush.msra.mxu0 %v320
  %353 = vmatmul.f32.gmra.mxu0 %v329
  %v354 = vpop.f32.mrf.mxu0
  %v355 = vadd.f32 %v326, %v354
  %356 = vmatmul.f32.gmra.mxu0 %v332
  %v357 = vpop.f32.mrf.mxu0
  %v358 = vadd.f32 %v326, %v357
  %359 = vmatmul.f32.gmra.mxu0 %v335
  %v360 = vpop.f32.mrf.mxu0
  %v361 = vadd.f32 %v326, %v360
  %362 = vdwg.mxu0
  %363 = vst.msk [vmem:[%s11] sm:$0xff] %vm97, %v355
  %364 = vst.msk [vmem:[%s11 + $0x8] sm:$0xff] %vm97, %v358
  %365 = vst.msk [vmem:[%s11 + $0x10] sm:$0xff] %vm97, %v361
  // Predicated region
  $region46: #{_lambda_.9} parent=0 // pred_check
    _
  $region47: #{_lambda_.9} parent=0 // pred_check_branch
    %367 = sbr.rel (0) target = $region49
  $region48: #{_lambda_.9} parent=0 // pred_region
    _
  $region49: #{_lambda_.9} parent=0 // pred_fallthru
    _
  // Predicated region
  $region50: #{_lambda_.9} parent=0 // pred_check
    _
  $region51: #{_lambda_.9} parent=0 // pred_check_branch
    %369 = sbr.rel (0) target = $region53
  $region52: #{_lambda_.9} parent=0 // pred_region
    _
  $region53: #{_lambda_.9} parent=0 // pred_fallthru
    _

// kernel: _lambda_.13
$region0: #{_lambda_.13}
  #allocation0 [shape = 'u32[]', space=smem, size = 0x4, offset = 0x4, fixed_abs, tag = 'smem constant byte address 0x4 - core index']
  #allocation1 [shape = 'u32[72,128]{1,0:T(1,128)}', space=vmem, size = 0x9000, scoped, tag = 'internal scratch']
  #allocation2 [shape = 'f32[1,1]{1,0:T(1,128)S(1)}', space=vmem, size = 0x200, scoped, tag = 'scoped memory for _lambda_.13']
  %s0 = inlined_call_operand.vmem [shape: f32[2,16,8], index: 0, kind: input, shape index: {}]
  %s1 = inlined_call_operand.vmem [shape: f32[2,8,32], index: 1, kind: input, shape index: {}]
  %s2 = inlined_call_operand.vmem [shape: f32[32,32], index: 2, kind: input, shape index: {}]
  %s3 = inlined_call_operand.vmem [shape: f32[1,32], index: 3, kind: input, shape index: {}]
  %s4 = inlined_call_operand.vmem [shape: f32[32,32], index: 4, kind: input, shape index: {}]
  %s5 = inlined_call_operand.vmem [shape: f32[1,32], index: 5, kind: input, shape index: {}]
  %s6 = inlined_call_operand.vmem [shape: f32[2,32,32], index: 6, kind: input, shape index: {}]
  %s7 = inlined_call_operand.vmem [shape: f32[2,1,32], index: 7, kind: input, shape index: {}]
  %s8 = inlined_call_operand.vmem [shape: f32[32,1], index: 8, kind: input, shape index: {}]
  %s9 = inlined_call_operand.<no memory space> [shape: f32[1,1], index: 9, kind: input, shape index: {}]
  %s10 = inlined_call_operand.vmem [shape: f32[2,16,1], index: 10, kind: output, shape index: {}]
  %s11 = sld [smem:[#allocation0]]
  $region73: #{_lambda_.13} parent=0
    _
  %s13 = ssub.s32 1, %s11
  %s14 = scalar_select 0, %s13, %s11
  %v15 = vstv %s9
  %16 = vst [vmem:[#allocation2] sm:$0x1] %v15
  loop: start=0, step=1, limit=4
  $region2: #{_lambda_.13} parent=0 // loop_pre_header
    _
  $region3: #{_lambda_.13} parent=0 // loop_header
    %s18 = sphi 0, %s22
    %p19 = scmp.ge.s32.totalorder %s18, 4
    %s25 = sphi 0, %s37
    %s26 = sphi 0, %s33
    %s27 = sphi 0, %s25
    %s28 = sphi 0, %s26
    %s29 = sphi 0, %s27
    %s30 = sphi 0, %s28
    %s42 = sphi 0, %s44
    %s45 = sphi 0, %s42
    %s46 = sphi 0, %s45
    %s62 = sphi 0, %s46
    %s68 = sphi 0, %s70
    %s71 = sphi 0, %s68
    %s72 = sphi 0, %s71
    %s88 = sphi 0, %s72
    %s92 = sphi 0, %s92
    %s94 = sphi 0, %s92
    %s95 = sphi 0, %s94
    %s109 = sphi 0, %s95
    %s113 = sphi 0, %s113
    %s115 = sphi 0, %s113
    %s116 = sphi 0, %s115
    %s130 = sphi 0, %s116
    %s134 = sphi 0, %s134
    %s136 = sphi 0, %s134
    %s137 = sphi 0, %s136
    %s151 = sphi 0, %s137
    %s155 = sphi 0, %s155
    %s157 = sphi 0, %s155
    %s158 = sphi 0, %s157
    %s172 = sphi 0, %s158
    %s176 = sphi 0, %s176
    %s178 = sphi 0, %s176
    %s179 = sphi 0, %s178
    %s193 = sphi 0, %s179
    %s197 = sphi 0, %s197
    %s199 = sphi 0, %s197
    %s200 = sphi 0, %s199
    %s214 = sphi 0, %s200
    %s218 = sphi 0, %s218
    %s220 = sphi 0, %s218
    %s221 = sphi 0, %s220
    %s235 = sphi 0, %s221
    %s239 = sphi 0, %s239
    %s241 = sphi 0, %s239
    %s242 = sphi 0, %s241
    %s256 = sphi 0, %s242
    %s264 = sphi 0, %s266
    %s267 = sphi 0, %s264
    %s268 = sphi 0, %s267
    %s284 = sphi 0, %s268
  $region4: #{_lambda_.13} parent=0 // loop_header_branch
    %21 = sbr.rel (%p19) target = $region8
  $region5: #{_lambda_.13} parent=0 // loop_body
    %s23 = ssub.s32 %s18, 1
    %s24 = ssub.s32 %s18, 2
    %s31 = sadd.s32 1, %s26
    %p32 = scmp.ge.s32.totalorder %s31, 1
    %s33 = scalar_select %p32, 0, %s31
    %s34 = sadd.s32 1, %s25
    %s35 = scalar_select %p32, %s34, %s25
    %p36 = scmp.ge.s32.totalorder %s35, 2
    %s37 = scalar_select %p36, 0, %s35
    %s38 = ssub.s32 %s25, %s37
    %s39 = ssub.s32 %s26, %s33
    %s40 = sor.u32 %s38, %s39
    %p41 = scmp.eq.s32.totalorder %s40, 0
    %s43 = sadd.s32 %s42, 1
    %s44 = scalar_select %p41, %s42, %s43
    %p47 = pneg %p41
    %p48 = scmp.eq.s32.totalorder %s18, 1
    %p49 = por %p47, %p48
    %p50 = scmp.ne.s32.totalorder %s42, %s45
    %p51 = scmp.eq.s32.totalorder %s18, 0
    %p52 = por %p50, %p51
    %p53 = scmp.ne.s32.totalorder %s42, %s45
    %p54 = scmp.eq.s32.totalorder %s23, 1
    %p55 = por %p53, %p54
    %p56 = scmp.ne.s32.totalorder %s45, %s46
    %p57 = scmp.eq.s32.totalorder %s23, 0
    %p58 = por %p56, %p57
    %p59 = scmp.ne.s32.totalorder %s45, %s46
    %p60 = scmp.eq.s32.totalorder %s24, 1
    %p61 = por %p59, %p60
    %p63 = scmp.ne.s32.totalorder %s46, %s62
    %p64 = scmp.eq.s32.totalorder %s24, 0
    %p65 = por %p63, %p64
    %s66 = ssub.s32 %s25, %s37
    %p67 = scmp.eq.s32.totalorder %s66, 0
    %s69 = sadd.s32 %s68, 1
    %s70 = scalar_select %p67, %s68, %s69
    %p73 = pneg %p67
    %p74 = scmp.eq.s32.totalorder %s18, 1
    %p75 = por %p73, %p74
    %p76 = scmp.ne.s32.totalorder %s68, %s71
    %p77 = scmp.eq.s32.totalorder %s18, 0
    %p78 = por %p76, %p77
    %p79 = scmp.ne.s32.totalorder %s68, %s71
    %p80 = scmp.eq.s32.totalorder %s23, 1
    %p81 = por %p79, %p80
    %p82 = scmp.ne.s32.totalorder %s71, %s72
    %p83 = scmp.eq.s32.totalorder %s23, 0
    %p84 = por %p82, %p83
    %p85 = scmp.ne.s32.totalorder %s71, %s72
    %p86 = scmp.eq.s32.totalorder %s24, 1
    %p87 = por %p85, %p86
    %p89 = scmp.ne.s32.totalorder %s72, %s88
    %p90 = scmp.eq.s32.totalorder %s24, 0
    %p91 = por %p89, %p90
    %s93 = sadd.s32 %s92, 1
    %p96 = scmp.eq.s32.totalorder %s18, 1
    %p97 = scmp.ne.s32.totalorder %s92, %s94
    %p98 = scmp.eq.s32.totalorder %s18, 0
    %p99 = por %p97, %p98
    %p100 = scmp.ne.s32.totalorder %s92, %s94
    %p101 = scmp.eq.s32.totalorder %s23, 1
    %p102 = por %p100, %p101
    %p103 = scmp.ne.s32.totalorder %s94, %s95
    %p104 = scmp.eq.s32.totalorder %s23, 0
    %p105 = por %p103, %p104
    %p106 = scmp.ne.s32.totalorder %s94, %s95
    %p107 = scmp.eq.s32.totalorder %s24, 1
    %p108 = por %p106, %p107
    %p110 = scmp.ne.s32.totalorder %s95, %s109
    %p111 = scmp.eq.s32.totalorder %s24, 0
    %p112 = por %p110, %p111
    %s114 = sadd.s32 %s113, 1
    %p117 = scmp.eq.s32.totalorder %s18, 1
    %p118 = scmp.ne.s32.totalorder %s113, %s115
    %p119 = scmp.eq.s32.totalorder %s18, 0
    %p120 = por %p118, %p119
    %p121 = scmp.ne.s32.totalorder %s113, %s115
    %p122 = scmp.eq.s32.totalorder %s23, 1
    %p123 = por %p121, %p122
    %p124 = scmp.ne.s32.totalorder %s115, %s116
    %p125 = scmp.eq.s32.totalorder %s23, 0
    %p126 = por %p124, %p125
    %p127 = scmp.ne.s32.totalorder %s115, %s116
    %p128 = scmp.eq.s32.totalorder %s24, 1
    %p129 = por %p127, %p128
    %p131 = scmp.ne.s32.totalorder %s116, %s130
    %p132 = scmp.eq.s32.totalorder %s24, 0
    %p133 = por %p131, %p132
    %s135 = sadd.s32 %s134, 1
    %p138 = scmp.eq.s32.totalorder %s18, 1
    %p139 = scmp.ne.s32.totalorder %s134, %s136
    %p140 = scmp.eq.s32.totalorder %s18, 0
    %p141 = por %p139, %p140
    %p142 = scmp.ne.s32.totalorder %s134, %s136
    %p143 = scmp.eq.s32.totalorder %s23, 1
    %p144 = por %p142, %p143
    %p145 = scmp.ne.s32.totalorder %s136, %s137
    %p146 = scmp.eq.s32.totalorder %s23, 0
    %p147 = por %p145, %p146
    %p148 = scmp.ne.s32.totalorder %s136, %s137
    %p149 = scmp.eq.s32.totalorder %s24, 1
    %p150 = por %p148, %p149
    %p152 = scmp.ne.s32.totalorder %s137, %s151
    %p153 = scmp.eq.s32.totalorder %s24, 0
    %p154 = por %p152, %p153
    %s156 = sadd.s32 %s155, 1
    %p159 = scmp.eq.s32.totalorder %s18, 1
    %p160 = scmp.ne.s32.totalorder %s155, %s157
    %p161 = scmp.eq.s32.totalorder %s18, 0
    %p162 = por %p160, %p161
    %p163 = scmp.ne.s32.totalorder %s155, %s157
    %p164 = scmp.eq.s32.totalorder %s23, 1
    %p165 = por %p163, %p164
    %p166 = scmp.ne.s32.totalorder %s157, %s158
    %p167 = scmp.eq.s32.totalorder %s23, 0
    %p168 = por %p166, %p167
    %p169 = scmp.ne.s32.totalorder %s157, %s158
    %p170 = scmp.eq.s32.totalorder %s24, 1
    %p171 = por %p169, %p170
    %p173 = scmp.ne.s32.totalorder %s158, %s172
    %p174 = scmp.eq.s32.totalorder %s24, 0
    %p175 = por %p173, %p174
    %s177 = sadd.s32 %s176, 1
    %p180 = scmp.eq.s32.totalorder %s18, 1
    %p181 = scmp.ne.s32.totalorder %s176, %s178
    %p182 = scmp.eq.s32.totalorder %s18, 0
    %p183 = por %p181, %p182
    %p184 = scmp.ne.s32.totalorder %s176, %s178
    %p185 = scmp.eq.s32.totalorder %s23, 1
    %p186 = por %p184, %p185
    %p187 = scmp.ne.s32.totalorder %s178, %s179
    %p188 = scmp.eq.s32.totalorder %s23, 0
    %p189 = por %p187, %p188
    %p190 = scmp.ne.s32.totalorder %s178, %s179
    %p191 = scmp.eq.s32.totalorder %s24, 1
    %p192 = por %p190, %p191
    %p194 = scmp.ne.s32.totalorder %s179, %s193
    %p195 = scmp.eq.s32.totalorder %s24, 0
    %p196 = por %p194, %p195
    %s198 = sadd.s32 %s197, 1
    %p201 = scmp.eq.s32.totalorder %s18, 1
    %p202 = scmp.ne.s32.totalorder %s197, %s199
    %p203 = scmp.eq.s32.totalorder %s18, 0
    %p204 = por %p202, %p203
    %p205 = scmp.ne.s32.totalorder %s197, %s199
    %p206 = scmp.eq.s32.totalorder %s23, 1
    %p207 = por %p205, %p206
    %p208 = scmp.ne.s32.totalorder %s199, %s200
    %p209 = scmp.eq.s32.totalorder %s23, 0
    %p210 = por %p208, %p209
    %p211 = scmp.ne.s32.totalorder %s199, %s200
    %p212 = scmp.eq.s32.totalorder %s24, 1
    %p213 = por %p211, %p212
    %p215 = scmp.ne.s32.totalorder %s200, %s214
    %p216 = scmp.eq.s32.totalorder %s24, 0
    %p217 = por %p215, %p216
    %s219 = sadd.s32 %s218, 1
    %p222 = scmp.eq.s32.totalorder %s18, 1
    %p223 = scmp.ne.s32.totalorder %s218, %s220
    %p224 = scmp.eq.s32.totalorder %s18, 0
    %p225 = por %p223, %p224
    %p226 = scmp.ne.s32.totalorder %s218, %s220
    %p227 = scmp.eq.s32.totalorder %s23, 1
    %p228 = por %p226, %p227
    %p229 = scmp.ne.s32.totalorder %s220, %s221
    %p230 = scmp.eq.s32.totalorder %s23, 0
    %p231 = por %p229, %p230
    %p232 = scmp.ne.s32.totalorder %s220, %s221
    %p233 = scmp.eq.s32.totalorder %s24, 1
    %p234 = por %p232, %p233
    %p236 = scmp.ne.s32.totalorder %s221, %s235
    %p237 = scmp.eq.s32.totalorder %s24, 0
    %p238 = por %p236, %p237
    %s240 = sadd.s32 %s239, 1
    %p243 = scmp.eq.s32.totalorder %s18, 1
    %p244 = scmp.ne.s32.totalorder %s239, %s241
    %p245 = scmp.eq.s32.totalorder %s18, 0
    %p246 = por %p244, %p245
    %p247 = scmp.ne.s32.totalorder %s239, %s241
    %p248 = scmp.eq.s32.totalorder %s23, 1
    %p249 = por %p247, %p248
    %p250 = scmp.ne.s32.totalorder %s241, %s242
    %p251 = scmp.eq.s32.totalorder %s23, 0
    %p252 = por %p250, %p251
    %p253 = scmp.ne.s32.totalorder %s241, %s242
    %p254 = scmp.eq.s32.totalorder %s24, 1
    %p255 = por %p253, %p254
    %p257 = scmp.ne.s32.totalorder %s242, %s256
    %p258 = scmp.eq.s32.totalorder %s24, 0
    %p259 = por %p257, %p258
    %s260 = ssub.s32 %s25, %s37
    %s261 = ssub.s32 %s26, %s33
    %s262 = sor.u32 %s260, %s261
    %p263 = scmp.eq.s32.totalorder %s262, 0
    %s265 = sadd.s32 %s264, 1
    %s266 = scalar_select %p263, %s264, %s265
    %p269 = pneg %p263
    %p270 = scmp.eq.s32.totalorder %s18, 1
    %p271 = por %p269, %p270
    %p272 = scmp.ne.s32.totalorder %s264, %s267
    %p273 = scmp.eq.s32.totalorder %s18, 0
    %p274 = por %p272, %p273
    %p275 = scmp.ne.s32.totalorder %s264, %s267
    %p276 = scmp.eq.s32.totalorder %s23, 1
    %p277 = por %p275, %p276
    %p278 = scmp.ne.s32.totalorder %s267, %s268
    %p279 = scmp.eq.s32.totalorder %s23, 0
    %p280 = por %p278, %p279
    %p281 = scmp.ne.s32.totalorder %s267, %s268
    %p282 = scmp.eq.s32.totalorder %s24, 1
    %p283 = por %p281, %p282
    %p285 = scmp.ne.s32.totalorder %s268, %s284
    %p286 = scmp.eq.s32.totalorder %s24, 0
    %p287 = por %p285, %p286
    %p288 = scmp.le.s32.totalorder 1, %s18
    %p289 = scmp.lt.s32.totalorder %s18, 3
    %p290 = pnand %p288, %p289
    %p291 = pneg %p290
    // Predicated region
    $region9: #{_lambda_.13} parent=5 // pred_check
      _
    $region10: #{_lambda_.13} parent=5 // pred_check_branch
      %293 = sbr.rel (%p290) target = $region12
    $region11: #{_lambda_.13} parent=5 // pred_region
      %s294 = ssub.s32 %s18, 1
      // Predicated region
      $region13: #{_lambda_.13} parent=11 // pred_check
        %p295 = pneg %p105
      $region14: #{_lambda_.13} parent=11 // pred_check_branch
        %297 = sbr.rel (%p295) target = $region16
      $region15: #{_lambda_.13} parent=11 // pred_region
        _
      $region16: #{_lambda_.13} parent=11 // pred_fallthru
        _
      // Predicated region
      $region17: #{_lambda_.13} parent=11 // pred_check
        %p298 = pneg %p126
      $region18: #{_lambda_.13} parent=11 // pred_check_branch
        %300 = sbr.rel (%p298) target = $region20
      $region19: #{_lambda_.13} parent=11 // pred_region
        _
      $region20: #{_lambda_.13} parent=11 // pred_fallthru
        _
      // Predicated region
      $region21: #{_lambda_.13} parent=11 // pred_check
        %p301 = pneg %p147
      $region22: #{_lambda_.13} parent=11 // pred_check_branch
        %303 = sbr.rel (%p301) target = $region24
      $region23: #{_lambda_.13} parent=11 // pred_region
        _
      $region24: #{_lambda_.13} parent=11 // pred_fallthru
        _
      // Predicated region
      $region25: #{_lambda_.13} parent=11 // pred_check
        %p304 = pneg %p168
      $region26: #{_lambda_.13} parent=11 // pred_check_branch
        %306 = sbr.rel (%p304) target = $region28
      $region27: #{_lambda_.13} parent=11 // pred_region
        _
      $region28: #{_lambda_.13} parent=11 // pred_fallthru
        _
      // Predicated region
      $region29: #{_lambda_.13} parent=11 // pred_check
        %p307 = pneg %p189
      $region30: #{_lambda_.13} parent=11 // pred_check_branch
        %309 = sbr.rel (%p307) target = $region32
      $region31: #{_lambda_.13} parent=11 // pred_region
        _
      $region32: #{_lambda_.13} parent=11 // pred_fallthru
        _
      // Predicated region
      $region33: #{_lambda_.13} parent=11 // pred_check
        %p310 = pneg %p210
      $region34: #{_lambda_.13} parent=11 // pred_check_branch
        %312 = sbr.rel (%p310) target = $region36
      $region35: #{_lambda_.13} parent=11 // pred_region
        _
      $region36: #{_lambda_.13} parent=11 // pred_fallthru
        _
      // Predicated region
      $region37: #{_lambda_.13} parent=11 // pred_check
        %p313 = pneg %p231
      $region38: #{_lambda_.13} parent=11 // pred_check_branch
        %315 = sbr.rel (%p313) target = $region40
      $region39: #{_lambda_.13} parent=11 // pred_region
        _
      $region40: #{_lambda_.13} parent=11 // pred_fallthru
        _
      // Predicated region
      $region41: #{_lambda_.13} parent=11 // pred_check
        %p316 = pneg %p252
      $region42: #{_lambda_.13} parent=11 // pred_check_branch
        %318 = sbr.rel (%p316) target = $region44
      $region43: #{_lambda_.13} parent=11 // pred_region
        _
      $region44: #{_lambda_.13} parent=11 // pred_fallthru
        _
    $region12: #{_lambda_.13} parent=5 // pred_fallthru
      _
    %p319 = scmp.lt.s32.totalorder %s18, 2
    // Predicated region
    $region45: #{_lambda_.13} parent=5 // pred_check
      %p320 = pneg %p319
    $region46: #{_lambda_.13} parent=5 // pred_check_branch
      %322 = sbr.rel (%p320) target = $region48
    $region47: #{_lambda_.13} parent=5 // pred_region
      // Predicated region
      $region49: #{_lambda_.13} parent=47 // pred_check
        %p323 = pneg %p52
      $region50: #{_lambda_.13} parent=47 // pred_check_branch
        %325 = sbr.rel (%p323) target = $region52
      $region51: #{_lambda_.13} parent=47 // pred_region
        %s326 = smul.u32 2, %s26
        %p327 = scmp.lt.s32.totalorder %s25, 1
        %s328 = scalar_select %p327, %s25, 1
        %p329 = scmp.lt.s32.totalorder %s326, 1
        %s330 = scalar_select %p329, %s326, 1
        %s331 = smul.addr %s328, 2
        %s332 = sadd.s32 %s330, %s331
        %s333 = smul.addr %s332, 8
        %s334 = scalar_lea.vmem %s0, %s333
        %s335 = smul.u32 2, %s26
      $region52: #{_lambda_.13} parent=47 // pred_fallthru
        _
      // Predicated region
      $region53: #{_lambda_.13} parent=47 // pred_check
        %p336 = pneg %p78
      $region54: #{_lambda_.13} parent=47 // pred_check_branch
        %338 = sbr.rel (%p336) target = $region56
      $region55: #{_lambda_.13} parent=47 // pred_region
        %p339 = scmp.lt.s32.totalorder %s25, 1
        %s340 = scalar_select %p339, %s25, 1
        %s341 = smul.addr %s340, 8
        %s342 = scalar_lea.vmem %s1, %s341
      $region56: #{_lambda_.13} parent=47 // pred_fallthru
        _
    $region48: #{_lambda_.13} parent=5 // pred_fallthru
      _
    %p343 = scmp.le.s32.totalorder 1, %s18
    %p344 = scmp.lt.s32.totalorder %s18, 3
    %p345 = pnand %p343, %p344
    %p346 = pneg %p345
    // Predicated region
    $region57: #{_lambda_.13} parent=5 // pred_check
      _
    $region58: #{_lambda_.13} parent=5 // pred_check_branch
      %348 = sbr.rel (%p345) target = $region60
    $region59: #{_lambda_.13} parent=5 // pred_region
      %s349 = ssub.s32 %s18, 1
      %s350 = smul.u32 2, %s28
      %p351 = scmp.lt.s32.totalorder %s27, 1
      %s352 = scalar_select %p351, %s27, 1
      %p353 = scmp.lt.s32.totalorder %s350, 1
      %s354 = scalar_select %p353, %s350, 1
      %s355 = smul.addr %s352, 2
      %s356 = sadd.s32 %s354, %s355
      %s357 = smul.addr %s356, 8
      %s358 = scalar_lea.vmem %s0, %s357
      %p359 = pneg %p58
      %p360 = pneg %p55
      %p361 = scmp.lt.s32.totalorder %s27, 1
      %s362 = scalar_select %p361, %s27, 1
      %s363 = smul.addr %s362, 8
      %s364 = scalar_lea.vmem %s1, %s363
      %p365 = pneg %p84
      %p366 = pneg %p81
      %p367 = pneg %p105
      %p368 = pneg %p102
      %p369 = pneg %p126
      %p370 = pneg %p123
      %p371 = pneg %p147
      %p372 = pneg %p144
      %p373 = pneg %p168
      %p374 = pneg %p165
      %p375 = pneg %p189
      %p376 = pneg %p186
      %p377 = pneg %p210
      %p378 = pneg %p207
      %p379 = pneg %p231
      %p380 = pneg %p228
      %p381 = pneg %p252
      %p382 = pneg %p249
      %p383 = pneg %p280
      %p384 = pneg %p277
      %s385 = smul.u32 2, %s28
      %p386 = scmp.lt.s32.totalorder %s27, 1
      %s387 = scalar_select %p386, %s27, 1
      %p388 = scmp.lt.s32.totalorder %s385, 1
      %s389 = scalar_select %p388, %s385, 1
      %s390 = smul.addr %s387, 2
      %s391 = sadd.s32 %s389, %s390
      %s392 = smul.addr %s391, 8
      %s393 = scalar_lea.vmem %s10, %s392
      %s394 = smul.u32 2, %s28
      %p395 = scmp.lt.s32.totalorder %s27, 1
      %s396 = scalar_select %p395, %s27, 1
      %p397 = scmp.lt.s32.totalorder %s394, 1
      %s398 = scalar_select %p397, %s394, 1
      %s399 = smul.addr %s396, 2
      %s400 = sadd.s32 %s398, %s399
      %s401 = smul.addr %s400, 8
      %s402 = scalar_lea.vmem %s0, %s401
      %s403 = smul.u32 2, %s28
      %p404 = scmp.lt.s32.totalorder %s27, 1
      %s405 = scalar_select %p404, %s27, 1
      %s406 = smul.addr %s405, 8
      %s407 = scalar_lea.vmem %s1, %s406
      %s408 = smul.u32 2, %s28
      %p409 = scmp.lt.s32.totalorder %s27, 1
      %s410 = scalar_select %p409, %s27, 1
      %p411 = scmp.lt.s32.totalorder %s408, 1
      %s412 = scalar_select %p411, %s408, 1
      %s413 = smul.addr %s410, 2
      %s414 = sadd.s32 %s412, %s413
      %s415 = smul.addr %s414, 8
      %s416 = scalar_lea.vmem %s10, %s415
      %s417 = smul.u32 2, %s28
      %v418 = vld [vmem:[%s407] sm:$0xff]
      %v419 = vld [vmem:[%s2] sm:$0xff]
      %v420 = vld [vmem:[%s2 + $0x8] sm:$0xff]
      %v421 = vld [vmem:[%s2 + $0x10] sm:$0xff]
      %v422 = vld [vmem:[%s2 + $0x18] sm:$0xff]
      %v423 = vld [vmem:[%s3] sm:$0x1]
      %v425 = vperm.slane %v423, 0
      %vm427 = vcmask 261120
      %v429 = vsel %vm427, %v418, 0
      %431 = vmatpush.msra.mxu0 0.0
      %432 = vmatpush.msra.mxu0 0.0
      %433 = vmatpush.msra.mxu0 0.0
      %434 = vmatpush.msra.mxu0 0.0
      %435 = vmatpush.msra.mxu0 0.0
      %436 = vmatpush.msra.mxu0 0.0
      %437 = vmatpush.msra.mxu0 0.0
      %438 = vmatpush.msra.mxu0 0.0
      %439 = vmatpush.msra.mxu0 0.0
      %440 = vmatpush.msra.mxu0 0.0
      %441 = vmatpush.msra.mxu0 0.0
      %442 = vmatpush.msra.mxu0 0.0
      %443 = vmatpush.msra.mxu0 %v422
      %444 = vmatpush.msra.mxu0 %v421
      %445 = vmatpush.msra.mxu0 %v420
      %446 = vmatpush.msra.mxu0 %v419
      %447 = vmatmul.f32.gmra.mxu0 %v429
      %v448 = vpop.f32.mrf.mxu0
      %v449 = vadd.f32 %v425, %v448
      %450 = vdwg.mxu0
      %v451 = vld [vmem:[%s402] sm:$0xff]
      %v452 = vld [vmem:[%s402 + $0x8] sm:$0xff]
      %vm453 = vcmask 64512
      %v454 = vsel %vm453, %v451, -inf
      %455 = vmax.xlane.f32.xlu0 %v454
      %v456 = vpop.xlane.xlu0 %455
      %v457 = vsel %vm453, %v452, -inf
      %458 = vmax.xlane.f32.xlu0 %v457
      %v459 = vpop.xlane.xlu0 %458
      %v460 = vsub.f32 %v451, %v456
      %v461 = vsub.f32 %v452, %v459
      %v462 = vmul.f32 %v460, 1.442695
      %v463 = vpow.pop %v462
      %v464 = vmul.f32 %v461, 1.442695
      %v465 = vpow.pop %v464
      %v466 = vsel %vm453, %v463, 0.0
      %467 = vadd.xlane.f32.xlu0 %v466
      %v468 = vpop.xlane.xlu0 %467
      %v469 = vsel %vm453, %v465, 0.0
      %470 = vadd.xlane.f32.xlu0 %v469
      %v471 = vpop.xlane.xlu0 %470
      %v472 = vrcp.pop %v468
      %v473 = vmul.f32 %v468, %v472
      %v474 = vsub.f32 1.0, %v473
      %v475 = vmul.f32 %v472, %v474
      %v476 = vadd.f32 %v472, %v475
      %vm477 = vweird.f32 %v468
      %vm478 = vweird.f32 %v472
      %vm479 = vmor %vm477, %vm478
      %v480 = vsel %vm479, %v472, %v476
      %v481 = vand.u32 2147483647, %v468
      %vm482 = vcmp.eq.f32.partialorder %v481, 8.507059e+37
      %v483 = vand.u32 %v468, 2147483648
      %v484 = vor.u32 1.1754944e-38, %v483
      %v485 = vsel %vm482, %v484, %v480
      %v486 = vmul.f32 %v463, %v485
      %v487 = vrcp.pop %v471
      %v488 = vmul.f32 %v471, %v487
      %v489 = vsub.f32 1.0, %v488
      %v490 = vmul.f32 %v487, %v489
      %v491 = vadd.f32 %v487, %v490
      %vm492 = vweird.f32 %v471
      %vm493 = vweird.f32 %v487
      %vm494 = vmor %vm492, %vm493
      %v495 = vsel %vm494, %v487, %v491
      %v496 = vand.u32 2147483647, %v471
      %vm497 = vcmp.eq.f32.partialorder %v496, 8.507059e+37
      %v498 = vand.u32 %v471, 2147483648
      %v499 = vor.u32 1.1754944e-38, %v498
      %v500 = vsel %vm497, %v499, %v495
      %v501 = vmul.f32 %v465, %v500
      %v503 = vsel %vm453, %v486, 0
      %v506 = vsel %vm453, %v501, 0
      %508 = vmatpush.msra.mxu0 0.0
      %509 = vmatpush.msra.mxu0 0.0
      %510 = vmatpush.msra.mxu0 0.0
      %511 = vmatpush.msra.mxu0 0.0
      %512 = vmatpush.msra.mxu0 0.0
      %513 = vmatpush.msra.mxu0 0.0
      %514 = vmatpush.msra.mxu0 0.0
      %515 = vmatpush.msra.mxu0 0.0
      %516 = vmatpush.msra.mxu0 0.0
      %517 = vmatpush.msra.mxu0 0.0
      %518 = vmatpush.msra.mxu0 0.0
      %519 = vmatpush.msra.mxu0 0.0
      %520 = vmatpush.msra.mxu0 0.0
      %521 = vmatpush.msra.mxu0 0.0
      %522 = vmatpush.msra.mxu0 0.0
      %523 = vmatpush.msra.mxu0 %v449
      %524 = vmatmul.f32.gmra.mxu0 %v503
      %v525 = vpop.f32.mrf.mxu0
      %v526 = vadd.f32 0.0, %v525
      %527 = vmatmul.f32.gmra.mxu0 %v506
      %v528 = vpop.f32.mrf.mxu0
      %v529 = vadd.f32 0.0, %v528
      %530 = vdwg.mxu0
      %v531 = vld [vmem:[%s4] sm:$0xff]
      %v532 = vld [vmem:[%s4 + $0x8] sm:$0xff]
      %v533 = vld [vmem:[%s4 + $0x10] sm:$0xff]
      %v534 = vld [vmem:[%s4 + $0x18] sm:$0xff]
      %v535 = vld [vmem:[%s5] sm:$0x1]
      %v537 = vperm.slane %v535, 0
      %v540 = vsel %vm427, %v526, 0
      %v543 = vsel %vm427, %v529, 0
      %545 = vmatpush.msra.mxu0 0.0
      %546 = vmatpush.msra.mxu0 0.0
      %547 = vmatpush.msra.mxu0 0.0
      %548 = vmatpush.msra.mxu0 0.0
      %549 = vmatpush.msra.mxu0 0.0
      %550 = vmatpush.msra.mxu0 0.0
      %551 = vmatpush.msra.mxu0 0.0
      %552 = vmatpush.msra.mxu0 0.0
      %553 = vmatpush.msra.mxu0 0.0
      %554 = vmatpush.msra.mxu0 0.0
      %555 = vmatpush.msra.mxu0 0.0
      %556 = vmatpush.msra.mxu0 0.0
      %557 = vmatpush.msra.mxu0 %v534
      %558 = vmatpush.msra.mxu0 %v533
      %559 = vmatpush.msra.mxu0 %v532
      %560 = vmatpush.msra.mxu0 %v531
      %561 = vmatmul.f32.gmra.mxu0 %v540
      %v562 = vpop.f32.mrf.mxu0
      %v563 = vadd.f32 %v537, %v562
      %564 = vmatmul.f32.gmra.mxu0 %v543
      %v565 = vpop.f32.mrf.mxu0
      %v566 = vadd.f32 %v537, %v565
      %567 = vdwg.mxu0
      %v568 = vtanh.pop %v563
      %v569 = vtanh.pop %v566
      %v570 = vld [vmem:[%s6] sm:$0xff]
      %v571 = vld [vmem:[%s6 + $0x8] sm:$0xff]
      %v572 = vld [vmem:[%s6 + $0x10] sm:$0xff]
      %v573 = vld [vmem:[%s6 + $0x18] sm:$0xff]
      %v574 = vld [vmem:[%s7] sm:$0x1]
      %v576 = vperm.slane %v574, 0
      %v579 = vsel %vm427, %v568, 0
      %v582 = vsel %vm427, %v569, 0
      %584 = vmatpush.msra.mxu0 0.0
      %585 = vmatpush.msra.mxu0 0.0
      %586 = vmatpush.msra.mxu0 0.0
      %587 = vmatpush.msra.mxu0 0.0
      %588 = vmatpush.msra.mxu0 0.0
      %589 = vmatpush.msra.mxu0 0.0
      %590 = vmatpush.msra.mxu0 0.0
      %591 = vmatpush.msra.mxu0 0.0
      %592 = vmatpush.msra.mxu0 0.0
      %593 = vmatpush.msra.mxu0 0.0
      %594 = vmatpush.msra.mxu0 0.0
      %595 = vmatpush.msra.mxu0 0.0
      %596 = vmatpush.msra.mxu0 %v573
      %597 = vmatpush.msra.mxu0 %v572
      %598 = vmatpush.msra.mxu0 %v571
      %599 = vmatpush.msra.mxu0 %v570
      %600 = vmatmul.f32.gmra.mxu0 %v579
      %v601 = vpop.f32.mrf.mxu0
      %v602 = vadd.f32 %v576, %v601
      %603 = vmatmul.f32.gmra.mxu0 %v582
      %v604 = vpop.f32.mrf.mxu0
      %v605 = vadd.f32 %v576, %v604
      %606 = vdwg.mxu0
      %v607 = vtanh.pop %v602
      %v608 = vtanh.pop %v605
      %v609 = vadd.f32 %v568, %v607
      %v610 = vadd.f32 %v569, %v608
      %s611 = scalar_lea.vmem %s6, 32
      %v612 = vld [vmem:[%s611] sm:$0xff]
      %v613 = vld [vmem:[%s611 + $0x8] sm:$0xff]
      %v614 = vld [vmem:[%s611 + $0x10] sm:$0xff]
      %v615 = vld [vmem:[%s611 + $0x18] sm:$0xff]
      %s616 = scalar_lea.vmem %s7, 1
      %v617 = vld [vmem:[%s616] sm:$0x1]
      %v619 = vperm.slane %v617, 0
      %v622 = vsel %vm427, %v609, 0
      %v625 = vsel %vm427, %v610, 0
      %627 = vmatpush.msra.mxu0 0.0
      %628 = vmatpush.msra.mxu0 0.0
      %629 = vmatpush.msra.mxu0 0.0
      %630 = vmatpush.msra.mxu0 0.0
      %631 = vmatpush.msra.mxu0 0.0
      %632 = vmatpush.msra.mxu0 0.0
      %633 = vmatpush.msra.mxu0 0.0
      %634 = vmatpush.msra.mxu0 0.0
      %635 = vmatpush.msra.mxu0 0.0
      %636 = vmatpush.msra.mxu0 0.0
      %637 = vmatpush.msra.mxu0 0.0
      %638 = vmatpush.msra.mxu0 0.0
      %639 = vmatpush.msra.mxu0 %v615
      %640 = vmatpush.msra.mxu0 %v614
      %641 = vmatpush.msra.mxu0 %v613
      %642 = vmatpush.msra.mxu0 %v612
      %643 = vmatmul.f32.gmra.mxu0 %v622
      %v644 = vpop.f32.mrf.mxu0
      %v645 = vadd.f32 %v619, %v644
      %646 = vmatmul.f32.gmra.mxu0 %v625
      %v647 = vpop.f32.mrf.mxu0
      %v648 = vadd.f32 %v619, %v647
      %649 = vdwg.mxu0
      %v650 = vtanh.pop %v645
      %v651 = vtanh.pop %v648
      %v652 = vadd.f32 %v609, %v650
      %v653 = vadd.f32 %v610, %v651
      %v654 = vld [vmem:[%s8] sm:$0xff]
      %v655 = vld [vmem:[%s8 + $0x8] sm:$0xff]
      %v656 = vld [vmem:[%s8 + $0x10] sm:$0xff]
      %v657 = vld [vmem:[%s8 + $0x18] sm:$0xff]
      %v658 = vld [vmem:[#allocation2] sm:$0x1]
      %v660 = vperm.slane %v658, 0
      %v663 = vsel %vm427, %v652, 0
      %v666 = vsel %vm427, %v653, 0
      %668 = vmatpush.msra.mxu0 0.0
      %669 = vmatpush.msra.mxu0 0.0
      %670 = vmatpush.msra.mxu0 0.0
      %671 = vmatpush.msra.mxu0 0.0
      %672 = vmatpush.msra.mxu0 0.0
      %673 = vmatpush.msra.mxu0 0.0
      %674 = vmatpush.msra.mxu0 0.0
      %675 = vmatpush.msra.mxu0 0.0
      %676 = vmatpush.msra.mxu0 0.0
      %677 = vmatpush.msra.mxu0 0.0
      %678 = vmatpush.msra.mxu0 0.0
      %679 = vmatpush.msra.mxu0 0.0
      %680 = vmatpush.msra.mxu0 %v657
      %681 = vmatpush.msra.mxu0 %v656
      %682 = vmatpush.msra.mxu0 %v655
      %683 = vmatpush.msra.mxu0 %v654
      %684 = vmatmul.f32.gmra.mxu0 %v663
      %v685 = vpop.f32.mrf.mxu0
      %v686 = vadd.f32 %v660, %v685
      %687 = vmatmul.f32.gmra.mxu0 %v666
      %v688 = vpop.f32.mrf.mxu0
      %v689 = vadd.f32 %v660, %v688
      %690 = vdwg.mxu0
      %vm691 = vcmask 7168
      %692 = vst.msk [vmem:[%s416] sm:$0xff] %vm691, %v686
      %693 = vst.msk [vmem:[%s416 + $0x8] sm:$0xff] %vm691, %v689
      %s694 = smul.u32 2, %s28
      %p695 = scmp.lt.s32.totalorder %s27, 1
      %s696 = scalar_select %p695, %s27, 1
      %p697 = scmp.lt.s32.totalorder %s694, 1
      %s698 = scalar_select %p697, %s694, 1
      %s699 = smul.addr %s696, 2
      %s700 = sadd.s32 %s698, %s699
      %s701 = smul.addr %s700, 8
      %s702 = scalar_lea.vmem %s10, %s701
      // Predicated region
      $region61: #{_lambda_.13} parent=59 // pred_check
        %p703 = pneg %p277
      $region62: #{_lambda_.13} parent=59 // pred_check_branch
        %705 = sbr.rel (%p703) target = $region64
      $region63: #{_lambda_.13} parent=59 // pred_region
        %s706 = smul.u32 2, %s28
      $region64: #{_lambda_.13} parent=59 // pred_fallthru
        _
    $region60: #{_lambda_.13} parent=5 // pred_fallthru
      _
    %p707 = scmp.le.s32.totalorder 2, %s18
    // Predicated region
    $region65: #{_lambda_.13} parent=5 // pred_check
      %p708 = pneg %p707
    $region66: #{_lambda_.13} parent=5 // pred_check_branch
      %710 = sbr.rel (%p708) target = $region68
    $region67: #{_lambda_.13} parent=5 // pred_region
      %s711 = ssub.s32 %s18, 2
      // Predicated region
      $region69: #{_lambda_.13} parent=67 // pred_check
        %p712 = pneg %p283
      $region70: #{_lambda_.13} parent=67 // pred_check_branch
        %714 = sbr.rel (%p712) target = $region72
      $region71: #{_lambda_.13} parent=67 // pred_region
        %s715 = smul.u32 2, %s30
        %p716 = scmp.lt.s32.totalorder %s29, 1
        %s717 = scalar_select %p716, %s29, 1
        %p718 = scmp.lt.s32.totalorder %s715, 1
        %s719 = scalar_select %p718, %s715, 1
        %s720 = smul.addr %s717, 2
        %s721 = sadd.s32 %s719, %s720
        %s722 = smul.addr %s721, 8
        %s723 = scalar_lea.vmem %s10, %s722
      $region72: #{_lambda_.13} parent=67 // pred_fallthru
        _
    $region68: #{_lambda_.13} parent=5 // pred_fallthru
      _
  $region6: #{_lambda_.13} parent=0 // loop_footer
    %s22 = sadd.s32 1, %s18
  $region7: #{_lambda_.13} parent=0 // loop_footer_branch
    %17 = sbr.rel target = $region3
  $region8: #{_lambda_.13} parent=0 // loop_exit
    _

// kernel: _lambda_.11
$region0: #{_lambda_.11}
  #allocation0 [shape = 'u32[]', space=smem, size = 0x4, offset = 0x4, fixed_abs, tag = 'smem constant byte address 0x4 - core index']
  #allocation1 [shape = 'u32[72,128]{1,0:T(1,128)}', space=vmem, size = 0x9000, scoped, tag = 'internal scratch']
  %s0 = inlined_call_operand.vmem [shape: f32[2,8,32], index: 0, kind: input, shape index: {}]
  %s1 = inlined_call_operand.vmem [shape: f32[1,32], index: 1, kind: input, shape index: {}]
  %s2 = inlined_call_operand.vmem [shape: f32[1,32], index: 2, kind: input, shape index: {}]
  %s3 = inlined_call_operand.vmem [shape: f32[32,96], index: 3, kind: input, shape index: {}]
  %s4 = inlined_call_operand.vmem [shape: f32[1,96], index: 4, kind: input, shape index: {}]
  %s5 = inlined_call_operand.vmem [shape: f32[32,32], index: 5, kind: input, shape index: {}]
  %s6 = inlined_call_operand.vmem [shape: f32[1,32], index: 6, kind: input, shape index: {}]
  %s7 = inlined_call_operand.vmem [shape: f32[1,32], index: 7, kind: input, shape index: {}]
  %s8 = inlined_call_operand.vmem [shape: f32[1,32], index: 8, kind: input, shape index: {}]
  %s9 = inlined_call_operand.vmem [shape: f32[32,64], index: 9, kind: input, shape index: {}]
  %s10 = inlined_call_operand.vmem [shape: f32[1,64], index: 10, kind: input, shape index: {}]
  %s11 = inlined_call_operand.vmem [shape: f32[64,32], index: 11, kind: input, shape index: {}]
  %s12 = inlined_call_operand.vmem [shape: f32[1,32], index: 12, kind: input, shape index: {}]
  %s13 = inlined_call_operand.vmem [shape: f32[2,8,32], index: 13, kind: output, shape index: {}]
  %s14 = sld [smem:[#allocation0]]
  $region85: #{_lambda_.11} parent=0
    _
  %s16 = ssub.s32 1, %s14
  %s17 = scalar_select 0, %s16, %s14
  loop: start=0, step=1, limit=4
  $region2: #{_lambda_.11} parent=0 // loop_pre_header
    _
  $region3: #{_lambda_.11} parent=0 // loop_header
    %s19 = sphi 0, %s23
    %p20 = scmp.ge.s32.totalorder %s19, 4
    %s29 = sphi 0, %s31
    %s32 = sphi 0, %s29
    %s33 = sphi 0, %s32
    %s49 = sphi 0, %s33
    %s53 = sphi 0, %s53
    %s55 = sphi 0, %s53
    %s56 = sphi 0, %s55
    %s70 = sphi 0, %s56
    %s74 = sphi 0, %s74
    %s76 = sphi 0, %s74
    %s77 = sphi 0, %s76
    %s91 = sphi 0, %s77
    %s95 = sphi 0, %s95
    %s97 = sphi 0, %s95
    %s98 = sphi 0, %s97
    %s112 = sphi 0, %s98
    %s116 = sphi 0, %s116
    %s118 = sphi 0, %s116
    %s119 = sphi 0, %s118
    %s133 = sphi 0, %s119
    %s137 = sphi 0, %s137
    %s139 = sphi 0, %s137
    %s140 = sphi 0, %s139
    %s154 = sphi 0, %s140
    %s158 = sphi 0, %s158
    %s160 = sphi 0, %s158
    %s161 = sphi 0, %s160
    %s175 = sphi 0, %s161
    %s179 = sphi 0, %s179
    %s181 = sphi 0, %s179
    %s182 = sphi 0, %s181
    %s196 = sphi 0, %s182
    %s200 = sphi 0, %s200
    %s202 = sphi 0, %s200
    %s203 = sphi 0, %s202
    %s217 = sphi 0, %s203
    %s221 = sphi 0, %s221
    %s223 = sphi 0, %s221
    %s224 = sphi 0, %s223
    %s238 = sphi 0, %s224
    %s242 = sphi 0, %s242
    %s244 = sphi 0, %s242
    %s245 = sphi 0, %s244
    %s259 = sphi 0, %s245
    %s263 = sphi 0, %s263
    %s265 = sphi 0, %s263
    %s266 = sphi 0, %s265
    %s280 = sphi 0, %s266
    %s284 = sphi 0, %s284
    %s286 = sphi 0, %s284
    %s287 = sphi 0, %s286
    %s301 = sphi 0, %s287
    %s307 = sphi 0, %s309
    %s310 = sphi 0, %s307
    %s311 = sphi 0, %s310
    %s327 = sphi 0, %s311
  $region4: #{_lambda_.11} parent=0 // loop_header_branch
    %22 = sbr.rel (%p20) target = $region8
  $region5: #{_lambda_.11} parent=0 // loop_body
    %s24 = ssub.s32 %s19, 1
    %s25 = ssub.s32 %s19, 2
    %s26 = sadd.s32 %s19, 1
    %s27 = ssub.s32 %s19, %s26
    %p28 = scmp.eq.s32.totalorder %s27, 0
    %s30 = sadd.s32 %s29, 1
    %s31 = scalar_select %p28, %s29, %s30
    %p34 = pneg %p28
    %p35 = scmp.eq.s32.totalorder %s19, 1
    %p36 = por %p34, %p35
    %p37 = scmp.ne.s32.totalorder %s29, %s32
    %p38 = scmp.eq.s32.totalorder %s19, 0
    %p39 = por %p37, %p38
    %p40 = scmp.ne.s32.totalorder %s29, %s32
    %p41 = scmp.eq.s32.totalorder %s24, 1
    %p42 = por %p40, %p41
    %p43 = scmp.ne.s32.totalorder %s32, %s33
    %p44 = scmp.eq.s32.totalorder %s24, 0
    %p45 = por %p43, %p44
    %p46 = scmp.ne.s32.totalorder %s32, %s33
    %p47 = scmp.eq.s32.totalorder %s25, 1
    %p48 = por %p46, %p47
    %p50 = scmp.ne.s32.totalorder %s33, %s49
    %p51 = scmp.eq.s32.totalorder %s25, 0
    %p52 = por %p50, %p51
    %s54 = sadd.s32 %s53, 1
    %p57 = scmp.eq.s32.totalorder %s19, 1
    %p58 = scmp.ne.s32.totalorder %s53, %s55
    %p59 = scmp.eq.s32.totalorder %s19, 0
    %p60 = por %p58, %p59
    %p61 = scmp.ne.s32.totalorder %s53, %s55
    %p62 = scmp.eq.s32.totalorder %s24, 1
    %p63 = por %p61, %p62
    %p64 = scmp.ne.s32.totalorder %s55, %s56
    %p65 = scmp.eq.s32.totalorder %s24, 0
    %p66 = por %p64, %p65
    %p67 = scmp.ne.s32.totalorder %s55, %s56
    %p68 = scmp.eq.s32.totalorder %s25, 1
    %p69 = por %p67, %p68
    %p71 = scmp.ne.s32.totalorder %s56, %s70
    %p72 = scmp.eq.s32.totalorder %s25, 0
    %p73 = por %p71, %p72
    %s75 = sadd.s32 %s74, 1
    %p78 = scmp.eq.s32.totalorder %s19, 1
    %p79 = scmp.ne.s32.totalorder %s74, %s76
    %p80 = scmp.eq.s32.totalorder %s19, 0
    %p81 = por %p79, %p80
    %p82 = scmp.ne.s32.totalorder %s74, %s76
    %p83 = scmp.eq.s32.totalorder %s24, 1
    %p84 = por %p82, %p83
    %p85 = scmp.ne.s32.totalorder %s76, %s77
    %p86 = scmp.eq.s32.totalorder %s24, 0
    %p87 = por %p85, %p86
    %p88 = scmp.ne.s32.totalorder %s76, %s77
    %p89 = scmp.eq.s32.totalorder %s25, 1
    %p90 = por %p88, %p89
    %p92 = scmp.ne.s32.totalorder %s77, %s91
    %p93 = scmp.eq.s32.totalorder %s25, 0
    %p94 = por %p92, %p93
    %s96 = sadd.s32 %s95, 1
    %p99 = scmp.eq.s32.totalorder %s19, 1
    %p100 = scmp.ne.s32.totalorder %s95, %s97
    %p101 = scmp.eq.s32.totalorder %s19, 0
    %p102 = por %p100, %p101
    %p103 = scmp.ne.s32.totalorder %s95, %s97
    %p104 = scmp.eq.s32.totalorder %s24, 1
    %p105 = por %p103, %p104
    %p106 = scmp.ne.s32.totalorder %s97, %s98
    %p107 = scmp.eq.s32.totalorder %s24, 0
    %p108 = por %p106, %p107
    %p109 = scmp.ne.s32.totalorder %s97, %s98
    %p110 = scmp.eq.s32.totalorder %s25, 1
    %p111 = por %p109, %p110
    %p113 = scmp.ne.s32.totalorder %s98, %s112
    %p114 = scmp.eq.s32.totalorder %s25, 0
    %p115 = por %p113, %p114
    %s117 = sadd.s32 %s116, 1
    %p120 = scmp.eq.s32.totalorder %s19, 1
    %p121 = scmp.ne.s32.totalorder %s116, %s118
    %p122 = scmp.eq.s32.totalorder %s19, 0
    %p123 = por %p121, %p122
    %p124 = scmp.ne.s32.totalorder %s116, %s118
    %p125 = scmp.eq.s32.totalorder %s24, 1
    %p126 = por %p124, %p125
    %p127 = scmp.ne.s32.totalorder %s118, %s119
    %p128 = scmp.eq.s32.totalorder %s24, 0
    %p129 = por %p127, %p128
    %p130 = scmp.ne.s32.totalorder %s118, %s119
    %p131 = scmp.eq.s32.totalorder %s25, 1
    %p132 = por %p130, %p131
    %p134 = scmp.ne.s32.totalorder %s119, %s133
    %p135 = scmp.eq.s32.totalorder %s25, 0
    %p136 = por %p134, %p135
    %s138 = sadd.s32 %s137, 1
    %p141 = scmp.eq.s32.totalorder %s19, 1
    %p142 = scmp.ne.s32.totalorder %s137, %s139
    %p143 = scmp.eq.s32.totalorder %s19, 0
    %p144 = por %p142, %p143
    %p145 = scmp.ne.s32.totalorder %s137, %s139
    %p146 = scmp.eq.s32.totalorder %s24, 1
    %p147 = por %p145, %p146
    %p148 = scmp.ne.s32.totalorder %s139, %s140
    %p149 = scmp.eq.s32.totalorder %s24, 0
    %p150 = por %p148, %p149
    %p151 = scmp.ne.s32.totalorder %s139, %s140
    %p152 = scmp.eq.s32.totalorder %s25, 1
    %p153 = por %p151, %p152
    %p155 = scmp.ne.s32.totalorder %s140, %s154
    %p156 = scmp.eq.s32.totalorder %s25, 0
    %p157 = por %p155, %p156
    %s159 = sadd.s32 %s158, 1
    %p162 = scmp.eq.s32.totalorder %s19, 1
    %p163 = scmp.ne.s32.totalorder %s158, %s160
    %p164 = scmp.eq.s32.totalorder %s19, 0
    %p165 = por %p163, %p164
    %p166 = scmp.ne.s32.totalorder %s158, %s160
    %p167 = scmp.eq.s32.totalorder %s24, 1
    %p168 = por %p166, %p167
    %p169 = scmp.ne.s32.totalorder %s160, %s161
    %p170 = scmp.eq.s32.totalorder %s24, 0
    %p171 = por %p169, %p170
    %p172 = scmp.ne.s32.totalorder %s160, %s161
    %p173 = scmp.eq.s32.totalorder %s25, 1
    %p174 = por %p172, %p173
    %p176 = scmp.ne.s32.totalorder %s161, %s175
    %p177 = scmp.eq.s32.totalorder %s25, 0
    %p178 = por %p176, %p177
    %s180 = sadd.s32 %s179, 1
    %p183 = scmp.eq.s32.totalorder %s19, 1
    %p184 = scmp.ne.s32.totalorder %s179, %s181
    %p185 = scmp.eq.s32.totalorder %s19, 0
    %p186 = por %p184, %p185
    %p187 = scmp.ne.s32.totalorder %s179, %s181
    %p188 = scmp.eq.s32.totalorder %s24, 1
    %p189 = por %p187, %p188
    %p190 = scmp.ne.s32.totalorder %s181, %s182
    %p191 = scmp.eq.s32.totalorder %s24, 0
    %p192 = por %p190, %p191
    %p193 = scmp.ne.s32.totalorder %s181, %s182
    %p194 = scmp.eq.s32.totalorder %s25, 1
    %p195 = por %p193, %p194
    %p197 = scmp.ne.s32.totalorder %s182, %s196
    %p198 = scmp.eq.s32.totalorder %s25, 0
    %p199 = por %p197, %p198
    %s201 = sadd.s32 %s200, 1
    %p204 = scmp.eq.s32.totalorder %s19, 1
    %p205 = scmp.ne.s32.totalorder %s200, %s202
    %p206 = scmp.eq.s32.totalorder %s19, 0
    %p207 = por %p205, %p206
    %p208 = scmp.ne.s32.totalorder %s200, %s202
    %p209 = scmp.eq.s32.totalorder %s24, 1
    %p210 = por %p208, %p209
    %p211 = scmp.ne.s32.totalorder %s202, %s203
    %p212 = scmp.eq.s32.totalorder %s24, 0
    %p213 = por %p211, %p212
    %p214 = scmp.ne.s32.totalorder %s202, %s203
    %p215 = scmp.eq.s32.totalorder %s25, 1
    %p216 = por %p214, %p215
    %p218 = scmp.ne.s32.totalorder %s203, %s217
    %p219 = scmp.eq.s32.totalorder %s25, 0
    %p220 = por %p218, %p219
    %s222 = sadd.s32 %s221, 1
    %p225 = scmp.eq.s32.totalorder %s19, 1
    %p226 = scmp.ne.s32.totalorder %s221, %s223
    %p227 = scmp.eq.s32.totalorder %s19, 0
    %p228 = por %p226, %p227
    %p229 = scmp.ne.s32.totalorder %s221, %s223
    %p230 = scmp.eq.s32.totalorder %s24, 1
    %p231 = por %p229, %p230
    %p232 = scmp.ne.s32.totalorder %s223, %s224
    %p233 = scmp.eq.s32.totalorder %s24, 0
    %p234 = por %p232, %p233
    %p235 = scmp.ne.s32.totalorder %s223, %s224
    %p236 = scmp.eq.s32.totalorder %s25, 1
    %p237 = por %p235, %p236
    %p239 = scmp.ne.s32.totalorder %s224, %s238
    %p240 = scmp.eq.s32.totalorder %s25, 0
    %p241 = por %p239, %p240
    %s243 = sadd.s32 %s242, 1
    %p246 = scmp.eq.s32.totalorder %s19, 1
    %p247 = scmp.ne.s32.totalorder %s242, %s244
    %p248 = scmp.eq.s32.totalorder %s19, 0
    %p249 = por %p247, %p248
    %p250 = scmp.ne.s32.totalorder %s242, %s244
    %p251 = scmp.eq.s32.totalorder %s24, 1
    %p252 = por %p250, %p251
    %p253 = scmp.ne.s32.totalorder %s244, %s245
    %p254 = scmp.eq.s32.totalorder %s24, 0
    %p255 = por %p253, %p254
    %p256 = scmp.ne.s32.totalorder %s244, %s245
    %p257 = scmp.eq.s32.totalorder %s25, 1
    %p258 = por %p256, %p257
    %p260 = scmp.ne.s32.totalorder %s245, %s259
    %p261 = scmp.eq.s32.totalorder %s25, 0
    %p262 = por %p260, %p261
    %s264 = sadd.s32 %s263, 1
    %p267 = scmp.eq.s32.totalorder %s19, 1
    %p268 = scmp.ne.s32.totalorder %s263, %s265
    %p269 = scmp.eq.s32.totalorder %s19, 0
    %p270 = por %p268, %p269
    %p271 = scmp.ne.s32.totalorder %s263, %s265
    %p272 = scmp.eq.s32.totalorder %s24, 1
    %p273 = por %p271, %p272
    %p274 = scmp.ne.s32.totalorder %s265, %s266
    %p275 = scmp.eq.s32.totalorder %s24, 0
    %p276 = por %p274, %p275
    %p277 = scmp.ne.s32.totalorder %s265, %s266
    %p278 = scmp.eq.s32.totalorder %s25, 1
    %p279 = por %p277, %p278
    %p281 = scmp.ne.s32.totalorder %s266, %s280
    %p282 = scmp.eq.s32.totalorder %s25, 0
    %p283 = por %p281, %p282
    %s285 = sadd.s32 %s284, 1
    %p288 = scmp.eq.s32.totalorder %s19, 1
    %p289 = scmp.ne.s32.totalorder %s284, %s286
    %p290 = scmp.eq.s32.totalorder %s19, 0
    %p291 = por %p289, %p290
    %p292 = scmp.ne.s32.totalorder %s284, %s286
    %p293 = scmp.eq.s32.totalorder %s24, 1
    %p294 = por %p292, %p293
    %p295 = scmp.ne.s32.totalorder %s286, %s287
    %p296 = scmp.eq.s32.totalorder %s24, 0
    %p297 = por %p295, %p296
    %p298 = scmp.ne.s32.totalorder %s286, %s287
    %p299 = scmp.eq.s32.totalorder %s25, 1
    %p300 = por %p298, %p299
    %p302 = scmp.ne.s32.totalorder %s287, %s301
    %p303 = scmp.eq.s32.totalorder %s25, 0
    %p304 = por %p302, %p303
    %s305 = ssub.s32 %s19, %s26
    %p306 = scmp.eq.s32.totalorder %s305, 0
    %s308 = sadd.s32 %s307, 1
    %s309 = scalar_select %p306, %s307, %s308
    %p312 = pneg %p306
    %p313 = scmp.eq.s32.totalorder %s19, 1
    %p314 = por %p312, %p313
    %p315 = scmp.ne.s32.totalorder %s307, %s310
    %p316 = scmp.eq.s32.totalorder %s19, 0
    %p317 = por %p315, %p316
    %p318 = scmp.ne.s32.totalorder %s307, %s310
    %p319 = scmp.eq.s32.totalorder %s24, 1
    %p320 = por %p318, %p319
    %p321 = scmp.ne.s32.totalorder %s310, %s311
    %p322 = scmp.eq.s32.totalorder %s24, 0
    %p323 = por %p321, %p322
    %p324 = scmp.ne.s32.totalorder %s310, %s311
    %p325 = scmp.eq.s32.totalorder %s25, 1
    %p326 = por %p324, %p325
    %p328 = scmp.ne.s32.totalorder %s311, %s327
    %p329 = scmp.eq.s32.totalorder %s25, 0
    %p330 = por %p328, %p329
    %p331 = scmp.le.s32.totalorder 1, %s19
    %p332 = scmp.lt.s32.totalorder %s19, 3
    %p333 = pnand %p331, %p332
    %p334 = pneg %p333
    // Predicated region
    $region9: #{_lambda_.11} parent=5 // pred_check
      _
    $region10: #{_lambda_.11} parent=5 // pred_check_branch
      %336 = sbr.rel (%p333) target = $region12
    $region11: #{_lambda_.11} parent=5 // pred_region
      %s337 = ssub.s32 %s19, 1
      // Predicated region
      $region13: #{_lambda_.11} parent=11 // pred_check
        %p338 = pneg %p66
      $region14: #{_lambda_.11} parent=11 // pred_check_branch
        %340 = sbr.rel (%p338) target = $region16
      $region15: #{_lambda_.11} parent=11 // pred_region
        _
      $region16: #{_lambda_.11} parent=11 // pred_fallthru
        _
      // Predicated region
      $region17: #{_lambda_.11} parent=11 // pred_check
        %p341 = pneg %p87
      $region18: #{_lambda_.11} parent=11 // pred_check_branch
        %343 = sbr.rel (%p341) target = $region20
      $region19: #{_lambda_.11} parent=11 // pred_region
        _
      $region20: #{_lambda_.11} parent=11 // pred_fallthru
        _
      // Predicated region
      $region21: #{_lambda_.11} parent=11 // pred_check
        %p344 = pneg %p108
      $region22: #{_lambda_.11} parent=11 // pred_check_branch
        %346 = sbr.rel (%p344) target = $region24
      $region23: #{_lambda_.11} parent=11 // pred_region
        _
      $region24: #{_lambda_.11} parent=11 // pred_fallthru
        _
      // Predicated region
      $region25: #{_lambda_.11} parent=11 // pred_check
        %p347 = pneg %p129
      $region26: #{_lambda_.11} parent=11 // pred_check_branch
        %349 = sbr.rel (%p347) target = $region28
      $region27: #{_lambda_.11} parent=11 // pred_region
        _
      $region28: #{_lambda_.11} parent=11 // pred_fallthru
        _
      // Predicated region
      $region29: #{_lambda_.11} parent=11 // pred_check
        %p350 = pneg %p150
      $region30: #{_lambda_.11} parent=11 // pred_check_branch
        %352 = sbr.rel (%p350) target = $region32
      $region31: #{_lambda_.11} parent=11 // pred_region
        _
      $region32: #{_lambda_.11} parent=11 // pred_fallthru
        _
      // Predicated region
      $region33: #{_lambda_.11} parent=11 // pred_check
        %p353 = pneg %p171
      $region34: #{_lambda_.11} parent=11 // pred_check_branch
        %355 = sbr.rel (%p353) target = $region36
      $region35: #{_lambda_.11} parent=11 // pred_region
        _
      $region36: #{_lambda_.11} parent=11 // pred_fallthru
        _
      // Predicated region
      $region37: #{_lambda_.11} parent=11 // pred_check
        %p356 = pneg %p192
      $region38: #{_lambda_.11} parent=11 // pred_check_branch
        %358 = sbr.rel (%p356) target = $region40
      $region39: #{_lambda_.11} parent=11 // pred_region
        _
      $region40: #{_lambda_.11} parent=11 // pred_fallthru
        _
      // Predicated region
      $region41: #{_lambda_.11} parent=11 // pred_check
        %p359 = pneg %p213
      $region42: #{_lambda_.11} parent=11 // pred_check_branch
        %361 = sbr.rel (%p359) target = $region44
      $region43: #{_lambda_.11} parent=11 // pred_region
        _
      $region44: #{_lambda_.11} parent=11 // pred_fallthru
        _
      // Predicated region
      $region45: #{_lambda_.11} parent=11 // pred_check
        %p362 = pneg %p234
      $region46: #{_lambda_.11} parent=11 // pred_check_branch
        %364 = sbr.rel (%p362) target = $region48
      $region47: #{_lambda_.11} parent=11 // pred_region
        _
      $region48: #{_lambda_.11} parent=11 // pred_fallthru
        _
      // Predicated region
      $region49: #{_lambda_.11} parent=11 // pred_check
        %p365 = pneg %p255
      $region50: #{_lambda_.11} parent=11 // pred_check_branch
        %367 = sbr.rel (%p365) target = $region52
      $region51: #{_lambda_.11} parent=11 // pred_region
        _
      $region52: #{_lambda_.11} parent=11 // pred_fallthru
        _
      // Predicated region
      $region53: #{_lambda_.11} parent=11 // pred_check
        %p368 = pneg %p276
      $region54: #{_lambda_.11} parent=11 // pred_check_branch
        %370 = sbr.rel (%p368) target = $region56
      $region55: #{_lambda_.11} parent=11 // pred_region
        _
      $region56: #{_lambda_.11} parent=11 // pred_fallthru
        _
      // Predicated region
      $region57: #{_lambda_.11} parent=11 // pred_check
        %p371 = pneg %p297
      $region58: #{_lambda_.11} parent=11 // pred_check_branch
        %373 = sbr.rel (%p371) target = $region60
      $region59: #{_lambda_.11} parent=11 // pred_region
        _
      $region60: #{_lambda_.11} parent=11 // pred_fallthru
        _
    $region12: #{_lambda_.11} parent=5 // pred_fallthru
      _
    %p374 = scmp.lt.s32.totalorder %s19, 2
    // Predicated region
    $region61: #{_lambda_.11} parent=5 // pred_check
      %p375 = pneg %p374
    $region62: #{_lambda_.11} parent=5 // pred_check_branch
      %377 = sbr.rel (%p375) target = $region64
    $region63: #{_lambda_.11} parent=5 // pred_region
      // Predicated region
      $region65: #{_lambda_.11} parent=63 // pred_check
        %p378 = pneg %p39
      $region66: #{_lambda_.11} parent=63 // pred_check_branch
        %380 = sbr.rel (%p378) target = $region68
      $region67: #{_lambda_.11} parent=63 // pred_region
        %p381 = scmp.lt.s32.totalorder %s19, 1
        %s382 = scalar_select %p381, %s19, 1
        %s383 = smul.addr %s382, 8
        %s384 = scalar_lea.vmem %s0, %s383
      $region68: #{_lambda_.11} parent=63 // pred_fallthru
        _
    $region64: #{_lambda_.11} parent=5 // pred_fallthru
      _
    %p385 = scmp.le.s32.totalorder 1, %s19
    %p386 = scmp.lt.s32.totalorder %s19, 3
    %p387 = pnand %p385, %p386
    %p388 = pneg %p387
    // Predicated region
    $region69: #{_lambda_.11} parent=5 // pred_check
      _
    $region70: #{_lambda_.11} parent=5 // pred_check_branch
      %390 = sbr.rel (%p387) target = $region72
    $region71: #{_lambda_.11} parent=5 // pred_region
      %s391 = ssub.s32 %s19, 1
      %p392 = scmp.lt.s32.totalorder %s24, 1
      %s393 = scalar_select %p392, %s24, 1
      %s394 = smul.addr %s393, 8
      %s395 = scalar_lea.vmem %s0, %s394
      %p396 = pneg %p45
      %p397 = pneg %p42
      %p398 = pneg %p66
      %p399 = pneg %p63
      %p400 = pneg %p87
      %p401 = pneg %p84
      %p402 = pneg %p108
      %p403 = pneg %p105
      %p404 = pneg %p129
      %p405 = pneg %p126
      %p406 = pneg %p150
      %p407 = pneg %p147
      %p408 = pneg %p171
      %p409 = pneg %p168
      %p410 = pneg %p192
      %p411 = pneg %p189
      %p412 = pneg %p213
      %p413 = pneg %p210
      %p414 = pneg %p234
      %p415 = pneg %p231
      %p416 = pneg %p255
      %p417 = pneg %p252
      %p418 = pneg %p276
      %p419 = pneg %p273
      %p420 = pneg %p297
      %p421 = pneg %p294
      %p422 = pneg %p323
      %p423 = pneg %p320
      %p424 = scmp.lt.s32.totalorder %s24, 1
      %s425 = scalar_select %p424, %s24, 1
      %s426 = smul.addr %s425, 8
      %s427 = scalar_lea.vmem %s13, %s426
      %p428 = scmp.lt.s32.totalorder %s24, 1
      %s429 = scalar_select %p428, %s24, 1
      %s430 = smul.addr %s429, 8
      %s431 = scalar_lea.vmem %s0, %s430
      %p432 = scmp.lt.s32.totalorder %s24, 1
      %s433 = scalar_select %p432, %s24, 1
      %s434 = smul.addr %s433, 8
      %s435 = scalar_lea.vmem %s13, %s434
      %v436 = vld [vmem:[%s431] sm:$0xff]
      %v437 = vld [vmem:[%s1] sm:$0x1]
      %v438 = vld [vmem:[%s2] sm:$0x1]
      %vm439 = vcmask 261120
      %v440 = vsel %vm439, %v436, 0.0
      %441 = vadd.xlane.f32.xlu0 %v440
      %v442 = vpop.xlane.xlu0 %441
      %v443 = vrcp.pop 32.0
      %v444 = vmul.f32 32.0, %v443
      %v445 = vsub.f32 1.0, %v444
      %v446 = vmul.f32 %v443, %v445
      %v447 = vadd.f32 %v443, %v446
      %vm448 = vweird.f32 %v443
      %v449 = vsel %vm448, %v443, %v447
      %v450 = vmul.f32 %v442, %v449
      %v451 = vsub.f32 %v436, %v450
      %v452 = vmul.f32 %v451, %v451
      %v453 = vsel %vm439, %v452, 0.0
      %454 = vadd.xlane.f32.xlu0 %v453
      %v455 = vpop.xlane.xlu0 %454
      %v456 = vmul.f32 %v455, %v449
      %v457 = vadd.f32 %v456, 1e-05
      %v458 = vrsqrt.pop %v457
      %v459 = vmul.f32 %v458, %v457
      %v460 = vmul.f32 %v459, %v458
      %v461 = vmul.f32 0.5, %v460
      %v462 = vsub.f32 1.5, %v461
      %v463 = vmul.f32 %v458, %v462
      %vm464 = vweird.f32 %v457
      %vm465 = vweird.f32 %v458
      %vm466 = vmor %vm464, %vm465
      %v467 = vsel %vm466, %v458, %v463
      %v468 = vmul.f32 %v451, %v467
      %v470 = vperm.slane %v437, 0
      %v472 = vmul.f32 %v468, %v470
      %v474 = vperm.slane %v438, 0
      %v476 = vadd.f32 %v472, %v474
      %v477 = vld [vmem:[%s3] sm:$0xff]
      %v478 = vld [vmem:[%s3 + $0x8] sm:$0xff]
      %v479 = vld [vmem:[%s3 + $0x10] sm:$0xff]
      %v480 = vld [vmem:[%s3 + $0x18] sm:$0xff]
      %v481 = vld [vmem:[%s4] sm:$0x1]
      %v483 = vperm.slane %v481, 0
      %v486 = vsel %vm439, %v476, 0
      %488 = vmatpush.msra.mxu0 0.0
      %489 = vmatpush.msra.mxu0 0.0
      %490 = vmatpush.msra.mxu0 0.0
      %491 = vmatpush.msra.mxu0 0.0
      %492 = vmatpush.msra.mxu0 0.0
      %493 = vmatpush.msra.mxu0 0.0
      %494 = vmatpush.msra.mxu0 0.0
      %495 = vmatpush.msra.mxu0 0.0
      %496 = vmatpush.msra.mxu0 0.0
      %497 = vmatpush.msra.mxu0 0.0
      %498 = vmatpush.msra.mxu0 0.0
      %499 = vmatpush.msra.mxu0 0.0
      %500 = vmatpush.msra.mxu0 %v480
      %501 = vmatpush.msra.mxu0 %v479
      %502 = vmatpush.msra.mxu0 %v478
      %503 = vmatpush.msra.mxu0 %v477
      %504 = vmatmul.f32.gmra.mxu0 %v486
      %v505 = vpop.f32.mrf.mxu0
      %v506 = vadd.f32 %v483, %v505
      %507 = vdwg.mxu0
      %vm508 = vcmask 64512
      %v509 = vsel %vm508, %v506, -inf
      %510 = vmax.xlane.f32.xlu0 %v509
      %v511 = vpop.xlane.xlu0 %510
      %v512 = vsub.f32 %v506, %v511
      %v513 = vmul.f32 %v512, 1.442695
      %v514 = vpow.pop %v513
      %v515 = vsel %vm508, %v514, 0.0
      %516 = vadd.xlane.f32.xlu0 %v515
      %v517 = vpop.xlane.xlu0 %516
      %v518 = vrcp.pop %v517
      %v519 = vmul.f32 %v517, %v518
      %v520 = vsub.f32 1.0, %v519
      %v521 = vmul.f32 %v518, %v520
      %v522 = vadd.f32 %v518, %v521
      %vm523 = vweird.f32 %v517
      %vm524 = vweird.f32 %v518
      %vm525 = vmor %vm523, %vm524
      %v526 = vsel %vm525, %v518, %v522
      %v527 = vand.u32 2147483647, %v517
      %vm528 = vcmp.eq.f32.partialorder %v527, 8.507059e+37
      %v529 = vand.u32 %v517, 2147483648
      %v530 = vor.u32 1.1754944e-38, %v529
      %v531 = vsel %vm528, %v530, %v526
      %v532 = vmul.f32 %v514, %v531
      %vm533 = vcmask 326912
      %v534 = vsel %vm533, %v506, -inf
      %535 = vmax.xlane.f32.xlu0 %v534
      %v536 = vpop.xlane.xlu0 %535
      %v537 = vsub.f32 %v506, %v536
      %v538 = vmul.f32 %v537, 1.442695
      %v539 = vpow.pop %v538
      %541 = vrot.lane.b32.xlu0 %v539, 96
      %v542 = vpop.permute.xlu0 %541
      %v544 = vsel %vm508, %v542, 0.0
      %545 = vadd.xlane.f32.xlu0 %v544
      %v546 = vpop.xlane.xlu0 %545
      %v547 = vrcp.pop %v546
      %v548 = vmul.f32 %v546, %v547
      %v549 = vsub.f32 1.0, %v548
      %v550 = vmul.f32 %v547, %v549
      %v551 = vadd.f32 %v547, %v550
      %vm552 = vweird.f32 %v546
      %vm553 = vweird.f32 %v547
      %vm554 = vmor %vm552, %vm553
      %v555 = vsel %vm554, %v547, %v551
      %v556 = vand.u32 2147483647, %v546
      %vm557 = vcmp.eq.f32.partialorder %v556, 8.507059e+37
      %v558 = vand.u32 %v546, 2147483648
      %v559 = vor.u32 1.1754944e-38, %v558
      %v560 = vsel %vm557, %v559, %v555
      %v561 = vmul.f32 %v539, %v560
      %v562 = vsel %vm533, %v561, 0.0
      %v563 = vrot.slane %v562, 4
      %v564 = vadd.f32 %v562, %v563
      %v565 = vrot.slane %v564, 2
      %v566 = vadd.f32 %v564, %v565
      %v567 = vrot.slane %v566, 1
      %v568 = vadd.f32 %v566, %v567
      %570 = vrot.lane.b32.xlu0 %v568, 96
      %v571 = vpop.permute.xlu0 %570
      %v573 = vmul.f32 %v532, %v571
      %v574 = vsel %vm508, %v573, 0.0
      %575 = vadd.xlane.f32.xlu0 %v574
      %v576 = vpop.xlane.xlu0 %575
      %v577 = vrcp.pop %v576
      %v578 = vmul.f32 %v576, %v577
      %v579 = vsub.f32 1.0, %v578
      %v580 = vmul.f32 %v577, %v579
      %v581 = vadd.f32 %v577, %v580
      %vm582 = vweird.f32 %v576
      %vm583 = vweird.f32 %v577
      %vm584 = vmor %vm582, %vm583
      %v585 = vsel %vm584, %v577, %v581
      %v586 = vand.u32 2147483647, %v576
      %vm587 = vcmp.eq.f32.partialorder %v586, 8.507059e+37
      %v588 = vand.u32 %v576, 2147483648
      %v589 = vor.u32 1.1754944e-38, %v588
      %v590 = vsel %vm587, %v589, %v585
      %v591 = vmul.f32 1.0, %v590
      %593 = vrot.lane.b32.xlu0 %v561, 96
      %v594 = vpop.permute.xlu0 %593
      %596 = vxpose.xlu0.b32.start [1/16] %v594, 128
      %597 = vxpose.xlu0.b32.cont [2/16] 0.0, 128
      %598 = vxpose.xlu0.b32.cont [3/16] 0.0, 128
      %599 = vxpose.xlu0.b32.cont [4/16] 0.0, 128
      %600 = vxpose.xlu0.b32.cont [5/16] 0.0, 128
      %601 = vxpose.xlu0.b32.cont [6/16] 0.0, 128
      %602 = vxpose.xlu0.b32.cont [7/16] 0.0, 128
      %603 = vxpose.xlu0.b32.cont [8/16] 0.0, 128
      %604 = vxpose.xlu0.b32.cont [9/16] 0.0, 128
      %605 = vxpose.xlu0.b32.cont [10/16] 0.0, 128
      %606 = vxpose.xlu0.b32.cont [11/16] 0.0, 128
      %607 = vxpose.xlu0.b32.cont [12/16] 0.0, 128
      %608 = vxpose.xlu0.b32.cont [13/16] 0.0, 128
      %609 = vxpose.xlu0.b32.cont [14/16] 0.0, 128
      %610 = vxpose.xlu0.b32.cont [15/16] 0.0, 128
      %611 = vxpose.xlu0.b32.end [16/16] 0.0, 128
      %v612 = vpop.trf.xlu0
      %v613 = vpop.trf.xlu0
      %v614 = vpop.trf.xlu0
      %v615 = vpop.trf.xlu0
      %v616 = vpop.trf.xlu0
      %v617 = vpop.trf.xlu0
      %v618 = vpop.trf.xlu0
      %v619 = vpop.trf.xlu0
      %v620 = vpop.trf.xlu0
      %v621 = vpop.trf.xlu0
      %v622 = vpop.trf.xlu0
      %v623 = vpop.trf.xlu0
      %v624 = vpop.trf.xlu0
      %v625 = vpop.trf.xlu0
      %v626 = vpop.trf.xlu0
      %v627 = vpop.trf.xlu0
      %629 = vrot.lane.b32.xlu0 %v506, 64
      %v630 = vpop.permute.xlu0 %629
      %v633 = vsel %vm508, %v612, 0
      %635 = vmatpush.msra.mxu0 0.0
      %636 = vmatpush.msra.mxu0 0.0
      %637 = vmatpush.msra.mxu0 0.0
      %638 = vmatpush.msra.mxu0 0.0
      %639 = vmatpush.msra.mxu0 0.0
      %640 = vmatpush.msra.mxu0 0.0
      %641 = vmatpush.msra.mxu0 0.0
      %642 = vmatpush.msra.mxu0 0.0
      %643 = vmatpush.msra.mxu0 0.0
      %644 = vmatpush.msra.mxu0 0.0
      %645 = vmatpush.msra.mxu0 0.0
      %646 = vmatpush.msra.mxu0 0.0
      %647 = vmatpush.msra.mxu0 0.0
      %648 = vmatpush.msra.mxu0 0.0
      %649 = vmatpush.msra.mxu0 0.0
      %650 = vmatpush.msra.mxu0 %v630
      %651 = vmatmul.f32.gmra.mxu0 %v633
      %v652 = vpop.f32.mrf.mxu0
      %v653 = vadd.f32 0.0, %v652
      %654 = vdwg.mxu0
      %v656 = vsel %vm508, %v532, 0
      %658 = vmatpush.msra.mxu0 0.0
      %659 = vmatpush.msra.mxu0 0.0
      %660 = vmatpush.msra.mxu0 0.0
      %661 = vmatpush.msra.mxu0 0.0
      %662 = vmatpush.msra.mxu0 0.0
      %663 = vmatpush.msra.mxu0 0.0
      %664 = vmatpush.msra.mxu0 0.0
      %665 = vmatpush.msra.mxu0 0.0
      %666 = vmatpush.msra.mxu0 0.0
      %667 = vmatpush.msra.mxu0 0.0
      %668 = vmatpush.msra.mxu0 0.0
      %669 = vmatpush.msra.mxu0 0.0
      %670 = vmatpush.msra.mxu0 0.0
      %671 = vmatpush.msra.mxu0 0.0
      %672 = vmatpush.msra.mxu0 0.0
      %673 = vmatpush.msra.mxu0 %v653
      %674 = vmatmul.f32.gmra.mxu0 %v656
      %v675 = vpop.f32.mrf.mxu0
      %v676 = vadd.f32 0.0, %v675
      %677 = vdwg.mxu0
      %v678 = vmul.f32 %v676, %v591
      %v679 = vadd.f32 %v532, %v678
      %vm680 = vcmask 130112
      %v681 = vsel %vm680, %v506, -inf
      %682 = vmax.xlane.f32.xlu0 %v681
      %v683 = vpop.xlane.xlu0 %682
      %v684 = vsub.f32 %v506, %v683
      %v685 = vmul.f32 %v684, 1.442695
      %v686 = vpow.pop %v685
      %688 = vrot.lane.b32.xlu0 %v686, 120
      %v689 = vpop.permute.xlu0 %688
      %v691 = vsel %vm508, %v689, 0.0
      %692 = vadd.xlane.f32.xlu0 %v691
      %v693 = vpop.xlane.xlu0 %692
      %v694 = vrcp.pop %v693
      %v695 = vmul.f32 %v693, %v694
      %v696 = vsub.f32 1.0, %v695
      %v697 = vmul.f32 %v694, %v696
      %v698 = vadd.f32 %v694, %v697
      %vm699 = vweird.f32 %v693
      %vm700 = vweird.f32 %v694
      %vm701 = vmor %vm699, %vm700
      %v702 = vsel %vm701, %v694, %v698
      %v703 = vand.u32 2147483647, %v693
      %vm704 = vcmp.eq.f32.partialorder %v703, 8.507059e+37
      %v705 = vand.u32 %v693, 2147483648
      %v706 = vor.u32 1.1754944e-38, %v705
      %v707 = vsel %vm704, %v706, %v702
      %v708 = vmul.f32 %v686, %v707
      %vm709 = vcmask 392512
      %v710 = vsel %vm709, %v506, -inf
      %711 = vmax.xlane.f32.xlu0 %v710
      %v712 = vpop.xlane.xlu0 %711
      %v713 = vsub.f32 %v506, %v712
      %v714 = vmul.f32 %v713, 1.442695
      %v715 = vpow.pop %v714
      %717 = vrot.lane.b32.xlu0 %v715, 88
      %v718 = vpop.permute.xlu0 %717
      %v720 = vsel %vm508, %v718, 0.0
      %721 = vadd.xlane.f32.xlu0 %v720
      %v722 = vpop.xlane.xlu0 %721
      %v723 = vrcp.pop %v722
      %v724 = vmul.f32 %v722, %v723
      %v725 = vsub.f32 1.0, %v724
      %v726 = vmul.f32 %v723, %v725
      %v727 = vadd.f32 %v723, %v726
      %vm728 = vweird.f32 %v722
      %vm729 = vweird.f32 %v723
      %vm730 = vmor %vm728, %vm729
      %v731 = vsel %vm730, %v723, %v727
      %v732 = vand.u32 2147483647, %v722
      %vm733 = vcmp.eq.f32.partialorder %v732, 8.507059e+37
      %v734 = vand.u32 %v722, 2147483648
      %v735 = vor.u32 1.1754944e-38, %v734
      %v736 = vsel %vm733, %v735, %v731
      %v737 = vmul.f32 %v715, %v736
      %v738 = vsel %vm709, %v737, 0.0
      %v739 = vrot.slane %v738, 4
      %v740 = vadd.f32 %v738, %v739
      %v741 = vrot.slane %v740, 2
      %v742 = vadd.f32 %v740, %v741
      %v743 = vrot.slane %v742, 1
      %v744 = vadd.f32 %v742, %v743
      %746 = vrot.lane.b32.xlu0 %v744, 96
      %v747 = vpop.permute.xlu0 %746
      %v749 = vmul.f32 %v708, %v747
      %751 = vrot.lane.b32.xlu0 %v749, 120
      %v752 = vpop.permute.xlu0 %751
      %v754 = vsel %vm508, %v752, 0.0
      %755 = vadd.xlane.f32.xlu0 %v754
      %v756 = vpop.xlane.xlu0 %755
      %v757 = vrcp.pop %v756
      %v758 = vmul.f32 %v756, %v757
      %v759 = vsub.f32 1.0, %v758
      %v760 = vmul.f32 %v757, %v759
      %v761 = vadd.f32 %v757, %v760
      %vm762 = vweird.f32 %v756
      %vm763 = vweird.f32 %v757
      %vm764 = vmor %vm762, %vm763
      %v765 = vsel %vm764, %v757, %v761
      %v766 = vand.u32 2147483647, %v756
      %vm767 = vcmp.eq.f32.partialorder %v766, 8.507059e+37
      %v768 = vand.u32 %v756, 2147483648
      %v769 = vor.u32 1.1754944e-38, %v768
      %v770 = vsel %vm767, %v769, %v765
      %v771 = vmul.f32 1.0, %v770
      %773 = vrot.lane.b32.xlu0 %v737, 88
      %v774 = vpop.permute.xlu0 %773
      %776 = vxpose.xlu0.b32.start [1/16] %v774, 128
      %777 = vxpose.xlu0.b32.cont [2/16] 0.0, 128
      %778 = vxpose.xlu0.b32.cont [3/16] 0.0, 128
      %779 = vxpose.xlu0.b32.cont [4/16] 0.0, 128
      %780 = vxpose.xlu0.b32.cont [5/16] 0.0, 128
      %781 = vxpose.xlu0.b32.cont [6/16] 0.0, 128
      %782 = vxpose.xlu0.b32.cont [7/16] 0.0, 128
      %783 = vxpose.xlu0.b32.cont [8/16] 0.0, 128
      %784 = vxpose.xlu0.b32.cont [9/16] 0.0, 128
      %785 = vxpose.xlu0.b32.cont [10/16] 0.0, 128
      %786 = vxpose.xlu0.b32.cont [11/16] 0.0, 128
      %787 = vxpose.xlu0.b32.cont [12/16] 0.0, 128
      %788 = vxpose.xlu0.b32.cont [13/16] 0.0, 128
      %789 = vxpose.xlu0.b32.cont [14/16] 0.0, 128
      %790 = vxpose.xlu0.b32.cont [15/16] 0.0, 128
      %791 = vxpose.xlu0.b32.end [16/16] 0.0, 128
      %v792 = vpop.trf.xlu0
      %v793 = vpop.trf.xlu0
      %v794 = vpop.trf.xlu0
      %v795 = vpop.trf.xlu0
      %v796 = vpop.trf.xlu0
      %v797 = vpop.trf.xlu0
      %v798 = vpop.trf.xlu0
      %v799 = vpop.trf.xlu0
      %v800 = vpop.trf.xlu0
      %v801 = vpop.trf.xlu0
      %v802 = vpop.trf.xlu0
      %v803 = vpop.trf.xlu0
      %v804 = vpop.trf.xlu0
      %v805 = vpop.trf.xlu0
      %v806 = vpop.trf.xlu0
      %v807 = vpop.trf.xlu0
      %808 = vrot.lane.b32.xlu0 %v506, 56
      %v809 = vpop.permute.xlu0 %808
      %v812 = vsel %vm508, %v792, 0
      %814 = vmatpush.msra.mxu0 0.0
      %815 = vmatpush.msra.mxu0 0.0
      %816 = vmatpush.msra.mxu0 0.0
      %817 = vmatpush.msra.mxu0 0.0
      %818 = vmatpush.msra.mxu0 0.0
      %819 = vmatpush.msra.mxu0 0.0
      %820 = vmatpush.msra.mxu0 0.0
      %821 = vmatpush.msra.mxu0 0.0
      %822 = vmatpush.msra.mxu0 0.0
      %823 = vmatpush.msra.mxu0 0.0
      %824 = vmatpush.msra.mxu0 0.0
      %825 = vmatpush.msra.mxu0 0.0
      %826 = vmatpush.msra.mxu0 0.0
      %827 = vmatpush.msra.mxu0 0.0
      %828 = vmatpush.msra.mxu0 0.0
      %829 = vmatpush.msra.mxu0 %v809
      %830 = vmatmul.f32.gmra.mxu0 %v812
      %v831 = vpop.f32.mrf.mxu0
      %v832 = vadd.f32 0.0, %v831
      %833 = vdwg.mxu0
      %835 = vrot.lane.b32.xlu0 %v708, 120
      %v836 = vpop.permute.xlu0 %835
      %v837 = vsel %vm508, %v836, 0
      %839 = vmatpush.msra.mxu0 0.0
      %840 = vmatpush.msra.mxu0 0.0
      %841 = vmatpush.msra.mxu0 0.0
      %842 = vmatpush.msra.mxu0 0.0
      %843 = vmatpush.msra.mxu0 0.0
      %844 = vmatpush.msra.mxu0 0.0
      %845 = vmatpush.msra.mxu0 0.0
      %846 = vmatpush.msra.mxu0 0.0
      %847 = vmatpush.msra.mxu0 0.0
      %848 = vmatpush.msra.mxu0 0.0
      %849 = vmatpush.msra.mxu0 0.0
      %850 = vmatpush.msra.mxu0 0.0
      %851 = vmatpush.msra.mxu0 0.0
      %852 = vmatpush.msra.mxu0 0.0
      %853 = vmatpush.msra.mxu0 0.0
      %854 = vmatpush.msra.mxu0 %v832
      %855 = vmatmul.f32.gmra.mxu0 %v837
      %v856 = vpop.f32.mrf.mxu0
      %v857 = vadd.f32 0.0, %v856
      %858 = vdwg.mxu0
      %v859 = vmul.f32 %v857, %v771
      %861 = vrot.lane.b32.xlu0 %v859, 8
      %v862 = vpop.permute.xlu0 %861
      %v864 = vadd.f32 %v708, %v862
      %vm865 = vcmask 195712
      %v866 = vsel %vm865, %v506, -inf
      %867 = vmax.xlane.f32.xlu0 %v866
      %v868 = vpop.xlane.xlu0 %867
      %v869 = vsub.f32 %v506, %v868
      %v870 = vmul.f32 %v869, 1.442695
      %v871 = vpow.pop %v870
      %873 = vrot.lane.b32.xlu0 %v871, 112
      %v874 = vpop.permute.xlu0 %873
      %v876 = vsel %vm508, %v874, 0.0
      %877 = vadd.xlane.f32.xlu0 %v876
      %v878 = vpop.xlane.xlu0 %877
      %v879 = vrcp.pop %v878
      %v880 = vmul.f32 %v878, %v879
      %v881 = vsub.f32 1.0, %v880
      %v882 = vmul.f32 %v879, %v881
      %v883 = vadd.f32 %v879, %v882
      %vm884 = vweird.f32 %v878
      %vm885 = vweird.f32 %v879
      %vm886 = vmor %vm884, %vm885
      %v887 = vsel %vm886, %v879, %v883
      %v888 = vand.u32 2147483647, %v878
      %vm889 = vcmp.eq.f32.partialorder %v888, 8.507059e+37
      %v890 = vand.u32 %v878, 2147483648
      %v891 = vor.u32 1.1754944e-38, %v890
      %v892 = vsel %vm889, %v891, %v887
      %v893 = vmul.f32 %v871, %v892
      %vm894 = vcmask 458112
      %v895 = vsel %vm894, %v506, -inf
      %896 = vmax.xlane.f32.xlu0 %v895
      %v897 = vpop.xlane.xlu0 %896
      %v898 = vsub.f32 %v506, %v897
      %v899 = vmul.f32 %v898, 1.442695
      %v900 = vpow.pop %v899
      %902 = vrot.lane.b32.xlu0 %v900, 80
      %v903 = vpop.permute.xlu0 %902
      %v905 = vsel %vm508, %v903, 0.0
      %906 = vadd.xlane.f32.xlu0 %v905
      %v907 = vpop.xlane.xlu0 %906
      %v908 = vrcp.pop %v907
      %v909 = vmul.f32 %v907, %v908
      %v910 = vsub.f32 1.0, %v909
      %v911 = vmul.f32 %v908, %v910
      %v912 = vadd.f32 %v908, %v911
      %vm913 = vweird.f32 %v907
      %vm914 = vweird.f32 %v908
      %vm915 = vmor %vm913, %vm914
      %v916 = vsel %vm915, %v908, %v912
      %v917 = vand.u32 2147483647, %v907
      %vm918 = vcmp.eq.f32.partialorder %v917, 8.507059e+37
      %v919 = vand.u32 %v907, 2147483648
      %v920 = vor.u32 1.1754944e-38, %v919
      %v921 = vsel %vm918, %v920, %v916
      %v922 = vmul.f32 %v900, %v921
      %v923 = vsel %vm894, %v922, 0.0
      %v924 = vrot.slane %v923, 4
      %v925 = vadd.f32 %v923, %v924
      %v926 = vrot.slane %v925, 2
      %v927 = vadd.f32 %v925, %v926
      %v928 = vrot.slane %v927, 1
      %v929 = vadd.f32 %v927, %v928
      %931 = vrot.lane.b32.xlu0 %v929, 96
      %v932 = vpop.permute.xlu0 %931
      %v934 = vmul.f32 %v893, %v932
      %936 = vrot.lane.b32.xlu0 %v934, 112
      %v937 = vpop.permute.xlu0 %936
      %v939 = vsel %vm508, %v937, 0.0
      %940 = vadd.xlane.f32.xlu0 %v939
      %v941 = vpop.xlane.xlu0 %940
      %v942 = vrcp.pop %v941
      %v943 = vmul.f32 %v941, %v942
      %v944 = vsub.f32 1.0, %v943
      %v945 = vmul.f32 %v942, %v944
      %v946 = vadd.f32 %v942, %v945
      %vm947 = vweird.f32 %v941
      %vm948 = vweird.f32 %v942
      %vm949 = vmor %vm947, %vm948
      %v950 = vsel %vm949, %v942, %v946
      %v951 = vand.u32 2147483647, %v941
      %vm952 = vcmp.eq.f32.partialorder %v951, 8.507059e+37
      %v953 = vand.u32 %v941, 2147483648
      %v954 = vor.u32 1.1754944e-38, %v953
      %v955 = vsel %vm952, %v954, %v950
      %v956 = vmul.f32 1.0, %v955
      %958 = vrot.lane.b32.xlu0 %v922, 80
      %v959 = vpop.permute.xlu0 %958
      %961 = vxpose.xlu0.b32.start [1/16] %v959, 128
      %962 = vxpose.xlu0.b32.cont [2/16] 0.0, 128
      %963 = vxpose.xlu0.b32.cont [3/16] 0.0, 128
      %964 = vxpose.xlu0.b32.cont [4/16] 0.0, 128
      %965 = vxpose.xlu0.b32.cont [5/16] 0.0, 128
      %966 = vxpose.xlu0.b32.cont [6/16] 0.0, 128
      %967 = vxpose.xlu0.b32.cont [7/16] 0.0, 128
      %968 = vxpose.xlu0.b32.cont [8/16] 0.0, 128
      %969 = vxpose.xlu0.b32.cont [9/16] 0.0, 128
      %970 = vxpose.xlu0.b32.cont [10/16] 0.0, 128
      %971 = vxpose.xlu0.b32.cont [11/16] 0.0, 128
      %972 = vxpose.xlu0.b32.cont [12/16] 0.0, 128
      %973 = vxpose.xlu0.b32.cont [13/16] 0.0, 128
      %974 = vxpose.xlu0.b32.cont [14/16] 0.0, 128
      %975 = vxpose.xlu0.b32.cont [15/16] 0.0, 128
      %976 = vxpose.xlu0.b32.end [16/16] 0.0, 128
      %v977 = vpop.trf.xlu0
      %v978 = vpop.trf.xlu0
      %v979 = vpop.trf.xlu0
      %v980 = vpop.trf.xlu0
      %v981 = vpop.trf.xlu0
      %v982 = vpop.trf.xlu0
      %v983 = vpop.trf.xlu0
      %v984 = vpop.trf.xlu0
      %v985 = vpop.trf.xlu0
      %v986 = vpop.trf.xlu0
      %v987 = vpop.trf.xlu0
      %v988 = vpop.trf.xlu0
      %v989 = vpop.trf.xlu0
      %v990 = vpop.trf.xlu0
      %v991 = vpop.trf.xlu0
      %v992 = vpop.trf.xlu0
      %993 = vrot.lane.b32.xlu0 %v506, 48
      %v994 = vpop.permute.xlu0 %993
      %v997 = vsel %vm508, %v977, 0
      %999 = vmatpush.msra.mxu0 0.0
      %1000 = vmatpush.msra.mxu0 0.0
      %1001 = vmatpush.msra.mxu0 0.0
      %1002 = vmatpush.msra.mxu0 0.0
      %1003 = vmatpush.msra.mxu0 0.0
      %1004 = vmatpush.msra.mxu0 0.0
      %1005 = vmatpush.msra.mxu0 0.0
      %1006 = vmatpush.msra.mxu0 0.0
      %1007 = vmatpush.msra.mxu0 0.0
      %1008 = vmatpush.msra.mxu0 0.0
      %1009 = vmatpush.msra.mxu0 0.0
      %1010 = vmatpush.msra.mxu0 0.0
      %1011 = vmatpush.msra.mxu0 0.0
      %1012 = vmatpush.msra.mxu0 0.0
      %1013 = vmatpush.msra.mxu0 0.0
      %1014 = vmatpush.msra.mxu0 %v994
      %1015 = vmatmul.f32.gmra.mxu0 %v997
      %v1016 = vpop.f32.mrf.mxu0
      %v1017 = vadd.f32 0.0, %v1016
      %1018 = vdwg.mxu0
      %1020 = vrot.lane.b32.xlu0 %v893, 112
      %v1021 = vpop.permute.xlu0 %1020
      %v1022 = vsel %vm508, %v1021, 0
      %1024 = vmatpush.msra.mxu0 0.0
      %1025 = vmatpush.msra.mxu0 0.0
      %1026 = vmatpush.msra.mxu0 0.0
      %1027 = vmatpush.msra.mxu0 0.0
      %1028 = vmatpush.msra.mxu0 0.0
      %1029 = vmatpush.msra.mxu0 0.0
      %1030 = vmatpush.msra.mxu0 0.0
      %1031 = vmatpush.msra.mxu0 0.0
      %1032 = vmatpush.msra.mxu0 0.0
      %1033 = vmatpush.msra.mxu0 0.0
      %1034 = vmatpush.msra.mxu0 0.0
      %1035 = vmatpush.msra.mxu0 0.0
      %1036 = vmatpush.msra.mxu0 0.0
      %1037 = vmatpush.msra.mxu0 0.0
      %1038 = vmatpush.msra.mxu0 0.0
      %1039 = vmatpush.msra.mxu0 %v1017
      %1040 = vmatmul.f32.gmra.mxu0 %v1022
      %v1041 = vpop.f32.mrf.mxu0
      %v1042 = vadd.f32 0.0, %v1041
      %1043 = vdwg.mxu0
      %v1044 = vmul.f32 %v1042, %v956
      %1046 = vrot.lane.b32.xlu0 %v1044, 16
      %v1047 = vpop.permute.xlu0 %1046
      %v1049 = vadd.f32 %v893, %v1047
      %vm1050 = vcmask 261312
      %v1051 = vsel %vm1050, %v506, -inf
      %1052 = vmax.xlane.f32.xlu0 %v1051
      %v1053 = vpop.xlane.xlu0 %1052
      %v1054 = vsub.f32 %v506, %v1053
      %v1055 = vmul.f32 %v1054, 1.442695
      %v1056 = vpow.pop %v1055
      %1058 = vrot.lane.b32.xlu0 %v1056, 104
      %v1059 = vpop.permute.xlu0 %1058
      %v1061 = vsel %vm508, %v1059, 0.0
      %1062 = vadd.xlane.f32.xlu0 %v1061
      %v1063 = vpop.xlane.xlu0 %1062
      %v1064 = vrcp.pop %v1063
      %v1065 = vmul.f32 %v1063, %v1064
      %v1066 = vsub.f32 1.0, %v1065
      %v1067 = vmul.f32 %v1064, %v1066
      %v1068 = vadd.f32 %v1064, %v1067
      %vm1069 = vweird.f32 %v1063
      %vm1070 = vweird.f32 %v1064
      %vm1071 = vmor %vm1069, %vm1070
      %v1072 = vsel %vm1071, %v1064, %v1068
      %v1073 = vand.u32 2147483647, %v1063
      %vm1074 = vcmp.eq.f32.partialorder %v1073, 8.507059e+37
      %v1075 = vand.u32 %v1063, 2147483648
      %v1076 = vor.u32 1.1754944e-38, %v1075
      %v1077 = vsel %vm1074, %v1076, %v1072
      %v1078 = vmul.f32 %v1056, %v1077
      %vm1079 = vcmask 523712
      %v1080 = vsel %vm1079, %v506, -inf
      %1081 = vmax.xlane.f32.xlu0 %v1080
      %v1082 = vpop.xlane.xlu0 %1081
      %v1083 = vsub.f32 %v506, %v1082
      %v1084 = vmul.f32 %v1083, 1.442695
      %v1085 = vpow.pop %v1084
      %1087 = vrot.lane.b32.xlu0 %v1085, 72
      %v1088 = vpop.permute.xlu0 %1087
      %v1090 = vsel %vm508, %v1088, 0.0
      %1091 = vadd.xlane.f32.xlu0 %v1090
      %v1092 = vpop.xlane.xlu0 %1091
      %v1093 = vrcp.pop %v1092
      %v1094 = vmul.f32 %v1092, %v1093
      %v1095 = vsub.f32 1.0, %v1094
      %v1096 = vmul.f32 %v1093, %v1095
      %v1097 = vadd.f32 %v1093, %v1096
      %vm1098 = vweird.f32 %v1092
      %vm1099 = vweird.f32 %v1093
      %vm1100 = vmor %vm1098, %vm1099
      %v1101 = vsel %vm1100, %v1093, %v1097
      %v1102 = vand.u32 2147483647, %v1092
      %vm1103 = vcmp.eq.f32.partialorder %v1102, 8.507059e+37
      %v1104 = vand.u32 %v1092, 2147483648
      %v1105 = vor.u32 1.1754944e-38, %v1104
      %v1106 = vsel %vm1103, %v1105, %v1101
      %v1107 = vmul.f32 %v1085, %v1106
      %v1108 = vsel %vm1079, %v1107, 0.0
      %v1109 = vrot.slane %v1108, 4
      %v1110 = vadd.f32 %v1108, %v1109
      %v1111 = vrot.slane %v1110, 2
      %v1112 = vadd.f32 %v1110, %v1111
      %v1113 = vrot.slane %v1112, 1
      %v1114 = vadd.f32 %v1112, %v1113
      %1116 = vrot.lane.b32.xlu0 %v1114, 96
      %v1117 = vpop.permute.xlu0 %1116
      %v1119 = vmul.f32 %v1078, %v1117
      %1121 = vrot.lane.b32.xlu0 %v1119, 104
      %v1122 = vpop.permute.xlu0 %1121
      %v1124 = vsel %vm508, %v1122, 0.0
      %1125 = vadd.xlane.f32.xlu0 %v1124
      %v1126 = vpop.xlane.xlu0 %1125
      %v1127 = vrcp.pop %v1126
      %v1128 = vmul.f32 %v1126, %v1127
      %v1129 = vsub.f32 1.0, %v1128
      %v1130 = vmul.f32 %v1127, %v1129
      %v1131 = vadd.f32 %v1127, %v1130
      %vm1132 = vweird.f32 %v1126
      %vm1133 = vweird.f32 %v1127
      %vm1134 = vmor %vm1132, %vm1133
      %v1135 = vsel %vm1134, %v1127, %v1131
      %v1136 = vand.u32 2147483647, %v1126
      %vm1137 = vcmp.eq.f32.partialorder %v1136, 8.507059e+37
      %v1138 = vand.u32 %v1126, 2147483648
      %v1139 = vor.u32 1.1754944e-38, %v1138
      %v1140 = vsel %vm1137, %v1139, %v1135
      %v1141 = vmul.f32 1.0, %v1140
      %1143 = vrot.lane.b32.xlu0 %v1107, 72
      %v1144 = vpop.permute.xlu0 %1143
      %1146 = vxpose.xlu0.b32.start [1/16] %v1144, 128
      %1147 = vxpose.xlu0.b32.cont [2/16] 0.0, 128
      %1148 = vxpose.xlu0.b32.cont [3/16] 0.0, 128
      %1149 = vxpose.xlu0.b32.cont [4/16] 0.0, 128
      %1150 = vxpose.xlu0.b32.cont [5/16] 0.0, 128
      %1151 = vxpose.xlu0.b32.cont [6/16] 0.0, 128
      %1152 = vxpose.xlu0.b32.cont [7/16] 0.0, 128
      %1153 = vxpose.xlu0.b32.cont [8/16] 0.0, 128
      %1154 = vxpose.xlu0.b32.cont [9/16] 0.0, 128
      %1155 = vxpose.xlu0.b32.cont [10/16] 0.0, 128
      %1156 = vxpose.xlu0.b32.cont [11/16] 0.0, 128
      %1157 = vxpose.xlu0.b32.cont [12/16] 0.0, 128
      %1158 = vxpose.xlu0.b32.cont [13/16] 0.0, 128
      %1159 = vxpose.xlu0.b32.cont [14/16] 0.0, 128
      %1160 = vxpose.xlu0.b32.cont [15/16] 0.0, 128
      %1161 = vxpose.xlu0.b32.end [16/16] 0.0, 128
      %v1162 = vpop.trf.xlu0
      %v1163 = vpop.trf.xlu0
      %v1164 = vpop.trf.xlu0
      %v1165 = vpop.trf.xlu0
      %v1166 = vpop.trf.xlu0
      %v1167 = vpop.trf.xlu0
      %v1168 = vpop.trf.xlu0
      %v1169 = vpop.trf.xlu0
      %v1170 = vpop.trf.xlu0
      %v1171 = vpop.trf.xlu0
      %v1172 = vpop.trf.xlu0
      %v1173 = vpop.trf.xlu0
      %v1174 = vpop.trf.xlu0
      %v1175 = vpop.trf.xlu0
      %v1176 = vpop.trf.xlu0
      %v1177 = vpop.trf.xlu0
      %1178 = vrot.lane.b32.xlu0 %v506, 40
      %v1179 = vpop.permute.xlu0 %1178
      %v1182 = vsel %vm508, %v1162, 0
      %1184 = vmatpush.msra.mxu0 0.0
      %1185 = vmatpush.msra.mxu0 0.0
      %1186 = vmatpush.msra.mxu0 0.0
      %1187 = vmatpush.msra.mxu0 0.0
      %1188 = vmatpush.msra.mxu0 0.0
      %1189 = vmatpush.msra.mxu0 0.0
      %1190 = vmatpush.msra.mxu0 0.0
      %1191 = vmatpush.msra.mxu0 0.0
      %1192 = vmatpush.msra.mxu0 0.0
      %1193 = vmatpush.msra.mxu0 0.0
      %1194 = vmatpush.msra.mxu0 0.0
      %1195 = vmatpush.msra.mxu0 0.0
      %1196 = vmatpush.msra.mxu0 0.0
      %1197 = vmatpush.msra.mxu0 0.0
      %1198 = vmatpush.msra.mxu0 0.0
      %1199 = vmatpush.msra.mxu0 %v1179
      %1200 = vmatmul.f32.gmra.mxu0 %v1182
      %v1201 = vpop.f32.mrf.mxu0
      %v1202 = vadd.f32 0.0, %v1201
      %1203 = vdwg.mxu0
      %1205 = vrot.lane.b32.xlu0 %v1078, 104
      %v1206 = vpop.permute.xlu0 %1205
      %v1207 = vsel %vm508, %v1206, 0
      %1209 = vmatpush.msra.mxu0 0.0
      %1210 = vmatpush.msra.mxu0 0.0
      %1211 = vmatpush.msra.mxu0 0.0
      %1212 = vmatpush.msra.mxu0 0.0
      %1213 = vmatpush.msra.mxu0 0.0
      %1214 = vmatpush.msra.mxu0 0.0
      %1215 = vmatpush.msra.mxu0 0.0
      %1216 = vmatpush.msra.mxu0 0.0
      %1217 = vmatpush.msra.mxu0 0.0
      %1218 = vmatpush.msra.mxu0 0.0
      %1219 = vmatpush.msra.mxu0 0.0
      %1220 = vmatpush.msra.mxu0 0.0
      %1221 = vmatpush.msra.mxu0 0.0
      %1222 = vmatpush.msra.mxu0 0.0
      %1223 = vmatpush.msra.mxu0 0.0
      %1224 = vmatpush.msra.mxu0 %v1202
      %1225 = vmatmul.f32.gmra.mxu0 %v1207
      %v1226 = vpop.f32.mrf.mxu0
      %v1227 = vadd.f32 0.0, %v1226
      %1228 = vdwg.mxu0
      %v1229 = vmul.f32 %v1227, %v1141
      %1231 = vrot.lane.b32.xlu0 %v1229, 24
      %v1232 = vpop.permute.xlu0 %1231
      %v1234 = vadd.f32 %v1078, %v1232
      %v1235 = vsel %vm508, %v679, %v864
      %vm1236 = vcmask 130048
      %v1237 = vsel %vm1236, %v1235, %v1049
      %vm1238 = vcmask 195584
      %v1239 = vsel %vm1238, %v1237, %v1234
      %v1240 = vld [vmem:[%s5] sm:$0xff]
      %v1241 = vld [vmem:[%s5 + $0x8] sm:$0xff]
      %v1242 = vld [vmem:[%s5 + $0x10] sm:$0xff]
      %v1243 = vld [vmem:[%s5 + $0x18] sm:$0xff]
      %v1245 = vsel %vm439, %v1239, 0
      %1247 = vmatpush.msra.mxu0 0.0
      %1248 = vmatpush.msra.mxu0 0.0
      %1249 = vmatpush.msra.mxu0 0.0
      %1250 = vmatpush.msra.mxu0 0.0
      %1251 = vmatpush.msra.mxu0 0.0
      %1252 = vmatpush.msra.mxu0 0.0
      %1253 = vmatpush.msra.mxu0 0.0
      %1254 = vmatpush.msra.mxu0 0.0
      %1255 = vmatpush.msra.mxu0 0.0
      %1256 = vmatpush.msra.mxu0 0.0
      %1257 = vmatpush.msra.mxu0 0.0
      %1258 = vmatpush.msra.mxu0 0.0
      %1259 = vmatpush.msra.mxu0 %v1243
      %1260 = vmatpush.msra.mxu0 %v1242
      %1261 = vmatpush.msra.mxu0 %v1241
      %1262 = vmatpush.msra.mxu0 %v1240
      %1263 = vmatmul.f32.gmra.mxu0 %v1245
      %v1264 = vpop.f32.mrf.mxu0
      %v1265 = vadd.f32 0.0, %v1264
      %1266 = vdwg.mxu0
      %v1267 = vadd.f32 %v436, %v1265
      %v1268 = vld [vmem:[%s6] sm:$0x1]
      %v1270 = vperm.slane %v1268, 0
      %v1272 = vadd.f32 %v1267, %v1270
      %v1273 = vld [vmem:[%s7] sm:$0x1]
      %v1274 = vld [vmem:[%s8] sm:$0x1]
      %v1275 = vsel %vm439, %v1272, 0.0
      %1276 = vadd.xlane.f32.xlu0 %v1275
      %v1277 = vpop.xlane.xlu0 %1276
      %v1278 = vmul.f32 %v1277, %v449
      %v1279 = vsub.f32 %v1272, %v1278
      %v1280 = vmul.f32 %v1279, %v1279
      %v1281 = vsel %vm439, %v1280, 0.0
      %1282 = vadd.xlane.f32.xlu0 %v1281
      %v1283 = vpop.xlane.xlu0 %1282
      %v1284 = vmul.f32 %v1283, %v449
      %v1285 = vadd.f32 %v1284, 1e-05
      %v1286 = vrsqrt.pop %v1285
      %v1287 = vmul.f32 %v1286, %v1285
      %v1288 = vmul.f32 %v1287, %v1286
      %v1289 = vmul.f32 0.5, %v1288
      %v1290 = vsub.f32 1.5, %v1289
      %v1291 = vmul.f32 %v1286, %v1290
      %vm1292 = vweird.f32 %v1285
      %vm1293 = vweird.f32 %v1286
      %vm1294 = vmor %vm1292, %vm1293
      %v1295 = vsel %vm1294, %v1286, %v1291
      %v1296 = vmul.f32 %v1279, %v1295
      %v1298 = vperm.slane %v1273, 0
      %v1300 = vmul.f32 %v1296, %v1298
      %v1302 = vperm.slane %v1274, 0
      %v1304 = vadd.f32 %v1300, %v1302
      %v1305 = vld [vmem:[%s9] sm:$0xff]
      %v1306 = vld [vmem:[%s9 + $0x8] sm:$0xff]
      %v1307 = vld [vmem:[%s9 + $0x10] sm:$0xff]
      %v1308 = vld [vmem:[%s9 + $0x18] sm:$0xff]
      %v1309 = vld [vmem:[%s10] sm:$0x1]
      %v1311 = vperm.slane %v1309, 0
      %v1314 = vsel %vm439, %v1304, 0
      %1316 = vmatpush.msra.mxu0 0.0
      %1317 = vmatpush.msra.mxu0 0.0
      %1318 = vmatpush.msra.mxu0 0.0
      %1319 = vmatpush.msra.mxu0 0.0
      %1320 = vmatpush.msra.mxu0 0.0
      %1321 = vmatpush.msra.mxu0 0.0
      %1322 = vmatpush.msra.mxu0 0.0
      %1323 = vmatpush.msra.mxu0 0.0
      %1324 = vmatpush.msra.mxu0 0.0
      %1325 = vmatpush.msra.mxu0 0.0
      %1326 = vmatpush.msra.mxu0 0.0
      %1327 = vmatpush.msra.mxu0 0.0
      %1328 = vmatpush.msra.mxu0 %v1308
      %1329 = vmatpush.msra.mxu0 %v1307
      %1330 = vmatpush.msra.mxu0 %v1306
      %1331 = vmatpush.msra.mxu0 %v1305
      %1332 = vmatmul.f32.gmra.mxu0 %v1314
      %v1333 = vpop.f32.mrf.mxu0
      %v1334 = vadd.f32 %v1311, %v1333
      %1335 = vdwg.mxu0
      %v1336 = vtanh.pop %v1334
      %v1337 = vld [vmem:[%s11] sm:$0xff]
      %v1338 = vld [vmem:[%s11 + $0x8] sm:$0xff]
      %v1339 = vld [vmem:[%s11 + $0x10] sm:$0xff]
      %v1340 = vld [vmem:[%s11 + $0x18] sm:$0xff]
      %v1341 = vld [vmem:[%s11 + $0x20] sm:$0xff]
      %v1342 = vld [vmem:[%s11 + $0x28] sm:$0xff]
      %v1343 = vld [vmem:[%s11 + $0x30] sm:$0xff]
      %v1344 = vld [vmem:[%s11 + $0x38] sm:$0xff]
      %v1345 = vld [vmem:[%s12] sm:$0x1]
      %v1347 = vperm.slane %v1345, 0
      %vm1349 = vcmask 523264
      %v1351 = vsel %vm1349, %v1336, 0
      %1353 = vmatpush.msra.mxu0 0.0
      %1354 = vmatpush.msra.mxu0 0.0
      %1355 = vmatpush.msra.mxu0 0.0
      %1356 = vmatpush.msra.mxu0 0.0
      %1357 = vmatpush.msra.mxu0 0.0
      %1358 = vmatpush.msra.mxu0 0.0
      %1359 = vmatpush.msra.mxu0 0.0
      %1360 = vmatpush.msra.mxu0 0.0
      %1361 = vmatpush.msra.mxu0 %v1344
      %1362 = vmatpush.msra.mxu0 %v1343
      %1363 = vmatpush.msra.mxu0 %v1342
      %1364 = vmatpush.msra.mxu0 %v1341
      %1365 = vmatpush.msra.mxu0 %v1340
      %1366 = vmatpush.msra.mxu0 %v1339
      %1367 = vmatpush.msra.mxu0 %v1338
      %1368 = vmatpush.msra.mxu0 %v1337
      %1369 = vmatmul.f32.gmra.mxu0 %v1351
      %v1370 = vpop.f32.mrf.mxu0
      %v1371 = vadd.f32 %v1347, %v1370
      %1372 = vdwg.mxu0
      %v1373 = vadd.f32 %v1272, %v1371
      %1374 = vst.msk [vmem:[%s435] sm:$0xff] %vm439, %v1373
      %p1375 = scmp.lt.s32.totalorder %s24, 1
      %s1376 = scalar_select %p1375, %s24, 1
      %s1377 = smul.addr %s1376, 8
      %s1378 = scalar_lea.vmem %s13, %s1377
      // Predicated region
      $region73: #{_lambda_.11} parent=71 // pred_check
        %p1379 = pneg %p320
      $region74: #{_lambda_.11} parent=71 // pred_check_branch
        %1381 = sbr.rel (%p1379) target = $region76
      $region75: #{_lambda_.11} parent=71 // pred_region
        _
      $region76: #{_lambda_.11} parent=71 // pred_fallthru
        _
    $region72: #{_lambda_.11} parent=5 // pred_fallthru
      _
    %p1382 = scmp.le.s32.totalorder 2, %s19
    // Predicated region
    $region77: #{_lambda_.11} parent=5 // pred_check
      %p1383 = pneg %p1382
    $region78: #{_lambda_.11} parent=5 // pred_check_branch
      %1385 = sbr.rel (%p1383) target = $region80
    $region79: #{_lambda_.11} parent=5 // pred_region
      %s1386 = ssub.s32 %s19, 2
      // Predicated region
      $region81: #{_lambda_.11} parent=79 // pred_check
        %p1387 = pneg %p326
      $region82: #{_lambda_.11} parent=79 // pred_check_branch
        %1389 = sbr.rel (%p1387) target = $region84
      $region83: #{_lambda_.11} parent=79 // pred_region
        %p1390 = scmp.lt.s32.totalorder %s25, 1
        %s1391 = scalar_select %p1390, %s25, 1
        %s1392 = smul.addr %s1391, 8
        %s1393 = scalar_lea.vmem %s13, %s1392
      $region84: #{_lambda_.11} parent=79 // pred_fallthru
        _
    $region80: #{_lambda_.11} parent=5 // pred_fallthru
      _
  $region6: #{_lambda_.11} parent=0 // loop_footer
    %s23 = sadd.s32 1, %s19
  $region7: #{_lambda_.11} parent=0 // loop_footer_branch
    %18 = sbr.rel target = $region3
  $region8: #{_lambda_.11} parent=0 // loop_exit
    _

</llo_original>
